<compile_context>
chip_gen: v7x
topology: tpu7x:2x2x1
jax: 0.10.0
libtpu: 0.0.40
codegen_flags: <defaults>
</compile_context>

<pallas_src>
import functools

import jax
import jax.numpy as jnp
from jax.experimental import pallas as pl
from jax.experimental.pallas import tpu as pltpu

LN_EPS = 1e-12     # HF BERT layer_norm_eps
QA_PAD = 128       # lane-dense QA-head output width (real logits in cols 0..1)


# ----------------------------------------------------------------------------
# helpers
# ----------------------------------------------------------------------------
def _layernorm(x, g, b):
    mu = jnp.mean(x, axis=-1, keepdims=True)
    var = jnp.mean(jnp.square(x - mu), axis=-1, keepdims=True)
    return (x - mu) * jax.lax.rsqrt(var + LN_EPS) * g + b


def _gelu(x):
    # tanh-approximate GELU.
    # TODO(synk): HF BERT uses erf-based GELU; tanh approx differs by <1e-3.
    c = jnp.sqrt(jnp.float32(2.0 / jnp.pi))
    return 0.5 * x * (1.0 + jnp.tanh(c * (x + 0.044715 * x * x * x)))


# ----------------------------------------------------------------------------
# fused kernel: [embed LayerNorm] -> L x encoder layer -> [QA head]
# grid = (L,). The whole batch is processed each step; the (B*S, H) activation
# lives in VMEM scratch across the layer axis; only the lane-dense
# (B, S, 128) QA logits are written back to HBM.
# ----------------------------------------------------------------------------
def _fused_bert_kernel(emb_ref, bias_ref, eg_ref, eb_ref,
                       wqkv_ref, bqkv_ref, wo_ref, bo_ref,
                       g1_ref, be1_ref, w1_ref, bf1_ref,
                       w2_ref, bf2_ref, g2_ref, be2_ref,
                       qaw_ref, qab_ref,
                       o_ref,
                       x_scr,
                       *, num_heads, num_layers):
    l = pl.program_id(0)
    B, S, H = emb_ref.shape
    BS = B * S
    nh = num_heads
    hd = H // nh
    bf16 = jnp.bfloat16

    # Embedding LayerNorm once (first layer step).
    @pl.when(l == 0)
    def _():
        x_scr[...] = _layernorm(emb_ref[...].reshape(BS, H),
                                eg_ref[...], eb_ref[...])

    x = x_scr[...]                                            # (BS, H) f32

    # Fused QKV projection: one (BS, H) @ (H, 3H) bf16 MXU pass, f32 accum.
    qkv = jnp.dot(x.astype(bf16), wqkv_ref[0],
                  preferred_element_type=jnp.float32) + bqkv_ref[0]

    def split_heads(t):   # (BS, H) f32 -> (B*nh, S, hd) bf16, in vregs
        t = t.reshape(B, S, nh, hd)
        t = jnp.swapaxes(t, 1, 2)                             # (B, nh, S, hd)
        return t.reshape(B * nh, S, hd).astype(bf16)

    q = split_heads(qkv[:, 0:H])
    k = split_heads(qkv[:, H:2 * H])
    v = split_heads(qkv[:, 2 * H:3 * H])

    scale = 1.0 / jnp.sqrt(jnp.float32(hd))
    # TODO(synk): at hd=8 each per-(batch*head) matmul is a tiny 8x8x8 MXU op;
    # at production head dims (>=64) these become full-width MXU passes.
    s = jnp.einsum("hqd,hkd->hqk", q, k,
                   preferred_element_type=jnp.float32) * scale
    s = s + bias_ref[...]                                     # (B*nh,S,S)+(B*nh,1,S)
    s = s - jnp.max(s, axis=-1, keepdims=True)
    p = jnp.exp(s)
    p = p * pl.reciprocal(jnp.sum(p, axis=-1, keepdims=True), approx=True)
    ctx = jnp.einsum("hqk,hkd->hqd", p.astype(bf16), v,
                     preferred_element_type=jnp.float32)      # (B*nh, S, hd)
    ctx = jnp.swapaxes(ctx.reshape(B, nh, S, hd), 1, 2).reshape(BS, H)

    attn = jnp.dot(ctx.astype(bf16), wo_ref[0],
                   preferred_element_type=jnp.float32) + bo_ref[0]
    h1 = _layernorm(x + attn, g1_ref[0], be1_ref[0])

    ff = jnp.dot(h1.astype(bf16), w1_ref[0],
                 preferred_element_type=jnp.float32) + bf1_ref[0]
    ff = _gelu(ff)
    ff = jnp.dot(ff.astype(bf16), w2_ref[0],
                 preferred_element_type=jnp.float32) + bf2_ref[0]
    xn = _layernorm(h1 + ff, g2_ref[0], be2_ref[0])
    x_scr[...] = xn

    # QA head on the final layer output; lane-dense (padded to 128 cols).
    @pl.when(l == num_layers - 1)
    def _():
        logits = jnp.dot(xn.astype(bf16), qaw_ref[...],
                         preferred_element_type=jnp.float32) + qab_ref[...]
        o_ref[...] = logits.reshape(B, S, QA_PAD)


def fused_bert_qa(emb, attn_bias, p, *, num_heads):
    B, S, H = emb.shape
    L = p["w_qkv"].shape[0]
    I = p["w_ff1"].shape[-1]

    cmap2 = lambda l: (0, 0)             # shared 2-D params (DMA'd once)
    cmap3 = lambda l: (0, 0, 0)          # whole-batch activations (DMA'd once)
    lmap3 = lambda l: (l, 0, 0)          # per-layer stacked weights (streamed)

    in_specs = [
        pl.BlockSpec((B, S, H), cmap3),                # emb
        pl.BlockSpec((B * num_heads, 1, S), cmap3),    # additive attn bias
        pl.BlockSpec((1, H), cmap2),                   # emb LN gamma
        pl.BlockSpec((1, H), cmap2),                   # emb LN beta
        pl.BlockSpec((1, H, 3 * H), lmap3),            # W_qkv (bf16)
        pl.BlockSpec((1, 1, 3 * H), lmap3),            # b_qkv
        pl.BlockSpec((1, H, H), lmap3),                # W_o (bf16)
        pl.BlockSpec((1, 1, H), lmap3),                # b_o
        pl.BlockSpec((1, 1, H), lmap3),                # ln1 gamma
        pl.BlockSpec((1, 1, H), lmap3),                # ln1 beta
        pl.BlockSpec((1, H, I), lmap3),                # W_ff1 (bf16)
        pl.BlockSpec((1, 1, I), lmap3),                # b_ff1
        pl.BlockSpec((1, I, H), lmap3),                # W_ff2 (bf16)
        pl.BlockSpec((1, 1, H), lmap3),                # b_ff2
        pl.BlockSpec((1, 1, H), lmap3),                # ln2 gamma
        pl.BlockSpec((1, 1, H), lmap3),                # ln2 beta
        pl.BlockSpec((H, QA_PAD), cmap2),              # qa W (bf16, zero-padded)
        pl.BlockSpec((1, QA_PAD), cmap2),              # qa b (zero-padded)
    ]
    out_spec = pl.BlockSpec((B, S, QA_PAD), cmap3)

    kernel = functools.partial(_fused_bert_kernel,
                               num_heads=num_heads, num_layers=L)
    return pl.pallas_call(
        kernel,
        grid=(L,),
        in_specs=in_specs,
        out_specs=out_spec,
        out_shape=jax.ShapeDtypeStruct((B, S, QA_PAD), jnp.float32),
        scratch_shapes=[
            pltpu.VMEM((B * S, H), jnp.float32),       # resident activation
        ],
        compiler_params=pltpu.CompilerParams(
            dimension_semantics=("arbitrary",)),
    )(emb, attn_bias, p["emb_gamma"], p["emb_beta"],
      p["w_qkv"], p["b_qkv"], p["wo"], p["bo"],
      p["ln1_g"], p["ln1_b"], p["w_ff1"], p["b_ff1"],
      p["w_ff2"], p["b_ff2"], p["ln2_g"], p["ln2_b"],
      p["qa_w_pad"], p["qa_b_pad"])


# ----------------------------------------------------------------------------
# plain-JAX glue: loss, params, forward
# ----------------------------------------------------------------------------
def _ce_loss(logits, targets, ignore_index):
    # CrossEntropyLoss(ignore_index=ignore_index), mean over non-ignored rows.
    lsm = jax.nn.log_softmax(logits.astype(jnp.float32), axis=-1)
    valid = targets != ignore_index
    safe = jnp.where(valid, targets, 0)
    picked = jnp.take_along_axis(lsm, safe[:, None], axis=-1)[:, 0]
    nll = jnp.where(valid, -picked, 0.0)
    count = jnp.maximum(jnp.sum(valid.astype(jnp.float32)), 1.0)
    return jnp.sum(nll) / count


def init_params(key, cfg):
    H, I, L = cfg["hidden"], cfg["intermediate"], cfg["num_layers"]
    keys = jax.random.split(key, 4 + L)

    def nrm(k, shape, dtype=jnp.float32):
        return (0.02 * jax.random.normal(k, shape)).astype(dtype)

    wqkv, wo, wff1, wff2 = [], [], [], []
    for l in range(L):
        lk = jax.random.split(keys[4 + l], 6)
        wqkv.append(jnp.concatenate(
            [nrm(lk[0], (H, H)), nrm(lk[1], (H, H)), nrm(lk[2], (H, H))],
            axis=-1).astype(jnp.bfloat16))
        wo.append(nrm(lk[3], (H, H), jnp.bfloat16))
        wff1.append(nrm(lk[4], (H, I), jnp.bfloat16))
        wff2.append(nrm(lk[5], (I, H), jnp.bfloat16))

    qa_w = nrm(keys[3], (H, 2), jnp.bfloat16)
    qa_w_pad = jnp.zeros((H, QA_PAD), jnp.bfloat16).at[:, :2].set(qa_w)

    return dict(
        config=cfg,
        word_emb=nrm(keys[0], (cfg["vocab"], H)),
        pos_emb=nrm(keys[1], (cfg["max_pos"], H)),
        type_emb=nrm(keys[2], (cfg["type_vocab"], H)),
        emb_gamma=jnp.ones((1, H), jnp.float32),
        emb_beta=jnp.zeros((1, H), jnp.float32),
        # per-layer weights stacked along a leading (L, ...) axis so one
        # pallas_call can stream them with a layer-indexed BlockSpec; matmul
        # weights are bf16 (f32 accumulation in-kernel), LN/bias params f32.
        w_qkv=jnp.stack(wqkv), b_qkv=jnp.zeros((L, 1, 3 * H), jnp.float32),
        wo=jnp.stack(wo), bo=jnp.zeros((L, 1, H), jnp.float32),
        ln1_g=jnp.ones((L, 1, H), jnp.float32),
        ln1_b=jnp.zeros((L, 1, H), jnp.float32),
        w_ff1=jnp.stack(wff1), b_ff1=jnp.zeros((L, 1, I), jnp.float32),
        w_ff2=jnp.stack(wff2), b_ff2=jnp.zeros((L, 1, H), jnp.float32),
        ln2_g=jnp.ones((L, 1, H), jnp.float32),
        ln2_b=jnp.zeros((L, 1, H), jnp.float32),
        qa_w_pad=qa_w_pad, qa_b_pad=jnp.zeros((1, QA_PAD), jnp.float32),
    )


def bert4squad_forward(params, input_ids, attention_mask=None, token_type_ids=None,
                       position_ids=None, start_positions=None, end_positions=None):
    cfg = params["config"]
    B, S = input_ids.shape
    nh = cfg["num_heads"]

    if attention_mask is None:
        attention_mask = jnp.ones((B, S), jnp.float32)
    if token_type_ids is None:
        token_type_ids = jnp.zeros((B, S), jnp.int32)
    if position_ids is None:
        position_ids = jnp.broadcast_to(jnp.arange(S, dtype=jnp.int32), (B, S))

    # Embedding gathers stay in plain JAX (data-dependent gather); everything
    # from the embedding LayerNorm to the QA logits runs in one fused kernel.
    emb = (params["word_emb"][input_ids]
           + params["pos_emb"][position_ids]
           + params["type_emb"][token_type_ids]).astype(jnp.float32)
    mask_f = attention_mask.astype(jnp.float32)
    # Additive mask bias, precomputed once and pre-expanded to (B*nh, 1, S).
    bias = ((1.0 - mask_f) * jnp.float32(-10000.0)).reshape(B, 1, 1, S)
    attn_bias = jnp.broadcast_to(bias, (B, nh, 1, S)).reshape(B * nh, 1, S)

    logits_pad = fused_bert_qa(emb, attn_bias, params, num_heads=nh)
    start_logits = logits_pad[..., 0]
    end_logits = logits_pad[..., 1]

    if start_positions is not None and end_positions is not None:
        if start_positions.ndim > 1:
            start_positions = start_positions.squeeze(-1)
        if end_positions.ndim > 1:
            end_positions = end_positions.squeeze(-1)
        ignored_index = S  # start_logits.size(1)
        sp = jnp.clip(start_positions, 0, ignored_index)
        ep = jnp.clip(end_positions, 0, ignored_index)
        start_loss = _ce_loss(start_logits, sp, ignored_index)
        end_loss = _ce_loss(end_logits, ep, ignored_index)
        total_loss = (start_loss + end_loss) / 2.0
        return total_loss, start_logits, end_logits
    return start_logits, end_logits


# ----------------------------------------------------------------------------
if __name__ == "__main__":
    cfg = dict(vocab=128, hidden=32, num_heads=4, num_layers=2,
               intermediate=64, max_pos=64, type_vocab=2)
    params = init_params(jax.random.PRNGKey(0), cfg)

    B, S = 2, 8
    k1, _ = jax.random.split(jax.random.PRNGKey(0))
    input_ids = jax.random.randint(k1, (B, S), 0, cfg["vocab"], dtype=jnp.int32)
    attention_mask = jnp.array([[1, 1, 1, 1, 1, 1, 1, 1],
                                [1, 1, 1, 1, 1, 1, 0, 0]], jnp.float32)
    token_type_ids = jnp.array([[0, 0, 0, 0, 1, 1, 1, 1],
                                [0, 0, 0, 1, 1, 1, 1, 1]], jnp.int32)
    start_positions = jnp.array([1, 3], jnp.int32)
    end_positions = jnp.array([2, 9], jnp.int32)  # 9 clamps to 8 == ignore_index

    total_loss, start_logits, end_logits = bert4squad_forward(
        params, input_ids, attention_mask, token_type_ids,
        start_positions=start_positions, end_positions=end_positions)
    jax.block_until_ready((total_loss, start_logits, end_logits))

    assert start_logits.shape == (B, S) and end_logits.shape == (B, S)
    assert total_loss.shape == ()
    assert bool(jnp.isfinite(total_loss))
    print("KERNEL_OK")
</pallas_src>

<mosaic_0001>
module attributes {stable_mosaic.version = 11 : i64} {
  func.func @_fused_bert_kernel(%arg0: i32, %arg1: memref<2x8x32xf32, #tpu.memory_space<vmem>>, %arg2: memref<8x1x8xf32, #tpu.memory_space<vmem>>, %arg3: memref<1x32xf32, #tpu.memory_space<vmem>>, %arg4: memref<1x32xf32, #tpu.memory_space<vmem>>, %arg5: memref<1x32x96xbf16, #tpu.memory_space<vmem>>, %arg6: memref<1x1x96xf32, #tpu.memory_space<vmem>>, %arg7: memref<1x32x32xbf16, #tpu.memory_space<vmem>>, %arg8: memref<1x1x32xf32, #tpu.memory_space<vmem>>, %arg9: memref<1x1x32xf32, #tpu.memory_space<vmem>>, %arg10: memref<1x1x32xf32, #tpu.memory_space<vmem>>, %arg11: memref<1x32x64xbf16, #tpu.memory_space<vmem>>, %arg12: memref<1x1x64xf32, #tpu.memory_space<vmem>>, %arg13: memref<1x64x32xbf16, #tpu.memory_space<vmem>>, %arg14: memref<1x1x32xf32, #tpu.memory_space<vmem>>, %arg15: memref<1x1x32xf32, #tpu.memory_space<vmem>>, %arg16: memref<1x1x32xf32, #tpu.memory_space<vmem>>, %arg17: memref<32x128xbf16, #tpu.memory_space<vmem>>, %arg18: memref<1x128xf32, #tpu.memory_space<vmem>>, %arg19: memref<2x8x128xf32, #tpu.memory_space<vmem>>, %arg20: memref<16x32xf32, #tpu.memory_space<vmem>>) attributes {dimension_semantics = [#tpu.dimension_semantics<arbitrary>], iteration_bounds = array<i64: 2>, scalar_prefetch = 0 : i64, scratch_operands = 1 : i64, tpu.core_type = #tpu.core_type<tc>, window_params = [{pipeline_mode = #tpu.pipeline_mode<synchronous>, transform_indices = @transform_0, window_bounds = array<i64: 2, 8, 32>}, {pipeline_mode = #tpu.pipeline_mode<synchronous>, transform_indices = @transform_1, window_bounds = array<i64: 8, 1, 8>}, {pipeline_mode = #tpu.pipeline_mode<synchronous>, transform_indices = @transform_2, window_bounds = array<i64: 1, 32>}, {pipeline_mode = #tpu.pipeline_mode<synchronous>, transform_indices = @transform_3, window_bounds = array<i64: 1, 32>}, {transform_indices = @transform_4, window_bounds = array<i64: 1, 32, 96>}, {transform_indices = @transform_5, window_bounds = array<i64: 1, 1, 96>}, {transform_indices = @transform_6, window_bounds = array<i64: 1, 32, 32>}, {transform_indices = @transform_7, window_bounds = array<i64: 1, 1, 32>}, {transform_indices = @transform_8, window_bounds = array<i64: 1, 1, 32>}, {transform_indices = @transform_9, window_bounds = array<i64: 1, 1, 32>}, {transform_indices = @transform_10, window_bounds = array<i64: 1, 32, 64>}, {transform_indices = @transform_11, window_bounds = array<i64: 1, 1, 64>}, {transform_indices = @transform_12, window_bounds = array<i64: 1, 64, 32>}, {transform_indices = @transform_13, window_bounds = array<i64: 1, 1, 32>}, {transform_indices = @transform_14, window_bounds = array<i64: 1, 1, 32>}, {transform_indices = @transform_15, window_bounds = array<i64: 1, 1, 32>}, {pipeline_mode = #tpu.pipeline_mode<synchronous>, transform_indices = @transform_16, window_bounds = array<i64: 32, 128>}, {pipeline_mode = #tpu.pipeline_mode<synchronous>, transform_indices = @transform_17, window_bounds = array<i64: 1, 128>}, {pipeline_mode = #tpu.pipeline_mode<synchronous>, transform_indices = @transform_18, window_bounds = array<i64: 2, 8, 128>}]} {
    %c0_i32 = arith.constant 0 : i32
    %0 = arith.cmpi eq, %arg0, %c0_i32 : i32
    %1 = arith.extui %0 : i1 to i32
    %c0_i32_0 = arith.constant 0 : i32
    %2 = arith.cmpi ne, %1, %c0_i32_0 : i32
    scf.if %2 {
      %c0_67 = arith.constant 0 : index
      %c0_68 = arith.constant 0 : index
      %c0_69 = arith.constant 0 : index
      %146 = vector.load %arg1[%c0_67, %c0_68, %c0_69] : memref<2x8x32xf32, #tpu.memory_space<vmem>>, vector<2x8x32xf32>
      %147 = vector.shape_cast %146 : vector<2x8x32xf32> to vector<16x32xf32>
      %c0_70 = arith.constant 0 : index
      %c0_71 = arith.constant 0 : index
      %148 = vector.load %arg3[%c0_70, %c0_71] : memref<1x32xf32, #tpu.memory_space<vmem>>, vector<1x32xf32>
      %c0_72 = arith.constant 0 : index
      %c0_73 = arith.constant 0 : index
      %149 = vector.load %arg4[%c0_72, %c0_73] : memref<1x32xf32, #tpu.memory_space<vmem>>, vector<1x32xf32>
      %cst_74 = arith.constant dense<0.000000e+00> : vector<16xf32>
      %150 = vector.multi_reduction <add>, %147, %cst_74 [1] : vector<16x32xf32> to vector<16xf32>
      %151 = vector.shape_cast %150 : vector<16xf32> to vector<16x1xf32>
      %cst_75 = arith.constant 3.200000e+01 : f32
      %152 = vector.broadcast %cst_75 : f32 to vector<16x1xf32>
      %153 = arith.divf %151, %152 : vector<16x1xf32>
      %154 = vector.broadcast %153 : vector<16x1xf32> to vector<16x32xf32>
      %155 = arith.subf %147, %154 : vector<16x32xf32>
      %156 = arith.mulf %155, %155 : vector<16x32xf32>
      %cst_76 = arith.constant dense<0.000000e+00> : vector<16xf32>
      %157 = vector.multi_reduction <add>, %156, %cst_76 [1] : vector<16x32xf32> to vector<16xf32>
      %158 = vector.shape_cast %157 : vector<16xf32> to vector<16x1xf32>
      %cst_77 = arith.constant 3.200000e+01 : f32
      %159 = vector.broadcast %cst_77 : f32 to vector<16x1xf32>
      %160 = arith.divf %158, %159 : vector<16x1xf32>
      %161 = vector.broadcast %153 : vector<16x1xf32> to vector<16x32xf32>
      %162 = arith.subf %147, %161 : vector<16x32xf32>
      %cst_78 = arith.constant 9.99999996E-13 : f32
      %163 = vector.broadcast %cst_78 : f32 to vector<16x1xf32>
      %164 = arith.addf %160, %163 : vector<16x1xf32>
      %165 = math.rsqrt %164 : vector<16x1xf32>
      %166 = vector.broadcast %165 : vector<16x1xf32> to vector<16x32xf32>
      %167 = arith.mulf %162, %166 : vector<16x32xf32>
      %168 = vector.broadcast %148 : vector<1x32xf32> to vector<16x32xf32>
      %169 = arith.mulf %167, %168 : vector<16x32xf32>
      %170 = vector.broadcast %149 : vector<1x32xf32> to vector<16x32xf32>
      %171 = arith.addf %169, %170 : vector<16x32xf32>
      %c0_79 = arith.constant 0 : index
      %c0_80 = arith.constant 0 : index
      %172 = vector.load %arg20[%c0_79, %c0_80] : memref<16x32xf32, #tpu.memory_space<vmem>>, vector<16x32xf32>
      tpu.vector_store %arg20[%c0_79, %c0_80], %171 {strides = array<i32>} : memref<16x32xf32, #tpu.memory_space<vmem>>, vector<16x32xf32>,
    } else {
    }
    %c0 = arith.constant 0 : index
    %c0_1 = arith.constant 0 : index
    %3 = vector.load %arg20[%c0, %c0_1] : memref<16x32xf32, #tpu.memory_space<vmem>>, vector<16x32xf32>
    %4 = arith.truncf %3 : vector<16x32xf32> to vector<16x32xbf16>
    %c0_2 = arith.constant 0 : index
    %c0_3 = arith.constant 0 : index
    %c0_4 = arith.constant 0 : index
    %5 = vector.load %arg5[%c0_2, %c0_3, %c0_4] : memref<1x32x96xbf16, #tpu.memory_space<vmem>>, vector<1x32x96xbf16>
    %6 = vector.shape_cast %5 : vector<1x32x96xbf16> to vector<32x96xbf16>
    %cst = arith.constant dense<0.000000e+00> : vector<16x96xf32>
    %7 = tpu.matmul %4, %6, %cst {dimension_numbers = #tpu.dot_dimension_numbers<[1], [0], [0], [1], [0, 0, 1, 1], [], []>} : vector<16x32xbf16>, vector<32x96xbf16>, vector<16x96xf32> -> vector<16x96xf32>
    %c0_5 = arith.constant 0 : index
    %c0_6 = arith.constant 0 : index
    %c0_7 = arith.constant 0 : index
    %8 = vector.load %arg6[%c0_5, %c0_6, %c0_7] : memref<1x1x96xf32, #tpu.memory_space<vmem>>, vector<1x1x96xf32>
    %9 = vector.shape_cast %8 : vector<1x1x96xf32> to vector<1x96xf32>
    %10 = vector.broadcast %9 : vector<1x96xf32> to vector<16x96xf32>
    %11 = arith.addf %7, %10 : vector<16x96xf32>
    %12 = vector.extract_strided_slice %11 {offsets = [0, 0], sizes = [16, 32], strides = [1, 1]} : vector<16x96xf32> to vector<16x32xf32>
    %13 = vector.shape_cast %12 : vector<16x32xf32> to vector<2x8x4x8xf32>
    %14 = tpu.transpose %13, [0, 2, 1, 3] : vector<2x8x4x8xf32> -> vector<2x4x8x8xf32>
    %15 = vector.shape_cast %14 : vector<2x4x8x8xf32> to vector<8x8x8xf32>
    %16 = arith.truncf %15 : vector<8x8x8xf32> to vector<8x8x8xbf16>
    %17 = vector.extract_strided_slice %11 {offsets = [0, 32], sizes = [16, 32], strides = [1, 1]} : vector<16x96xf32> to vector<16x32xf32>
    %18 = vector.shape_cast %17 : vector<16x32xf32> to vector<2x8x4x8xf32>
    %19 = tpu.transpose %18, [0, 2, 1, 3] : vector<2x8x4x8xf32> -> vector<2x4x8x8xf32>
    %20 = vector.shape_cast %19 : vector<2x4x8x8xf32> to vector<8x8x8xf32>
    %21 = arith.truncf %20 : vector<8x8x8xf32> to vector<8x8x8xbf16>
    %22 = vector.extract_strided_slice %11 {offsets = [0, 64], sizes = [16, 32], strides = [1, 1]} : vector<16x96xf32> to vector<16x32xf32>
    %23 = vector.shape_cast %22 : vector<16x32xf32> to vector<2x8x4x8xf32>
    %24 = tpu.transpose %23, [0, 2, 1, 3] : vector<2x8x4x8xf32> -> vector<2x4x8x8xf32>
    %25 = vector.shape_cast %24 : vector<2x4x8x8xf32> to vector<8x8x8xf32>
    %26 = arith.truncf %25 : vector<8x8x8xf32> to vector<8x8x8xbf16>
    %cst_8 = arith.constant 8.000000e+00 : f32
    %27 = math.sqrt %cst_8 : f32
    %cst_9 = arith.constant 1.000000e+00 : f32
    %28 = arith.divf %cst_9, %27 : f32
    "tpu.trace_start"() <{level = 10 : i32, message = "hqd,hkd->hqk"}> : () -> ()
    %cst_10 = arith.constant dense<0.000000e+00> : vector<8x8x8xf32>
    %29 = tpu.matmul %16, %21, %cst_10 {dimension_numbers = #tpu.dot_dimension_numbers<[2], [2], [1], [1], [0, 0, 0, 1, 1, 1], [0], [0]>} : vector<8x8x8xbf16>, vector<8x8x8xbf16>, vector<8x8x8xf32> -> vector<8x8x8xf32>
    "tpu.trace_stop"() : () -> ()
    %30 = vector.broadcast %28 : f32 to vector<8x8x8xf32>
    %31 = arith.mulf %29, %30 : vector<8x8x8xf32>
    %c0_11 = arith.constant 0 : index
    %c0_12 = arith.constant 0 : index
    %c0_13 = arith.constant 0 : index
    %32 = vector.load %arg2[%c0_11, %c0_12, %c0_13] : memref<8x1x8xf32, #tpu.memory_space<vmem>>, vector<8x1x8xf32>
    %33 = vector.broadcast %32 : vector<8x1x8xf32> to vector<8x8x8xf32>
    %34 = arith.addf %31, %33 : vector<8x8x8xf32>
    %cst_14 = arith.constant dense<0xFF800000> : vector<8x8xf32>
    %35 = vector.multi_reduction <maximumf>, %34, %cst_14 [2] : vector<8x8x8xf32> to vector<8x8xf32>
    %36 = vector.shape_cast %35 : vector<8x8xf32> to vector<8x8x1xf32>
    %37 = vector.broadcast %36 : vector<8x8x1xf32> to vector<8x8x8xf32>
    %38 = arith.subf %34, %37 : vector<8x8x8xf32>
    %39 = math.exp %38 : vector<8x8x8xf32>
    %cst_15 = arith.constant dense<0.000000e+00> : vector<8x8xf32>
    %40 = vector.multi_reduction <add>, %39, %cst_15 [2] : vector<8x8x8xf32> to vector<8x8xf32>
    %41 = vector.shape_cast %40 : vector<8x8xf32> to vector<8x8x1xf32>
    %42 = tpu.reciprocal %41 {approx = true} : vector<8x8x1xf32> -> vector<8x8x1xf32>
    %43 = vector.broadcast %42 : vector<8x8x1xf32> to vector<8x8x8xf32>
    %44 = arith.mulf %39, %43 : vector<8x8x8xf32>
    %45 = arith.truncf %44 : vector<8x8x8xf32> to vector<8x8x8xbf16>
    "tpu.trace_start"() <{level = 10 : i32, message = "hqk,hkd->hqd"}> : () -> ()
    %cst_16 = arith.constant dense<0.000000e+00> : vector<8x8x8xf32>
    %46 = tpu.matmul %45, %26, %cst_16 {dimension_numbers = #tpu.dot_dimension_numbers<[2], [1], [1], [2], [0, 0, 0, 1, 1, 2], [0], [0]>} : vector<8x8x8xbf16>, vector<8x8x8xbf16>, vector<8x8x8xf32> -> vector<8x8x8xf32>
    "tpu.trace_stop"() : () -> ()
    %47 = vector.shape_cast %46 : vector<8x8x8xf32> to vector<2x4x8x8xf32>
    %48 = tpu.transpose %47, [0, 2, 1, 3] : vector<2x4x8x8xf32> -> vector<2x8x4x8xf32>
    %49 = vector.shape_cast %48 : vector<2x8x4x8xf32> to vector<16x32xf32>
    %50 = arith.truncf %49 : vector<16x32xf32> to vector<16x32xbf16>
    %c0_17 = arith.constant 0 : index
    %c0_18 = arith.constant 0 : index
    %c0_19 = arith.constant 0 : index
    %51 = vector.load %arg7[%c0_17, %c0_18, %c0_19] : memref<1x32x32xbf16, #tpu.memory_space<vmem>>, vector<1x32x32xbf16>
    %52 = vector.shape_cast %51 : vector<1x32x32xbf16> to vector<32x32xbf16>
    %cst_20 = arith.constant dense<0.000000e+00> : vector<16x32xf32>
    %53 = tpu.matmul %50, %52, %cst_20 {dimension_numbers = #tpu.dot_dimension_numbers<[1], [0], [0], [1], [0, 0, 1, 1], [], []>} : vector<16x32xbf16>, vector<32x32xbf16>, vector<16x32xf32> -> vector<16x32xf32>
    %c0_21 = arith.constant 0 : index
    %c0_22 = arith.constant 0 : index
    %c0_23 = arith.constant 0 : index
    %54 = vector.load %arg8[%c0_21, %c0_22, %c0_23] : memref<1x1x32xf32, #tpu.memory_space<vmem>>, vector<1x1x32xf32>
    %55 = vector.shape_cast %54 : vector<1x1x32xf32> to vector<1x32xf32>
    %56 = vector.broadcast %55 : vector<1x32xf32> to vector<16x32xf32>
    %57 = arith.addf %53, %56 : vector<16x32xf32>
    %58 = arith.addf %3, %57 : vector<16x32xf32>
    %c0_24 = arith.constant 0 : index
    %c0_25 = arith.constant 0 : index
    %c0_26 = arith.constant 0 : index
    %59 = vector.load %arg9[%c0_24, %c0_25, %c0_26] : memref<1x1x32xf32, #tpu.memory_space<vmem>>, vector<1x1x32xf32>
    %60 = vector.shape_cast %59 : vector<1x1x32xf32> to vector<1x32xf32>
    %c0_27 = arith.constant 0 : index
    %c0_28 = arith.constant 0 : index
    %c0_29 = arith.constant 0 : index
    %61 = vector.load %arg10[%c0_27, %c0_28, %c0_29] : memref<1x1x32xf32, #tpu.memory_space<vmem>>, vector<1x1x32xf32>
    %62 = vector.shape_cast %61 : vector<1x1x32xf32> to vector<1x32xf32>
    %cst_30 = arith.constant dense<0.000000e+00> : vector<16xf32>
    %63 = vector.multi_reduction <add>, %58, %cst_30 [1] : vector<16x32xf32> to vector<16xf32>
    %64 = vector.shape_cast %63 : vector<16xf32> to vector<16x1xf32>
    %cst_31 = arith.constant 3.200000e+01 : f32
    %65 = vector.broadcast %cst_31 : f32 to vector<16x1xf32>
    %66 = arith.divf %64, %65 : vector<16x1xf32>
    %67 = vector.broadcast %66 : vector<16x1xf32> to vector<16x32xf32>
    %68 = arith.subf %58, %67 : vector<16x32xf32>
    %69 = arith.mulf %68, %68 : vector<16x32xf32>
    %cst_32 = arith.constant dense<0.000000e+00> : vector<16xf32>
    %70 = vector.multi_reduction <add>, %69, %cst_32 [1] : vector<16x32xf32> to vector<16xf32>
    %71 = vector.shape_cast %70 : vector<16xf32> to vector<16x1xf32>
    %cst_33 = arith.constant 3.200000e+01 : f32
    %72 = vector.broadcast %cst_33 : f32 to vector<16x1xf32>
    %73 = arith.divf %71, %72 : vector<16x1xf32>
    %74 = vector.broadcast %66 : vector<16x1xf32> to vector<16x32xf32>
    %75 = arith.subf %58, %74 : vector<16x32xf32>
    %cst_34 = arith.constant 9.99999996E-13 : f32
    %76 = vector.broadcast %cst_34 : f32 to vector<16x1xf32>
    %77 = arith.addf %73, %76 : vector<16x1xf32>
    %78 = math.rsqrt %77 : vector<16x1xf32>
    %79 = vector.broadcast %78 : vector<16x1xf32> to vector<16x32xf32>
    %80 = arith.mulf %75, %79 : vector<16x32xf32>
    %81 = vector.broadcast %60 : vector<1x32xf32> to vector<16x32xf32>
    %82 = arith.mulf %80, %81 : vector<16x32xf32>
    %83 = vector.broadcast %62 : vector<1x32xf32> to vector<16x32xf32>
    %84 = arith.addf %82, %83 : vector<16x32xf32>
    %85 = arith.truncf %84 : vector<16x32xf32> to vector<16x32xbf16>
    %c0_35 = arith.constant 0 : index
    %c0_36 = arith.constant 0 : index
    %c0_37 = arith.constant 0 : index
    %86 = vector.load %arg11[%c0_35, %c0_36, %c0_37] : memref<1x32x64xbf16, #tpu.memory_space<vmem>>, vector<1x32x64xbf16>
    %87 = vector.shape_cast %86 : vector<1x32x64xbf16> to vector<32x64xbf16>
    %cst_38 = arith.constant dense<0.000000e+00> : vector<16x64xf32>
    %88 = tpu.matmul %85, %87, %cst_38 {dimension_numbers = #tpu.dot_dimension_numbers<[1], [0], [0], [1], [0, 0, 1, 1], [], []>} : vector<16x32xbf16>, vector<32x64xbf16>, vector<16x64xf32> -> vector<16x64xf32>
    %c0_39 = arith.constant 0 : index
    %c0_40 = arith.constant 0 : index
    %c0_41 = arith.constant 0 : index
    %89 = vector.load %arg12[%c0_39, %c0_40, %c0_41] : memref<1x1x64xf32, #tpu.memory_space<vmem>>, vector<1x1x64xf32>
    %90 = vector.shape_cast %89 : vector<1x1x64xf32> to vector<1x64xf32>
    %91 = vector.broadcast %90 : vector<1x64xf32> to vector<16x64xf32>
    %92 = arith.addf %88, %91 : vector<16x64xf32>
    %cst_42 = arith.constant 0.636619746 : f32
    %93 = math.sqrt %cst_42 : f32
    %cst_43 = arith.constant 5.000000e-01 : f32
    %94 = vector.broadcast %cst_43 : f32 to vector<16x64xf32>
    %95 = arith.mulf %94, %92 : vector<16x64xf32>
    %cst_44 = arith.constant 4.471500e-02 : f32
    %96 = vector.broadcast %cst_44 : f32 to vector<16x64xf32>
    %97 = arith.mulf %96, %92 : vector<16x64xf32>
    %98 = arith.mulf %97, %92 : vector<16x64xf32>
    %99 = arith.mulf %98, %92 : vector<16x64xf32>
    %100 = arith.addf %92, %99 : vector<16x64xf32>
    %101 = vector.broadcast %93 : f32 to vector<16x64xf32>
    %102 = arith.mulf %101, %100 : vector<16x64xf32>
    %103 = math.tanh %102 : vector<16x64xf32>
    %cst_45 = arith.constant 1.000000e+00 : f32
    %104 = vector.broadcast %cst_45 : f32 to vector<16x64xf32>
    %105 = arith.addf %104, %103 : vector<16x64xf32>
    %106 = arith.mulf %95, %105 : vector<16x64xf32>
    %107 = arith.truncf %106 : vector<16x64xf32> to vector<16x64xbf16>
    %c0_46 = arith.constant 0 : index
    %c0_47 = arith.constant 0 : index
    %c0_48 = arith.constant 0 : index
    %108 = vector.load %arg13[%c0_46, %c0_47, %c0_48] : memref<1x64x32xbf16, #tpu.memory_space<vmem>>, vector<1x64x32xbf16>
    %109 = vector.shape_cast %108 : vector<1x64x32xbf16> to vector<64x32xbf16>
    %cst_49 = arith.constant dense<0.000000e+00> : vector<16x32xf32>
    %110 = tpu.matmul %107, %109, %cst_49 {dimension_numbers = #tpu.dot_dimension_numbers<[1], [0], [0], [1], [0, 0, 1, 1], [], []>} : vector<16x64xbf16>, vector<64x32xbf16>, vector<16x32xf32> -> vector<16x32xf32>
    %c0_50 = arith.constant 0 : index
    %c0_51 = arith.constant 0 : index
    %c0_52 = arith.constant 0 : index
    %111 = vector.load %arg14[%c0_50, %c0_51, %c0_52] : memref<1x1x32xf32, #tpu.memory_space<vmem>>, vector<1x1x32xf32>
    %112 = vector.shape_cast %111 : vector<1x1x32xf32> to vector<1x32xf32>
    %113 = vector.broadcast %112 : vector<1x32xf32> to vector<16x32xf32>
    %114 = arith.addf %110, %113 : vector<16x32xf32>
    %115 = arith.addf %84, %114 : vector<16x32xf32>
    %c0_53 = arith.constant 0 : index
    %c0_54 = arith.constant 0 : index
    %c0_55 = arith.constant 0 : index
    %116 = vector.load %arg15[%c0_53, %c0_54, %c0_55] : memref<1x1x32xf32, #tpu.memory_space<vmem>>, vector<1x1x32xf32>
    %117 = vector.shape_cast %116 : vector<1x1x32xf32> to vector<1x32xf32>
    %c0_56 = arith.constant 0 : index
    %c0_57 = arith.constant 0 : index
    %c0_58 = arith.constant 0 : index
    %118 = vector.load %arg16[%c0_56, %c0_57, %c0_58] : memref<1x1x32xf32, #tpu.memory_space<vmem>>, vector<1x1x32xf32>
    %119 = vector.shape_cast %118 : vector<1x1x32xf32> to vector<1x32xf32>
    %cst_59 = arith.constant dense<0.000000e+00> : vector<16xf32>
    %120 = vector.multi_reduction <add>, %115, %cst_59 [1] : vector<16x32xf32> to vector<16xf32>
    %121 = vector.shape_cast %120 : vector<16xf32> to vector<16x1xf32>
    %cst_60 = arith.constant 3.200000e+01 : f32
    %122 = vector.broadcast %cst_60 : f32 to vector<16x1xf32>
    %123 = arith.divf %121, %122 : vector<16x1xf32>
    %124 = vector.broadcast %123 : vector<16x1xf32> to vector<16x32xf32>
    %125 = arith.subf %115, %124 : vector<16x32xf32>
    %126 = arith.mulf %125, %125 : vector<16x32xf32>
    %cst_61 = arith.constant dense<0.000000e+00> : vector<16xf32>
    %127 = vector.multi_reduction <add>, %126, %cst_61 [1] : vector<16x32xf32> to vector<16xf32>
    %128 = vector.shape_cast %127 : vector<16xf32> to vector<16x1xf32>
    %cst_62 = arith.constant 3.200000e+01 : f32
    %129 = vector.broadcast %cst_62 : f32 to vector<16x1xf32>
    %130 = arith.divf %128, %129 : vector<16x1xf32>
    %131 = vector.broadcast %123 : vector<16x1xf32> to vector<16x32xf32>
    %132 = arith.subf %115, %131 : vector<16x32xf32>
    %cst_63 = arith.constant 9.99999996E-13 : f32
    %133 = vector.broadcast %cst_63 : f32 to vector<16x1xf32>
    %134 = arith.addf %130, %133 : vector<16x1xf32>
    %135 = math.rsqrt %134 : vector<16x1xf32>
    %136 = vector.broadcast %135 : vector<16x1xf32> to vector<16x32xf32>
    %137 = arith.mulf %132, %136 : vector<16x32xf32>
    %138 = vector.broadcast %117 : vector<1x32xf32> to vector<16x32xf32>
    %139 = arith.mulf %137, %138 : vector<16x32xf32>
    %140 = vector.broadcast %119 : vector<1x32xf32> to vector<16x32xf32>
    %141 = arith.addf %139, %140 : vector<16x32xf32>
    %c0_64 = arith.constant 0 : index
    %c0_65 = arith.constant 0 : index
    %142 = vector.load %arg20[%c0_64, %c0_65] : memref<16x32xf32, #tpu.memory_space<vmem>>, vector<16x32xf32>
    tpu.vector_store %arg20[%c0_64, %c0_65], %141 {strides = array<i32>} : memref<16x32xf32, #tpu.memory_space<vmem>>, vector<16x32xf32>,
    %c1_i32 = arith.constant 1 : i32
    %143 = arith.cmpi eq, %arg0, %c1_i32 : i32
    %144 = arith.extui %143 : i1 to i32
    %c0_i32_66 = arith.constant 0 : i32
    %145 = arith.cmpi ne, %144, %c0_i32_66 : i32
    scf.if %145 {
      %146 = arith.truncf %141 : vector<16x32xf32> to vector<16x32xbf16>
      %c0_67 = arith.constant 0 : index
      %c0_68 = arith.constant 0 : index
      %147 = vector.load %arg17[%c0_67, %c0_68] : memref<32x128xbf16, #tpu.memory_space<vmem>>, vector<32x128xbf16>
      %cst_69 = arith.constant dense<0.000000e+00> : vector<16x128xf32>
      %148 = tpu.matmul %146, %147, %cst_69 {dimension_numbers = #tpu.dot_dimension_numbers<[1], [0], [0], [1], [0, 0, 1, 1], [], []>} : vector<16x32xbf16>, vector<32x128xbf16>, vector<16x128xf32> -> vector<16x128xf32>
      %c0_70 = arith.constant 0 : index
      %c0_71 = arith.constant 0 : index
      %149 = vector.load %arg18[%c0_70, %c0_71] : memref<1x128xf32, #tpu.memory_space<vmem>>, vector<1x128xf32>
      %150 = vector.broadcast %149 : vector<1x128xf32> to vector<16x128xf32>
      %151 = arith.addf %148, %150 : vector<16x128xf32>
      %152 = vector.shape_cast %151 : vector<16x128xf32> to vector<2x8x128xf32>
      %c0_72 = arith.constant 0 : index
      %c0_73 = arith.constant 0 : index
      %c0_74 = arith.constant 0 : index
      %153 = vector.load %arg19[%c0_72, %c0_73, %c0_74] : memref<2x8x128xf32, #tpu.memory_space<vmem>>, vector<2x8x128xf32>
      tpu.vector_store %arg19[%c0_72, %c0_73, %c0_74], %152 {strides = array<i32>} : memref<2x8x128xf32, #tpu.memory_space<vmem>>, vector<2x8x128xf32>,
    } else {
    }
    return
  }
  func.func @transform_0(%arg0: i32) -> (i32, i32, i32) {
    %c0_i32 = arith.constant 0 : i32
    %c0_i32_0 = arith.constant 0 : i32
    %c0_i32_1 = arith.constant 0 : i32
    %c0_i32_2 = arith.constant 0 : i32
    return %c0_i32, %c0_i32_0, %c0_i32_1 : i32, i32, i32
  }
  func.func @transform_1(%arg0: i32) -> (i32, i32, i32) {
    %c0_i32 = arith.constant 0 : i32
    %c0_i32_0 = arith.constant 0 : i32
    %c0_i32_1 = arith.constant 0 : i32
    %c0_i32_2 = arith.constant 0 : i32
    return %c0_i32, %c0_i32_0, %c0_i32_1 : i32, i32, i32
  }
  func.func @transform_2(%arg0: i32) -> (i32, i32) {
    %c0_i32 = arith.constant 0 : i32
    %c0_i32_0 = arith.constant 0 : i32
    %c0_i32_1 = arith.constant 0 : i32
    return %c0_i32, %c0_i32_0 : i32, i32
  }
  func.func @transform_3(%arg0: i32) -> (i32, i32) {
    %c0_i32 = arith.constant 0 : i32
    %c0_i32_0 = arith.constant 0 : i32
    %c0_i32_1 = arith.constant 0 : i32
    return %c0_i32, %c0_i32_0 : i32, i32
  }
  func.func @transform_4(%arg0: i32) -> (i32, i32, i32) {
    %c0_i32 = arith.constant 0 : i32
    %c0_i32_0 = arith.constant 0 : i32
    %c0_i32_1 = arith.constant 0 : i32
    return %arg0, %c0_i32, %c0_i32_0 : i32, i32, i32
  }
  func.func @transform_5(%arg0: i32) -> (i32, i32, i32) {
    %c0_i32 = arith.constant 0 : i32
    %c0_i32_0 = arith.constant 0 : i32
    %c0_i32_1 = arith.constant 0 : i32
    return %arg0, %c0_i32, %c0_i32_0 : i32, i32, i32
  }
  func.func @transform_6(%arg0: i32) -> (i32, i32, i32) {
    %c0_i32 = arith.constant 0 : i32
    %c0_i32_0 = arith.constant 0 : i32
    %c0_i32_1 = arith.constant 0 : i32
    return %arg0, %c0_i32, %c0_i32_0 : i32, i32, i32
  }
  func.func @transform_7(%arg0: i32) -> (i32, i32, i32) {
    %c0_i32 = arith.constant 0 : i32
    %c0_i32_0 = arith.constant 0 : i32
    %c0_i32_1 = arith.constant 0 : i32
    return %arg0, %c0_i32, %c0_i32_0 : i32, i32, i32
  }
  func.func @transform_8(%arg0: i32) -> (i32, i32, i32) {
    %c0_i32 = arith.constant 0 : i32
    %c0_i32_0 = arith.constant 0 : i32
    %c0_i32_1 = arith.constant 0 : i32
    return %arg0, %c0_i32, %c0_i32_0 : i32, i32, i32
  }
  func.func @transform_9(%arg0: i32) -> (i32, i32, i32) {
    %c0_i32 = arith.constant 0 : i32
    %c0_i32_0 = arith.constant 0 : i32
    %c0_i32_1 = arith.constant 0 : i32
    return %arg0, %c0_i32, %c0_i32_0 : i32, i32, i32
  }
  func.func @transform_10(%arg0: i32) -> (i32, i32, i32) {
    %c0_i32 = arith.constant 0 : i32
    %c0_i32_0 = arith.constant 0 : i32
    %c0_i32_1 = arith.constant 0 : i32
    return %arg0, %c0_i32, %c0_i32_0 : i32, i32, i32
  }
  func.func @transform_11(%arg0: i32) -> (i32, i32, i32) {
    %c0_i32 = arith.constant 0 : i32
    %c0_i32_0 = arith.constant 0 : i32
    %c0_i32_1 = arith.constant 0 : i32
    return %arg0, %c0_i32, %c0_i32_0 : i32, i32, i32
  }
  func.func @transform_12(%arg0: i32) -> (i32, i32, i32) {
    %c0_i32 = arith.constant 0 : i32
    %c0_i32_0 = arith.constant 0 : i32
    %c0_i32_1 = arith.constant 0 : i32
    return %arg0, %c0_i32, %c0_i32_0 : i32, i32, i32
  }
  func.func @transform_13(%arg0: i32) -> (i32, i32, i32) {
    %c0_i32 = arith.constant 0 : i32
    %c0_i32_0 = arith.constant 0 : i32
    %c0_i32_1 = arith.constant 0 : i32
    return %arg0, %c0_i32, %c0_i32_0 : i32, i32, i32
  }
  func.func @transform_14(%arg0: i32) -> (i32, i32, i32) {
    %c0_i32 = arith.constant 0 : i32
    %c0_i32_0 = arith.constant 0 : i32
    %c0_i32_1 = arith.constant 0 : i32
    return %arg0, %c0_i32, %c0_i32_0 : i32, i32, i32
  }
  func.func @transform_15(%arg0: i32) -> (i32, i32, i32) {
    %c0_i32 = arith.constant 0 : i32
    %c0_i32_0 = arith.constant 0 : i32
    %c0_i32_1 = arith.constant 0 : i32
    return %arg0, %c0_i32, %c0_i32_0 : i32, i32, i32
  }
  func.func @transform_16(%arg0: i32) -> (i32, i32) {
    %c0_i32 = arith.constant 0 : i32
    %c0_i32_0 = arith.constant 0 : i32
    %c0_i32_1 = arith.constant 0 : i32
    return %c0_i32, %c0_i32_0 : i32, i32
  }
  func.func @transform_17(%arg0: i32) -> (i32, i32) {
    %c0_i32 = arith.constant 0 : i32
    %c0_i32_0 = arith.constant 0 : i32
    %c0_i32_1 = arith.constant 0 : i32
    return %c0_i32, %c0_i32_0 : i32, i32
  }
  func.func @transform_18(%arg0: i32) -> (i32, i32, i32) {
    %c0_i32 = arith.constant 0 : i32
    %c0_i32_0 = arith.constant 0 : i32
    %c0_i32_1 = arith.constant 0 : i32
    %c0_i32_2 = arith.constant 0 : i32
    return %c0_i32, %c0_i32_0, %c0_i32_1 : i32, i32, i32
  }
}

</mosaic_0001>

<llo_original>
// kernel: tpu_custom_call.1
$region0: #{tpu_custom_call.1}
  #allocation0 [shape = 'u32[]', space=smem, size = 0x4, offset = 0x4, fixed_abs, tag = 'smem constant byte address 0x4 - core index']
  #allocation1 [shape = 'u32[144,128]{1,0:T(1,128)}', space=vmem, size = 0x12000, scoped, tag = 'internal scratch']
  #allocation2 [shape = 'f32[16,32]{1,0:T(8,128)}', space=vmem, size = 0x2000, scoped, tag = 'scratch operand']
  %s0 = inlined_call_operand.hbm [shape: f32[2,8,32], index: 0, kind: input, shape index: {}]
  %s1 = inlined_call_operand.hbm [shape: f32[8,1,8], index: 1, kind: input, shape index: {}]
  %s2 = inlined_call_operand.vmem [shape: f32[1,32], index: 2, kind: input, shape index: {}]
  %s3 = inlined_call_operand.hbm [shape: f32[1,32], index: 3, kind: input, shape index: {}]
  %s4 = inlined_call_operand.vmem [shape: bf16[2,32,96], index: 4, kind: input, shape index: {}]
  %s5 = inlined_call_operand.hbm [shape: f32[2,1,96], index: 5, kind: input, shape index: {}]
  %s6 = inlined_call_operand.vmem [shape: bf16[2,32,32], index: 6, kind: input, shape index: {}]
  %s7 = inlined_call_operand.hbm [shape: f32[2,1,32], index: 7, kind: input, shape index: {}]
  %s8 = inlined_call_operand.hbm [shape: f32[2,1,32], index: 8, kind: input, shape index: {}]
  %s9 = inlined_call_operand.hbm [shape: f32[2,1,32], index: 9, kind: input, shape index: {}]
  %s10 = inlined_call_operand.vmem [shape: bf16[2,32,64], index: 10, kind: input, shape index: {}]
  %s11 = inlined_call_operand.hbm [shape: f32[2,1,64], index: 11, kind: input, shape index: {}]
  %s12 = inlined_call_operand.vmem [shape: bf16[2,64,32], index: 12, kind: input, shape index: {}]
  %s13 = inlined_call_operand.hbm [shape: f32[2,1,32], index: 13, kind: input, shape index: {}]
  %s14 = inlined_call_operand.vmem [shape: f32[2,1,32], index: 14, kind: input, shape index: {}]
  %s15 = inlined_call_operand.vmem [shape: f32[2,1,32], index: 15, kind: input, shape index: {}]
  %s16 = inlined_call_operand.vmem [shape: bf16[32,128], index: 16, kind: input, shape index: {}]
  %s17 = inlined_call_operand.vmem [shape: f32[1,128], index: 17, kind: input, shape index: {}]
  %s18 = inlined_call_operand.hbm [shape: f32[2,8,128], index: 18, kind: output, shape index: {}]
  %s19 = sld [smem:[#allocation0]]
  $region149: #{tpu_custom_call.1} parent=0
    _
  %s21 = ssub.s32 1, %s19
  %s22 = scalar_select 0, %s21, %s19
  $region1: #{tpu_custom_call.1} parent=0
    #allocation3 [shape = 'u8[8192]{0}', space=vmem, size = 0x2000, scoped, tag = 'input window, operand 0, single buffered']
    #allocation4 [shape = 's32[2]{0}', space=sflag, size = 0x8, scoped, tag = 'scoped memory for tpu_custom_call.1']
    #allocation5 [shape = 's32[2]{0}', space=sflag, size = 0x8, scoped, tag = 'scoped memory for tpu_custom_call.1']
    #allocation6 [shape = 'u8[4096]{0}', space=vmem, size = 0x1000, scoped, tag = 'input window, operand 1, single buffered']
    #allocation7 [shape = 's32[1]{0}', space=sflag, size = 0x4, scoped, tag = 'scoped memory for tpu_custom_call.1']
    #allocation8 [shape = 'u8[512]{0}', space=vmem, size = 0x400, scoped, tag = 'input window, operand 3, single buffered']
    #allocation9 [shape = 'u8[1024]{0}', space=vmem, size = 0x400, scoped, tag = 'input window, operand 5']
    #allocation10 [shape = 's32[2]{0}', space=sflag, size = 0x8, scoped, tag = 'scoped memory for tpu_custom_call.1']
    #allocation11 [shape = 'u8[1024]{0}', space=vmem, size = 0x400, scoped, tag = 'input window, operand 7']
    #allocation12 [shape = 'u8[1024]{0}', space=vmem, size = 0x400, scoped, tag = 'input window, operand 8']
    #allocation13 [shape = 's32[2]{0}', space=sflag, size = 0x8, scoped, tag = 'scoped memory for tpu_custom_call.1']
    #allocation14 [shape = 'u8[1024]{0}', space=vmem, size = 0x400, scoped, tag = 'input window, operand 9']
    #allocation15 [shape = 'u8[1024]{0}', space=vmem, size = 0x400, scoped, tag = 'input window, operand 11']
    #allocation16 [shape = 's32[2]{0}', space=sflag, size = 0x8, scoped, tag = 'scoped memory for tpu_custom_call.1']
    #allocation17 [shape = 'u8[1024]{0}', space=vmem, size = 0x400, scoped, tag = 'input window, operand 13']
    #allocation18 [shape = 'u8[8192]{0}', space=vmem, size = 0x2000, scoped, tag = 'output window, operand 0, single buffered']
    %23 = vsyncpa [#allocation4], 0
    %24 = vsyncpa [#allocation7], 0
    %25 = vsyncpa [#allocation10], 0
    %s26 = scalar_lea.sflag [#allocation10], 1
    %27 = vsyncpa %s26, 0
    %28 = vsyncpa [#allocation13], 0
    %s29 = scalar_lea.sflag [#allocation13], 1
    %30 = vsyncpa %s29, 0
    %31 = vsyncpa [#allocation16], 0
    %s32 = scalar_lea.sflag [#allocation16], 1
    %33 = vsyncpa %s32, 0
    %34 = vsyncpa [#allocation5], 0
    loop: start=0, step=1, limit=4
    $region2: #{tpu_custom_call.1} parent=1 // loop_pre_header
      _
    $region3: #{tpu_custom_call.1} parent=1 // loop_header
      %s36 = sphi 0, %s40
      %p37 = scmp.ge.s32.totalorder %s36, 4
      %s44 = sphi 0, %s44
      %s46 = sphi 0, %s44
      %s47 = sphi 0, %s46
      %s61 = sphi 0, %s47
      %s65 = sphi 0, %s65
      %s67 = sphi 0, %s65
      %s68 = sphi 0, %s67
      %s82 = sphi 0, %s68
      %s86 = sphi 0, %s86
      %s88 = sphi 0, %s86
      %s89 = sphi 0, %s88
      %s103 = sphi 0, %s89
      %s107 = sphi 0, %s107
      %s109 = sphi 0, %s107
      %s110 = sphi 0, %s109
      %s124 = sphi 0, %s110
      %s130 = sphi 0, %s132
      %s133 = sphi 0, %s130
      %s134 = sphi 0, %s133
      %s150 = sphi 0, %s134
      %s156 = sphi 0, %s158
      %s159 = sphi 0, %s156
      %s160 = sphi 0, %s159
      %s176 = sphi 0, %s160
      %s182 = sphi 0, %s184
      %s185 = sphi 0, %s182
      %s186 = sphi 0, %s185
      %s202 = sphi 0, %s186
      %s208 = sphi 0, %s210
      %s211 = sphi 0, %s208
      %s212 = sphi 0, %s211
      %s228 = sphi 0, %s212
      %s234 = sphi 0, %s236
      %s237 = sphi 0, %s234
      %s238 = sphi 0, %s237
      %s254 = sphi 0, %s238
      %s260 = sphi 0, %s262
      %s263 = sphi 0, %s260
      %s264 = sphi 0, %s263
      %s280 = sphi 0, %s264
      %s286 = sphi 0, %s288
      %s289 = sphi 0, %s286
      %s290 = sphi 0, %s289
      %s306 = sphi 0, %s290
      %s312 = sphi 0, %s314
      %s315 = sphi 0, %s312
      %s316 = sphi 0, %s315
      %s332 = sphi 0, %s316
      %s338 = sphi 0, %s340
      %s341 = sphi 0, %s338
      %s342 = sphi 0, %s341
      %s358 = sphi 0, %s342
      %s364 = sphi 0, %s366
      %s367 = sphi 0, %s364
      %s368 = sphi 0, %s367
      %s384 = sphi 0, %s368
      %s390 = sphi 0, %s392
      %s393 = sphi 0, %s390
      %s394 = sphi 0, %s393
      %s410 = sphi 0, %s394
      %s416 = sphi 0, %s418
      %s419 = sphi 0, %s416
      %s420 = sphi 0, %s419
      %s436 = sphi 0, %s420
      %s440 = sphi 0, %s440
      %s442 = sphi 0, %s440
      %s443 = sphi 0, %s442
      %s457 = sphi 0, %s443
      %s461 = sphi 0, %s461
      %s463 = sphi 0, %s461
      %s464 = sphi 0, %s463
      %s478 = sphi 0, %s464
      %s482 = sphi 0, %s482
      %s484 = sphi 0, %s482
      %s485 = sphi 0, %s484
      %s499 = sphi 0, %s485
    $region4: #{tpu_custom_call.1} parent=1 // loop_header_branch
      %39 = sbr.rel (%p37) target = $region8
    $region5: #{tpu_custom_call.1} parent=1 // loop_body
      %s41 = ssub.s32 %s36, 1
      %s42 = ssub.s32 %s36, 2
      %s43 = sadd.s32 %s36, 1
      %s45 = sadd.s32 %s44, 1
      %p48 = scmp.eq.s32.totalorder %s36, 1
      %p49 = scmp.ne.s32.totalorder %s44, %s46
      %p50 = scmp.eq.s32.totalorder %s36, 0
      %p51 = por %p49, %p50
      %p52 = scmp.ne.s32.totalorder %s44, %s46
      %p53 = scmp.eq.s32.totalorder %s41, 1
      %p54 = por %p52, %p53
      %p55 = scmp.ne.s32.totalorder %s46, %s47
      %p56 = scmp.eq.s32.totalorder %s41, 0
      %p57 = por %p55, %p56
      %p58 = scmp.ne.s32.totalorder %s46, %s47
      %p59 = scmp.eq.s32.totalorder %s42, 1
      %p60 = por %p58, %p59
      %p62 = scmp.ne.s32.totalorder %s47, %s61
      %p63 = scmp.eq.s32.totalorder %s42, 0
      %p64 = por %p62, %p63
      %s66 = sadd.s32 %s65, 1
      %p69 = scmp.eq.s32.totalorder %s36, 1
      %p70 = scmp.ne.s32.totalorder %s65, %s67
      %p71 = scmp.eq.s32.totalorder %s36, 0
      %p72 = por %p70, %p71
      %p73 = scmp.ne.s32.totalorder %s65, %s67
      %p74 = scmp.eq.s32.totalorder %s41, 1
      %p75 = por %p73, %p74
      %p76 = scmp.ne.s32.totalorder %s67, %s68
      %p77 = scmp.eq.s32.totalorder %s41, 0
      %p78 = por %p76, %p77
      %p79 = scmp.ne.s32.totalorder %s67, %s68
      %p80 = scmp.eq.s32.totalorder %s42, 1
      %p81 = por %p79, %p80
      %p83 = scmp.ne.s32.totalorder %s68, %s82
      %p84 = scmp.eq.s32.totalorder %s42, 0
      %p85 = por %p83, %p84
      %s87 = sadd.s32 %s86, 1
      %p90 = scmp.eq.s32.totalorder %s36, 1
      %p91 = scmp.ne.s32.totalorder %s86, %s88
      %p92 = scmp.eq.s32.totalorder %s36, 0
      %p93 = por %p91, %p92
      %p94 = scmp.ne.s32.totalorder %s86, %s88
      %p95 = scmp.eq.s32.totalorder %s41, 1
      %p96 = por %p94, %p95
      %p97 = scmp.ne.s32.totalorder %s88, %s89
      %p98 = scmp.eq.s32.totalorder %s41, 0
      %p99 = por %p97, %p98
      %p100 = scmp.ne.s32.totalorder %s88, %s89
      %p101 = scmp.eq.s32.totalorder %s42, 1
      %p102 = por %p100, %p101
      %p104 = scmp.ne.s32.totalorder %s89, %s103
      %p105 = scmp.eq.s32.totalorder %s42, 0
      %p106 = por %p104, %p105
      %s108 = sadd.s32 %s107, 1
      %p111 = scmp.eq.s32.totalorder %s36, 1
      %p112 = scmp.ne.s32.totalorder %s107, %s109
      %p113 = scmp.eq.s32.totalorder %s36, 0
      %p114 = por %p112, %p113
      %p115 = scmp.ne.s32.totalorder %s107, %s109
      %p116 = scmp.eq.s32.totalorder %s41, 1
      %p117 = por %p115, %p116
      %p118 = scmp.ne.s32.totalorder %s109, %s110
      %p119 = scmp.eq.s32.totalorder %s41, 0
      %p120 = por %p118, %p119
      %p121 = scmp.ne.s32.totalorder %s109, %s110
      %p122 = scmp.eq.s32.totalorder %s42, 1
      %p123 = por %p121, %p122
      %p125 = scmp.ne.s32.totalorder %s110, %s124
      %p126 = scmp.eq.s32.totalorder %s42, 0
      %p127 = por %p125, %p126
      %s128 = ssub.s32 %s36, %s43
      %p129 = scmp.eq.s32.totalorder %s128, 0
      %s131 = sadd.s32 %s130, 1
      %s132 = scalar_select %p129, %s130, %s131
      %p135 = pneg %p129
      %p136 = scmp.eq.s32.totalorder %s36, 1
      %p137 = por %p135, %p136
      %p138 = scmp.ne.s32.totalorder %s130, %s133
      %p139 = scmp.eq.s32.totalorder %s36, 0
      %p140 = por %p138, %p139
      %p141 = scmp.ne.s32.totalorder %s130, %s133
      %p142 = scmp.eq.s32.totalorder %s41, 1
      %p143 = por %p141, %p142
      %p144 = scmp.ne.s32.totalorder %s133, %s134
      %p145 = scmp.eq.s32.totalorder %s41, 0
      %p146 = por %p144, %p145
      %p147 = scmp.ne.s32.totalorder %s133, %s134
      %p148 = scmp.eq.s32.totalorder %s42, 1
      %p149 = por %p147, %p148
      %p151 = scmp.ne.s32.totalorder %s134, %s150
      %p152 = scmp.eq.s32.totalorder %s42, 0
      %p153 = por %p151, %p152
      %s154 = ssub.s32 %s36, %s43
      %p155 = scmp.eq.s32.totalorder %s154, 0
      %s157 = sadd.s32 %s156, 1
      %s158 = scalar_select %p155, %s156, %s157
      %p161 = pneg %p155
      %p162 = scmp.eq.s32.totalorder %s36, 1
      %p163 = por %p161, %p162
      %p164 = scmp.ne.s32.totalorder %s156, %s159
      %p165 = scmp.eq.s32.totalorder %s36, 0
      %p166 = por %p164, %p165
      %p167 = scmp.ne.s32.totalorder %s156, %s159
      %p168 = scmp.eq.s32.totalorder %s41, 1
      %p169 = por %p167, %p168
      %p170 = scmp.ne.s32.totalorder %s159, %s160
      %p171 = scmp.eq.s32.totalorder %s41, 0
      %p172 = por %p170, %p171
      %p173 = scmp.ne.s32.totalorder %s159, %s160
      %p174 = scmp.eq.s32.totalorder %s42, 1
      %p175 = por %p173, %p174
      %p177 = scmp.ne.s32.totalorder %s160, %s176
      %p178 = scmp.eq.s32.totalorder %s42, 0
      %p179 = por %p177, %p178
      %s180 = ssub.s32 %s36, %s43
      %p181 = scmp.eq.s32.totalorder %s180, 0
      %s183 = sadd.s32 %s182, 1
      %s184 = scalar_select %p181, %s182, %s183
      %p187 = pneg %p181
      %p188 = scmp.eq.s32.totalorder %s36, 1
      %p189 = por %p187, %p188
      %p190 = scmp.ne.s32.totalorder %s182, %s185
      %p191 = scmp.eq.s32.totalorder %s36, 0
      %p192 = por %p190, %p191
      %p193 = scmp.ne.s32.totalorder %s182, %s185
      %p194 = scmp.eq.s32.totalorder %s41, 1
      %p195 = por %p193, %p194
      %p196 = scmp.ne.s32.totalorder %s185, %s186
      %p197 = scmp.eq.s32.totalorder %s41, 0
      %p198 = por %p196, %p197
      %p199 = scmp.ne.s32.totalorder %s185, %s186
      %p200 = scmp.eq.s32.totalorder %s42, 1
      %p201 = por %p199, %p200
      %p203 = scmp.ne.s32.totalorder %s186, %s202
      %p204 = scmp.eq.s32.totalorder %s42, 0
      %p205 = por %p203, %p204
      %s206 = ssub.s32 %s36, %s43
      %p207 = scmp.eq.s32.totalorder %s206, 0
      %s209 = sadd.s32 %s208, 1
      %s210 = scalar_select %p207, %s208, %s209
      %p213 = pneg %p207
      %p214 = scmp.eq.s32.totalorder %s36, 1
      %p215 = por %p213, %p214
      %p216 = scmp.ne.s32.totalorder %s208, %s211
      %p217 = scmp.eq.s32.totalorder %s36, 0
      %p218 = por %p216, %p217
      %p219 = scmp.ne.s32.totalorder %s208, %s211
      %p220 = scmp.eq.s32.totalorder %s41, 1
      %p221 = por %p219, %p220
      %p222 = scmp.ne.s32.totalorder %s211, %s212
      %p223 = scmp.eq.s32.totalorder %s41, 0
      %p224 = por %p222, %p223
      %p225 = scmp.ne.s32.totalorder %s211, %s212
      %p226 = scmp.eq.s32.totalorder %s42, 1
      %p227 = por %p225, %p226
      %p229 = scmp.ne.s32.totalorder %s212, %s228
      %p230 = scmp.eq.s32.totalorder %s42, 0
      %p231 = por %p229, %p230
      %s232 = ssub.s32 %s36, %s43
      %p233 = scmp.eq.s32.totalorder %s232, 0
      %s235 = sadd.s32 %s234, 1
      %s236 = scalar_select %p233, %s234, %s235
      %p239 = pneg %p233
      %p240 = scmp.eq.s32.totalorder %s36, 1
      %p241 = por %p239, %p240
      %p242 = scmp.ne.s32.totalorder %s234, %s237
      %p243 = scmp.eq.s32.totalorder %s36, 0
      %p244 = por %p242, %p243
      %p245 = scmp.ne.s32.totalorder %s234, %s237
      %p246 = scmp.eq.s32.totalorder %s41, 1
      %p247 = por %p245, %p246
      %p248 = scmp.ne.s32.totalorder %s237, %s238
      %p249 = scmp.eq.s32.totalorder %s41, 0
      %p250 = por %p248, %p249
      %p251 = scmp.ne.s32.totalorder %s237, %s238
      %p252 = scmp.eq.s32.totalorder %s42, 1
      %p253 = por %p251, %p252
      %p255 = scmp.ne.s32.totalorder %s238, %s254
      %p256 = scmp.eq.s32.totalorder %s42, 0
      %p257 = por %p255, %p256
      %s258 = ssub.s32 %s36, %s43
      %p259 = scmp.eq.s32.totalorder %s258, 0
      %s261 = sadd.s32 %s260, 1
      %s262 = scalar_select %p259, %s260, %s261
      %p265 = pneg %p259
      %p266 = scmp.eq.s32.totalorder %s36, 1
      %p267 = por %p265, %p266
      %p268 = scmp.ne.s32.totalorder %s260, %s263
      %p269 = scmp.eq.s32.totalorder %s36, 0
      %p270 = por %p268, %p269
      %p271 = scmp.ne.s32.totalorder %s260, %s263
      %p272 = scmp.eq.s32.totalorder %s41, 1
      %p273 = por %p271, %p272
      %p274 = scmp.ne.s32.totalorder %s263, %s264
      %p275 = scmp.eq.s32.totalorder %s41, 0
      %p276 = por %p274, %p275
      %p277 = scmp.ne.s32.totalorder %s263, %s264
      %p278 = scmp.eq.s32.totalorder %s42, 1
      %p279 = por %p277, %p278
      %p281 = scmp.ne.s32.totalorder %s264, %s280
      %p282 = scmp.eq.s32.totalorder %s42, 0
      %p283 = por %p281, %p282
      %s284 = ssub.s32 %s36, %s43
      %p285 = scmp.eq.s32.totalorder %s284, 0
      %s287 = sadd.s32 %s286, 1
      %s288 = scalar_select %p285, %s286, %s287
      %p291 = pneg %p285
      %p292 = scmp.eq.s32.totalorder %s36, 1
      %p293 = por %p291, %p292
      %p294 = scmp.ne.s32.totalorder %s286, %s289
      %p295 = scmp.eq.s32.totalorder %s36, 0
      %p296 = por %p294, %p295
      %p297 = scmp.ne.s32.totalorder %s286, %s289
      %p298 = scmp.eq.s32.totalorder %s41, 1
      %p299 = por %p297, %p298
      %p300 = scmp.ne.s32.totalorder %s289, %s290
      %p301 = scmp.eq.s32.totalorder %s41, 0
      %p302 = por %p300, %p301
      %p303 = scmp.ne.s32.totalorder %s289, %s290
      %p304 = scmp.eq.s32.totalorder %s42, 1
      %p305 = por %p303, %p304
      %p307 = scmp.ne.s32.totalorder %s290, %s306
      %p308 = scmp.eq.s32.totalorder %s42, 0
      %p309 = por %p307, %p308
      %s310 = ssub.s32 %s36, %s43
      %p311 = scmp.eq.s32.totalorder %s310, 0
      %s313 = sadd.s32 %s312, 1
      %s314 = scalar_select %p311, %s312, %s313
      %p317 = pneg %p311
      %p318 = scmp.eq.s32.totalorder %s36, 1
      %p319 = por %p317, %p318
      %p320 = scmp.ne.s32.totalorder %s312, %s315
      %p321 = scmp.eq.s32.totalorder %s36, 0
      %p322 = por %p320, %p321
      %p323 = scmp.ne.s32.totalorder %s312, %s315
      %p324 = scmp.eq.s32.totalorder %s41, 1
      %p325 = por %p323, %p324
      %p326 = scmp.ne.s32.totalorder %s315, %s316
      %p327 = scmp.eq.s32.totalorder %s41, 0
      %p328 = por %p326, %p327
      %p329 = scmp.ne.s32.totalorder %s315, %s316
      %p330 = scmp.eq.s32.totalorder %s42, 1
      %p331 = por %p329, %p330
      %p333 = scmp.ne.s32.totalorder %s316, %s332
      %p334 = scmp.eq.s32.totalorder %s42, 0
      %p335 = por %p333, %p334
      %s336 = ssub.s32 %s36, %s43
      %p337 = scmp.eq.s32.totalorder %s336, 0
      %s339 = sadd.s32 %s338, 1
      %s340 = scalar_select %p337, %s338, %s339
      %p343 = pneg %p337
      %p344 = scmp.eq.s32.totalorder %s36, 1
      %p345 = por %p343, %p344
      %p346 = scmp.ne.s32.totalorder %s338, %s341
      %p347 = scmp.eq.s32.totalorder %s36, 0
      %p348 = por %p346, %p347
      %p349 = scmp.ne.s32.totalorder %s338, %s341
      %p350 = scmp.eq.s32.totalorder %s41, 1
      %p351 = por %p349, %p350
      %p352 = scmp.ne.s32.totalorder %s341, %s342
      %p353 = scmp.eq.s32.totalorder %s41, 0
      %p354 = por %p352, %p353
      %p355 = scmp.ne.s32.totalorder %s341, %s342
      %p356 = scmp.eq.s32.totalorder %s42, 1
      %p357 = por %p355, %p356
      %p359 = scmp.ne.s32.totalorder %s342, %s358
      %p360 = scmp.eq.s32.totalorder %s42, 0
      %p361 = por %p359, %p360
      %s362 = ssub.s32 %s36, %s43
      %p363 = scmp.eq.s32.totalorder %s362, 0
      %s365 = sadd.s32 %s364, 1
      %s366 = scalar_select %p363, %s364, %s365
      %p369 = pneg %p363
      %p370 = scmp.eq.s32.totalorder %s36, 1
      %p371 = por %p369, %p370
      %p372 = scmp.ne.s32.totalorder %s364, %s367
      %p373 = scmp.eq.s32.totalorder %s36, 0
      %p374 = por %p372, %p373
      %p375 = scmp.ne.s32.totalorder %s364, %s367
      %p376 = scmp.eq.s32.totalorder %s41, 1
      %p377 = por %p375, %p376
      %p378 = scmp.ne.s32.totalorder %s367, %s368
      %p379 = scmp.eq.s32.totalorder %s41, 0
      %p380 = por %p378, %p379
      %p381 = scmp.ne.s32.totalorder %s367, %s368
      %p382 = scmp.eq.s32.totalorder %s42, 1
      %p383 = por %p381, %p382
      %p385 = scmp.ne.s32.totalorder %s368, %s384
      %p386 = scmp.eq.s32.totalorder %s42, 0
      %p387 = por %p385, %p386
      %s388 = ssub.s32 %s36, %s43
      %p389 = scmp.eq.s32.totalorder %s388, 0
      %s391 = sadd.s32 %s390, 1
      %s392 = scalar_select %p389, %s390, %s391
      %p395 = pneg %p389
      %p396 = scmp.eq.s32.totalorder %s36, 1
      %p397 = por %p395, %p396
      %p398 = scmp.ne.s32.totalorder %s390, %s393
      %p399 = scmp.eq.s32.totalorder %s36, 0
      %p400 = por %p398, %p399
      %p401 = scmp.ne.s32.totalorder %s390, %s393
      %p402 = scmp.eq.s32.totalorder %s41, 1
      %p403 = por %p401, %p402
      %p404 = scmp.ne.s32.totalorder %s393, %s394
      %p405 = scmp.eq.s32.totalorder %s41, 0
      %p406 = por %p404, %p405
      %p407 = scmp.ne.s32.totalorder %s393, %s394
      %p408 = scmp.eq.s32.totalorder %s42, 1
      %p409 = por %p407, %p408
      %p411 = scmp.ne.s32.totalorder %s394, %s410
      %p412 = scmp.eq.s32.totalorder %s42, 0
      %p413 = por %p411, %p412
      %s414 = ssub.s32 %s36, %s43
      %p415 = scmp.eq.s32.totalorder %s414, 0
      %s417 = sadd.s32 %s416, 1
      %s418 = scalar_select %p415, %s416, %s417
      %p421 = pneg %p415
      %p422 = scmp.eq.s32.totalorder %s36, 1
      %p423 = por %p421, %p422
      %p424 = scmp.ne.s32.totalorder %s416, %s419
      %p425 = scmp.eq.s32.totalorder %s36, 0
      %p426 = por %p424, %p425
      %p427 = scmp.ne.s32.totalorder %s416, %s419
      %p428 = scmp.eq.s32.totalorder %s41, 1
      %p429 = por %p427, %p428
      %p430 = scmp.ne.s32.totalorder %s419, %s420
      %p431 = scmp.eq.s32.totalorder %s41, 0
      %p432 = por %p430, %p431
      %p433 = scmp.ne.s32.totalorder %s419, %s420
      %p434 = scmp.eq.s32.totalorder %s42, 1
      %p435 = por %p433, %p434
      %p437 = scmp.ne.s32.totalorder %s420, %s436
      %p438 = scmp.eq.s32.totalorder %s42, 0
      %p439 = por %p437, %p438
      %s441 = sadd.s32 %s440, 1
      %p444 = scmp.eq.s32.totalorder %s36, 1
      %p445 = scmp.ne.s32.totalorder %s440, %s442
      %p446 = scmp.eq.s32.totalorder %s36, 0
      %p447 = por %p445, %p446
      %p448 = scmp.ne.s32.totalorder %s440, %s442
      %p449 = scmp.eq.s32.totalorder %s41, 1
      %p450 = por %p448, %p449
      %p451 = scmp.ne.s32.totalorder %s442, %s443
      %p452 = scmp.eq.s32.totalorder %s41, 0
      %p453 = por %p451, %p452
      %p454 = scmp.ne.s32.totalorder %s442, %s443
      %p455 = scmp.eq.s32.totalorder %s42, 1
      %p456 = por %p454, %p455
      %p458 = scmp.ne.s32.totalorder %s443, %s457
      %p459 = scmp.eq.s32.totalorder %s42, 0
      %p460 = por %p458, %p459
      %s462 = sadd.s32 %s461, 1
      %p465 = scmp.eq.s32.totalorder %s36, 1
      %p466 = scmp.ne.s32.totalorder %s461, %s463
      %p467 = scmp.eq.s32.totalorder %s36, 0
      %p468 = por %p466, %p467
      %p469 = scmp.ne.s32.totalorder %s461, %s463
      %p470 = scmp.eq.s32.totalorder %s41, 1
      %p471 = por %p469, %p470
      %p472 = scmp.ne.s32.totalorder %s463, %s464
      %p473 = scmp.eq.s32.totalorder %s41, 0
      %p474 = por %p472, %p473
      %p475 = scmp.ne.s32.totalorder %s463, %s464
      %p476 = scmp.eq.s32.totalorder %s42, 1
      %p477 = por %p475, %p476
      %p479 = scmp.ne.s32.totalorder %s464, %s478
      %p480 = scmp.eq.s32.totalorder %s42, 0
      %p481 = por %p479, %p480
      %s483 = sadd.s32 %s482, 1
      %p486 = scmp.eq.s32.totalorder %s36, 1
      %p487 = scmp.ne.s32.totalorder %s482, %s484
      %p488 = scmp.eq.s32.totalorder %s36, 0
      %p489 = por %p487, %p488
      %p490 = scmp.ne.s32.totalorder %s482, %s484
      %p491 = scmp.eq.s32.totalorder %s41, 1
      %p492 = por %p490, %p491
      %p493 = scmp.ne.s32.totalorder %s484, %s485
      %p494 = scmp.eq.s32.totalorder %s41, 0
      %p495 = por %p493, %p494
      %p496 = scmp.ne.s32.totalorder %s484, %s485
      %p497 = scmp.eq.s32.totalorder %s42, 1
      %p498 = por %p496, %p497
      %p500 = scmp.ne.s32.totalorder %s485, %s499
      %p501 = scmp.eq.s32.totalorder %s42, 0
      %p502 = por %p500, %p501
      %p503 = scmp.le.s32.totalorder 1, %s36
      %p504 = scmp.lt.s32.totalorder %s36, 3
      %p505 = pnand %p503, %p504
      %p506 = pneg %p505
      // Predicated region
      $region9: #{tpu_custom_call.1} parent=5 // pred_check
        _
      $region10: #{tpu_custom_call.1} parent=5 // pred_check_branch
        %508 = sbr.rel (%p505) target = $region12
      $region11: #{tpu_custom_call.1} parent=5 // pred_region
        %s509 = ssub.s32 %s36, 1
        // Predicated region
        $region13: #{tpu_custom_call.1} parent=11 // pred_check
          %p510 = pneg %p57
        $region14: #{tpu_custom_call.1} parent=11 // pred_check_branch
          %512 = sbr.rel (%p510) target = $region16
        $region15: #{tpu_custom_call.1} parent=11 // pred_region
          %s514 = ssub.s32 256, 256
          %515 = vsyncadd [#allocation4], %s514
          %s516 = sshll.u32 [#allocation3], 4
          %s517 = int_to_ptr.vmem [resolvable:$true] %s516
          %522 = dma.hbm_to_vmem [thread:$0]  %s0, 256, %s517, [#allocation4], 128, 128, 8
        $region16: #{tpu_custom_call.1} parent=11 // pred_fallthru
          _
        // Predicated region
        $region17: #{tpu_custom_call.1} parent=11 // pred_check
          %p523 = pneg %p78
        $region18: #{tpu_custom_call.1} parent=11 // pred_check_branch
          %525 = sbr.rel (%p523) target = $region20
        $region19: #{tpu_custom_call.1} parent=11 // pred_region
          %s527 = ssub.s32 128, 128
          %528 = vsyncadd [#allocation7], %s527
          %s529 = sshll.u32 [#allocation6], 4
          %s530 = int_to_ptr.vmem [resolvable:$true] %s529
          %535 = dma.hbm_to_vmem [thread:$0]  %s1, 128, %s530, [#allocation7], 16, 16, 1
        $region20: #{tpu_custom_call.1} parent=11 // pred_fallthru
          _
        // Predicated region
        $region21: #{tpu_custom_call.1} parent=11 // pred_check
          %p536 = pneg %p99
        $region22: #{tpu_custom_call.1} parent=11 // pred_check_branch
          %538 = sbr.rel (%p536) target = $region24
        $region23: #{tpu_custom_call.1} parent=11 // pred_region
          _
        $region24: #{tpu_custom_call.1} parent=11 // pred_fallthru
          _
        // Predicated region
        $region25: #{tpu_custom_call.1} parent=11 // pred_check
          %p539 = pneg %p120
        $region26: #{tpu_custom_call.1} parent=11 // pred_check_branch
          %541 = sbr.rel (%p539) target = $region28
        $region27: #{tpu_custom_call.1} parent=11 // pred_region
          %s543 = ssub.s32 16, 16
          %544 = vsyncadd [#allocation7], %s543
          %s546 = sshll.u32 [#allocation8], 4
          %s547 = int_to_ptr.vmem [resolvable:$true] %s546
          %549 = dma.hbm_to_vmem [thread:$0]  %s3, 16, %s547, [#allocation7]
        $region28: #{tpu_custom_call.1} parent=11 // pred_fallthru
          _
        // Predicated region
        $region29: #{tpu_custom_call.1} parent=11 // pred_check
          %p550 = pneg %p453
        $region30: #{tpu_custom_call.1} parent=11 // pred_check_branch
          %552 = sbr.rel (%p550) target = $region32
        $region31: #{tpu_custom_call.1} parent=11 // pred_region
          _
        $region32: #{tpu_custom_call.1} parent=11 // pred_fallthru
          _
        // Predicated region
        $region33: #{tpu_custom_call.1} parent=11 // pred_check
          %p553 = pneg %p474
        $region34: #{tpu_custom_call.1} parent=11 // pred_check_branch
          %555 = sbr.rel (%p553) target = $region36
        $region35: #{tpu_custom_call.1} parent=11 // pred_region
          _
        $region36: #{tpu_custom_call.1} parent=11 // pred_fallthru
          _
      $region12: #{tpu_custom_call.1} parent=5 // pred_fallthru
        _
      %p556 = scmp.lt.s32.totalorder %s36, 2
      // Predicated region
      $region37: #{tpu_custom_call.1} parent=5 // pred_check
        %p557 = pneg %p556
      $region38: #{tpu_custom_call.1} parent=5 // pred_check_branch
        %559 = sbr.rel (%p557) target = $region40
      $region39: #{tpu_custom_call.1} parent=5 // pred_region
        // Predicated region
        $region41: #{tpu_custom_call.1} parent=39 // pred_check
          %p560 = pneg %p140
        $region42: #{tpu_custom_call.1} parent=39 // pred_check_branch
          %562 = sbr.rel (%p560) target = $region44
        $region43: #{tpu_custom_call.1} parent=39 // pred_region
          %p563 = scmp.lt.s32.totalorder %s36, 1
          %s564 = scalar_select %p563, %s36, 1
          %s565 = smul.addr %s564, 4
          %s566 = smul.addr %s565, 4
          %s567 = scalar_lea.vmem %s4, %s566
        $region44: #{tpu_custom_call.1} parent=39 // pred_fallthru
          _
        // Predicated region
        $region45: #{tpu_custom_call.1} parent=39 // pred_check
          %p568 = pneg %p166
        $region46: #{tpu_custom_call.1} parent=39 // pred_check_branch
          %570 = sbr.rel (%p568) target = $region48
        $region47: #{tpu_custom_call.1} parent=39 // pred_region
          %s571 = sand.u32 %s36, 1
          %s572 = scalar_lea.sflag [#allocation10], %s571
          %s573 = sand.u32 %s156, 1
          %s574 = scalar_lea.vmem [#allocation9], %s573
          %s576 = ssub.s32 16, 16
          %577 = vsyncadd %s572, %s576
          %s578 = smul.addr %s36, 16
          %s579 = scalar_lea.hbm %s5, %s578
          %s581 = sshll.u32 %s574, 4
          %s582 = int_to_ptr.vmem [resolvable:$true] %s581
          %584 = dma.hbm_to_vmem [thread:$0]  %s579, 16, %s582, %s572
        $region48: #{tpu_custom_call.1} parent=39 // pred_fallthru
          _
        // Predicated region
        $region49: #{tpu_custom_call.1} parent=39 // pred_check
          %p585 = pneg %p192
        $region50: #{tpu_custom_call.1} parent=39 // pred_check_branch
          %587 = sbr.rel (%p585) target = $region52
        $region51: #{tpu_custom_call.1} parent=39 // pred_region
          %p588 = scmp.lt.s32.totalorder %s36, 1
          %s589 = scalar_select %p588, %s36, 1
          %s590 = smul.addr %s589, 4
          %s591 = smul.addr %s590, 4
          %s592 = scalar_lea.vmem %s6, %s591
        $region52: #{tpu_custom_call.1} parent=39 // pred_fallthru
          _
        // Predicated region
        $region53: #{tpu_custom_call.1} parent=39 // pred_check
          %p593 = pneg %p218
        $region54: #{tpu_custom_call.1} parent=39 // pred_check_branch
          %595 = sbr.rel (%p593) target = $region56
        $region55: #{tpu_custom_call.1} parent=39 // pred_region
          %s596 = sand.u32 %s36, 1
          %s597 = scalar_lea.sflag [#allocation10], %s596
          %s598 = sand.u32 %s208, 1
          %s599 = scalar_lea.vmem [#allocation11], %s598
          %s601 = ssub.s32 16, 16
          %602 = vsyncadd %s597, %s601
          %s603 = smul.addr %s36, 16
          %s604 = scalar_lea.hbm %s7, %s603
          %s606 = sshll.u32 %s599, 4
          %s607 = int_to_ptr.vmem [resolvable:$true] %s606
          %609 = dma.hbm_to_vmem [thread:$0]  %s604, 16, %s607, %s597
        $region56: #{tpu_custom_call.1} parent=39 // pred_fallthru
          _
        // Predicated region
        $region57: #{tpu_custom_call.1} parent=39 // pred_check
          %p610 = pneg %p244
        $region58: #{tpu_custom_call.1} parent=39 // pred_check_branch
          %612 = sbr.rel (%p610) target = $region60
        $region59: #{tpu_custom_call.1} parent=39 // pred_region
          %s613 = sand.u32 %s36, 1
          %s614 = scalar_lea.sflag [#allocation13], %s613
          %s615 = sand.u32 %s234, 1
          %s616 = scalar_lea.vmem [#allocation12], %s615
          %s618 = ssub.s32 16, 16
          %619 = vsyncadd %s614, %s618
          %s620 = smul.addr %s36, 16
          %s621 = scalar_lea.hbm %s8, %s620
          %s623 = sshll.u32 %s616, 4
          %s624 = int_to_ptr.vmem [resolvable:$true] %s623
          %626 = dma.hbm_to_vmem [thread:$0]  %s621, 16, %s624, %s614
        $region60: #{tpu_custom_call.1} parent=39 // pred_fallthru
          _
        // Predicated region
        $region61: #{tpu_custom_call.1} parent=39 // pred_check
          %p627 = pneg %p270
        $region62: #{tpu_custom_call.1} parent=39 // pred_check_branch
          %629 = sbr.rel (%p627) target = $region64
        $region63: #{tpu_custom_call.1} parent=39 // pred_region
          %s630 = sand.u32 %s36, 1
          %s631 = scalar_lea.sflag [#allocation13], %s630
          %s632 = sand.u32 %s260, 1
          %s633 = scalar_lea.vmem [#allocation14], %s632
          %s635 = ssub.s32 16, 16
          %636 = vsyncadd %s631, %s635
          %s637 = smul.addr %s36, 16
          %s638 = scalar_lea.hbm %s9, %s637
          %s640 = sshll.u32 %s633, 4
          %s641 = int_to_ptr.vmem [resolvable:$true] %s640
          %643 = dma.hbm_to_vmem [thread:$0]  %s638, 16, %s641, %s631
        $region64: #{tpu_custom_call.1} parent=39 // pred_fallthru
          _
        // Predicated region
        $region65: #{tpu_custom_call.1} parent=39 // pred_check
          %p644 = pneg %p296
        $region66: #{tpu_custom_call.1} parent=39 // pred_check_branch
          %646 = sbr.rel (%p644) target = $region68
        $region67: #{tpu_custom_call.1} parent=39 // pred_region
          %p647 = scmp.lt.s32.totalorder %s36, 1
          %s648 = scalar_select %p647, %s36, 1
          %s649 = smul.addr %s648, 4
          %s650 = smul.addr %s649, 4
          %s651 = scalar_lea.vmem %s10, %s650
        $region68: #{tpu_custom_call.1} parent=39 // pred_fallthru
          _
        // Predicated region
        $region69: #{tpu_custom_call.1} parent=39 // pred_check
          %p652 = pneg %p322
        $region70: #{tpu_custom_call.1} parent=39 // pred_check_branch
          %654 = sbr.rel (%p652) target = $region72
        $region71: #{tpu_custom_call.1} parent=39 // pred_region
          %s655 = sand.u32 %s36, 1
          %s656 = scalar_lea.sflag [#allocation16], %s655
          %s657 = sand.u32 %s312, 1
          %s658 = scalar_lea.vmem [#allocation15], %s657
          %s660 = ssub.s32 16, 16
          %661 = vsyncadd %s656, %s660
          %s662 = smul.addr %s36, 16
          %s663 = scalar_lea.hbm %s11, %s662
          %s665 = sshll.u32 %s658, 4
          %s666 = int_to_ptr.vmem [resolvable:$true] %s665
          %668 = dma.hbm_to_vmem [thread:$0]  %s663, 16, %s666, %s656
        $region72: #{tpu_custom_call.1} parent=39 // pred_fallthru
          _
        // Predicated region
        $region73: #{tpu_custom_call.1} parent=39 // pred_check
          %p669 = pneg %p348
        $region74: #{tpu_custom_call.1} parent=39 // pred_check_branch
          %671 = sbr.rel (%p669) target = $region76
        $region75: #{tpu_custom_call.1} parent=39 // pred_region
          %p672 = scmp.lt.s32.totalorder %s36, 1
          %s673 = scalar_select %p672, %s36, 1
          %s674 = smul.addr %s673, 8
          %s675 = smul.addr %s674, 4
          %s676 = scalar_lea.vmem %s12, %s675
        $region76: #{tpu_custom_call.1} parent=39 // pred_fallthru
          _
        // Predicated region
        $region77: #{tpu_custom_call.1} parent=39 // pred_check
          %p677 = pneg %p374
        $region78: #{tpu_custom_call.1} parent=39 // pred_check_branch
          %679 = sbr.rel (%p677) target = $region80
        $region79: #{tpu_custom_call.1} parent=39 // pred_region
          %s680 = sand.u32 %s36, 1
          %s681 = scalar_lea.sflag [#allocation16], %s680
          %s682 = sand.u32 %s364, 1
          %s683 = scalar_lea.vmem [#allocation17], %s682
          %s685 = ssub.s32 16, 16
          %686 = vsyncadd %s681, %s685
          %s687 = smul.addr %s36, 16
          %s688 = scalar_lea.hbm %s13, %s687
          %s690 = sshll.u32 %s683, 4
          %s691 = int_to_ptr.vmem [resolvable:$true] %s690
          %693 = dma.hbm_to_vmem [thread:$0]  %s688, 16, %s691, %s681
        $region80: #{tpu_custom_call.1} parent=39 // pred_fallthru
          _
        // Predicated region
        $region81: #{tpu_custom_call.1} parent=39 // pred_check
          %p694 = pneg %p400
        $region82: #{tpu_custom_call.1} parent=39 // pred_check_branch
          %696 = sbr.rel (%p694) target = $region84
        $region83: #{tpu_custom_call.1} parent=39 // pred_region
          %p697 = scmp.lt.s32.totalorder %s36, 1
          %s698 = scalar_select %p697, %s36, 1
          %s699 = scalar_lea.vmem %s14, %s698
        $region84: #{tpu_custom_call.1} parent=39 // pred_fallthru
          _
        // Predicated region
        $region85: #{tpu_custom_call.1} parent=39 // pred_check
          %p700 = pneg %p426
        $region86: #{tpu_custom_call.1} parent=39 // pred_check_branch
          %702 = sbr.rel (%p700) target = $region88
        $region87: #{tpu_custom_call.1} parent=39 // pred_region
          %p703 = scmp.lt.s32.totalorder %s36, 1
          %s704 = scalar_select %p703, %s36, 1
          %s705 = scalar_lea.vmem %s15, %s704
        $region88: #{tpu_custom_call.1} parent=39 // pred_fallthru
          _
      $region40: #{tpu_custom_call.1} parent=5 // pred_fallthru
        _
      %p706 = scmp.le.s32.totalorder 1, %s36
      %p707 = scmp.lt.s32.totalorder %s36, 3
      %p708 = pnand %p706, %p707
      %p709 = pneg %p708
      // Predicated region
      $region89: #{tpu_custom_call.1} parent=5 // pred_check
        _
      $region90: #{tpu_custom_call.1} parent=5 // pred_check_branch
        %711 = sbr.rel (%p708) target = $region92
      $region91: #{tpu_custom_call.1} parent=5 // pred_region
        %s712 = ssub.s32 %s36, 1
        // Predicated region
        $region93: #{tpu_custom_call.1} parent=91 // pred_check
          %p713 = pneg %p57
        $region94: #{tpu_custom_call.1} parent=91 // pred_check_branch
          %715 = sbr.rel (%p713) target = $region96
        $region95: #{tpu_custom_call.1} parent=91 // pred_region
          %716 = dma.done [#allocation4], 256
        $region96: #{tpu_custom_call.1} parent=91 // pred_fallthru
          _
        // Predicated region
        $region97: #{tpu_custom_call.1} parent=91 // pred_check
          %p717 = pneg %p78
        $region98: #{tpu_custom_call.1} parent=91 // pred_check_branch
          %719 = sbr.rel (%p717) target = $region100
        $region99: #{tpu_custom_call.1} parent=91 // pred_region
          %720 = dma.done [#allocation7], 128
        $region100: #{tpu_custom_call.1} parent=91 // pred_fallthru
          _
        // Predicated region
        $region101: #{tpu_custom_call.1} parent=91 // pred_check
          %p721 = pneg %p120
        $region102: #{tpu_custom_call.1} parent=91 // pred_check_branch
          %723 = sbr.rel (%p721) target = $region104
        $region103: #{tpu_custom_call.1} parent=91 // pred_region
          %724 = dma.done [#allocation7], 16
        $region104: #{tpu_custom_call.1} parent=91 // pred_fallthru
          _
        %s725 = sand.u32 %s41, 1
        %s726 = scalar_lea.sflag [#allocation10], %s725
        %s727 = sand.u32 %s159, 1
        %s728 = scalar_lea.vmem [#allocation9], %s727
        // Predicated region
        $region105: #{tpu_custom_call.1} parent=91 // pred_check
          %p729 = pneg %p172
        $region106: #{tpu_custom_call.1} parent=91 // pred_check_branch
          %731 = sbr.rel (%p729) target = $region108
        $region107: #{tpu_custom_call.1} parent=91 // pred_region
          %732 = dma.done %s726, 16
        $region108: #{tpu_custom_call.1} parent=91 // pred_fallthru
          _
        %s733 = sand.u32 %s41, 1
        %s734 = scalar_lea.sflag [#allocation10], %s733
        %s735 = sand.u32 %s211, 1
        %s736 = scalar_lea.vmem [#allocation11], %s735
        // Predicated region
        $region109: #{tpu_custom_call.1} parent=91 // pred_check
          %p737 = pneg %p224
        $region110: #{tpu_custom_call.1} parent=91 // pred_check_branch
          %739 = sbr.rel (%p737) target = $region112
        $region111: #{tpu_custom_call.1} parent=91 // pred_region
          %740 = dma.done %s734, 16
        $region112: #{tpu_custom_call.1} parent=91 // pred_fallthru
          _
        %s741 = sand.u32 %s41, 1
        %s742 = scalar_lea.sflag [#allocation13], %s741
        %s743 = sand.u32 %s237, 1
        %s744 = scalar_lea.vmem [#allocation12], %s743
        // Predicated region
        $region113: #{tpu_custom_call.1} parent=91 // pred_check
          %p745 = pneg %p250
        $region114: #{tpu_custom_call.1} parent=91 // pred_check_branch
          %747 = sbr.rel (%p745) target = $region116
        $region115: #{tpu_custom_call.1} parent=91 // pred_region
          %748 = dma.done %s742, 16
        $region116: #{tpu_custom_call.1} parent=91 // pred_fallthru
          _
        %s749 = sand.u32 %s41, 1
        %s750 = scalar_lea.sflag [#allocation13], %s749
        %s751 = sand.u32 %s263, 1
        %s752 = scalar_lea.vmem [#allocation14], %s751
        // Predicated region
        $region117: #{tpu_custom_call.1} parent=91 // pred_check
          %p753 = pneg %p276
        $region118: #{tpu_custom_call.1} parent=91 // pred_check_branch
          %755 = sbr.rel (%p753) target = $region120
        $region119: #{tpu_custom_call.1} parent=91 // pred_region
          %756 = dma.done %s750, 16
        $region120: #{tpu_custom_call.1} parent=91 // pred_fallthru
          _
        %s757 = sand.u32 %s41, 1
        %s758 = scalar_lea.sflag [#allocation16], %s757
        %s759 = sand.u32 %s315, 1
        %s760 = scalar_lea.vmem [#allocation15], %s759
        // Predicated region
        $region121: #{tpu_custom_call.1} parent=91 // pred_check
          %p761 = pneg %p328
        $region122: #{tpu_custom_call.1} parent=91 // pred_check_branch
          %763 = sbr.rel (%p761) target = $region124
        $region123: #{tpu_custom_call.1} parent=91 // pred_region
          %764 = dma.done %s758, 16
        $region124: #{tpu_custom_call.1} parent=91 // pred_fallthru
          _
        %s765 = sand.u32 %s41, 1
        %s766 = scalar_lea.sflag [#allocation16], %s765
        %s767 = sand.u32 %s367, 1
        %s768 = scalar_lea.vmem [#allocation17], %s767
        // Predicated region
        $region125: #{tpu_custom_call.1} parent=91 // pred_check
          %p769 = pneg %p380
        $region126: #{tpu_custom_call.1} parent=91 // pred_check_branch
          %771 = sbr.rel (%p769) target = $region128
        $region127: #{tpu_custom_call.1} parent=91 // pred_region
          %772 = dma.done %s766, 16
        $region128: #{tpu_custom_call.1} parent=91 // pred_fallthru
          _
        %p773 = pneg %p57
        %p774 = pneg %p54
        %p775 = pneg %p78
        %p776 = pneg %p75
        %p777 = pneg %p99
        %p778 = pneg %p96
        %p779 = pneg %p120
        %p780 = pneg %p117
        %p781 = scmp.lt.s32.totalorder %s41, 1
        %s782 = scalar_select %p781, %s41, 1
        %s783 = smul.addr %s782, 4
        %s784 = smul.addr %s783, 4
        %s785 = scalar_lea.vmem %s4, %s784
        %p786 = pneg %p146
        %p787 = pneg %p143
        %s788 = sand.u32 %s41, 1
        %s789 = scalar_lea.sflag [#allocation10], %s788
        %s790 = sand.u32 %s159, 1
        %s791 = scalar_lea.vmem [#allocation9], %s790
        %p792 = pneg %p172
        %p793 = pneg %p169
        %p794 = scmp.lt.s32.totalorder %s41, 1
        %s795 = scalar_select %p794, %s41, 1
        %s796 = smul.addr %s795, 4
        %s797 = smul.addr %s796, 4
        %s798 = scalar_lea.vmem %s6, %s797
        %p799 = pneg %p198
        %p800 = pneg %p195
        %s801 = sand.u32 %s41, 1
        %s802 = scalar_lea.sflag [#allocation10], %s801
        %s803 = sand.u32 %s211, 1
        %s804 = scalar_lea.vmem [#allocation11], %s803
        %p805 = pneg %p224
        %p806 = pneg %p221
        %s807 = sand.u32 %s41, 1
        %s808 = scalar_lea.sflag [#allocation13], %s807
        %s809 = sand.u32 %s237, 1
        %s810 = scalar_lea.vmem [#allocation12], %s809
        %p811 = pneg %p250
        %p812 = pneg %p247
        %s813 = sand.u32 %s41, 1
        %s814 = scalar_lea.sflag [#allocation13], %s813
        %s815 = sand.u32 %s263, 1
        %s816 = scalar_lea.vmem [#allocation14], %s815
        %p817 = pneg %p276
        %p818 = pneg %p273
        %p819 = scmp.lt.s32.totalorder %s41, 1
        %s820 = scalar_select %p819, %s41, 1
        %s821 = smul.addr %s820, 4
        %s822 = smul.addr %s821, 4
        %s823 = scalar_lea.vmem %s10, %s822
        %p824 = pneg %p302
        %p825 = pneg %p299
        %s826 = sand.u32 %s41, 1
        %s827 = scalar_lea.sflag [#allocation16], %s826
        %s828 = sand.u32 %s315, 1
        %s829 = scalar_lea.vmem [#allocation15], %s828
        %p830 = pneg %p328
        %p831 = pneg %p325
        %p832 = scmp.lt.s32.totalorder %s41, 1
        %s833 = scalar_select %p832, %s41, 1
        %s834 = smul.addr %s833, 8
        %s835 = smul.addr %s834, 4
        %s836 = scalar_lea.vmem %s12, %s835
        %p837 = pneg %p354
        %p838 = pneg %p351
        %s839 = sand.u32 %s41, 1
        %s840 = scalar_lea.sflag [#allocation16], %s839
        %s841 = sand.u32 %s367, 1
        %s842 = scalar_lea.vmem [#allocation17], %s841
        %p843 = pneg %p380
        %p844 = pneg %p377
        %p845 = scmp.lt.s32.totalorder %s41, 1
        %s846 = scalar_select %p845, %s41, 1
        %s847 = scalar_lea.vmem %s14, %s846
        %p848 = pneg %p406
        %p849 = pneg %p403
        %p850 = scmp.lt.s32.totalorder %s41, 1
        %s851 = scalar_select %p850, %s41, 1
        %s852 = scalar_lea.vmem %s15, %s851
        %p853 = pneg %p432
        %p854 = pneg %p429
        %p855 = pneg %p453
        %p856 = pneg %p450
        %p857 = pneg %p474
        %p858 = pneg %p471
        %p859 = pneg %p495
        %p860 = pneg %p492
        %p861 = scmp.lt.s32.totalorder %s41, 1
        %s862 = scalar_select %p861, %s41, 1
        %s863 = smul.addr %s862, 4
        %s864 = smul.addr %s863, 4
        %s865 = scalar_lea.vmem %s4, %s864
        %p866 = scmp.lt.s32.totalorder %s41, 1
        %s867 = scalar_select %p866, %s41, 1
        %s868 = smul.addr %s867, 4
        %s869 = smul.addr %s868, 4
        %s870 = scalar_lea.vmem %s6, %s869
        %p871 = scmp.lt.s32.totalorder %s41, 1
        %s872 = scalar_select %p871, %s41, 1
        %s873 = smul.addr %s872, 4
        %s874 = smul.addr %s873, 4
        %s875 = scalar_lea.vmem %s10, %s874
        %p876 = scmp.lt.s32.totalorder %s41, 1
        %s877 = scalar_select %p876, %s41, 1
        %s878 = smul.addr %s877, 8
        %s879 = smul.addr %s878, 4
        %s880 = scalar_lea.vmem %s12, %s879
        %p881 = scmp.lt.s32.totalorder %s41, 1
        %s882 = scalar_select %p881, %s41, 1
        %s883 = scalar_lea.vmem %s14, %s882
        %p884 = scmp.lt.s32.totalorder %s41, 1
        %s885 = scalar_select %p884, %s41, 1
        %s886 = scalar_lea.vmem %s15, %s885
        %p888 = scmp.eq.s32.totalorder %s41, 0
        // Predicated region
        $region129: #{tpu_custom_call.1} parent=91 // pred_check
          %p889 = pneg %p888
        $region130: #{tpu_custom_call.1} parent=91 // pred_check_branch
          %891 = sbr.rel (%p889) target = $region132
        $region131: #{tpu_custom_call.1} parent=91 // pred_region
          %v892 = vld [vmem:[#allocation3] sm:$0xff]
          %v893 = vld [vmem:[#allocation3 + $0x8] sm:$0xff]
          %v894 = vld [vmem:[%s2] sm:$0x1]
          %v895 = vld [vmem:[#allocation8] sm:$0x1]
          %vm896 = vcmask 261120
          %v897 = vsel %vm896, %v892, 0.0
          %898 = vadd.xlane.f32.xlu0 %v897
          %v899 = vpop.xlane.xlu0 %898
          %v900 = vsel %vm896, %v893, 0.0
          %901 = vadd.xlane.f32.xlu0 %v900
          %v902 = vpop.xlane.xlu0 %901
          %v903 = vrcp.pop 32.0
          %v904 = vmul.f32 %v899, %v903
          %v905 = vmul.f32 %v902, %v903
          %v906 = vsub.f32 %v892, %v904
          %v907 = vsub.f32 %v893, %v905
          %v908 = vmul.f32 %v906, %v906
          %v909 = vmul.f32 %v907, %v907
          %v910 = vsel %vm896, %v908, 0.0
          %911 = vadd.xlane.f32.xlu0 %v910
          %v912 = vpop.xlane.xlu0 %911
          %v913 = vsel %vm896, %v909, 0.0
          %914 = vadd.xlane.f32.xlu0 %v913
          %v915 = vpop.xlane.xlu0 %914
          %v916 = vmul.f32 %v912, %v903
          %v917 = vmul.f32 %v915, %v903
          %v918 = vadd.f32 %v916, 1e-12
          %v919 = vadd.f32 %v917, 1e-12
          %v920 = vrsqrt.pop %v918
          %v921 = vrsqrt.pop %v919
          %v922 = vmul.f32 %v906, %v920
          %v923 = vmul.f32 %v907, %v921
          %v925 = vlaneseq
          %v926 = vshrl.u32 %v925, 7
          %v927 = vsub.s32 0, %v926
          %v928 = vrot.slane %v894, %v927
          %v930 = vmul.f32 %v922, %v928
          %v931 = vmul.f32 %v923, %v928
          %v933 = vlaneseq
          %v934 = vshrl.u32 %v933, 7
          %v935 = vsub.s32 0, %v934
          %v936 = vrot.slane %v895, %v935
          %v938 = vadd.f32 %v930, %v936
          %v939 = vadd.f32 %v931, %v936
          %940 = vst.msk [vmem:[#allocation2] sm:$0xff] %vm896, %v938
          %941 = vst.msk [vmem:[#allocation2 + $0x8] sm:$0xff] %vm896, %v939
        $region132: #{tpu_custom_call.1} parent=91 // pred_fallthru
          _
        %v942 = vld [vmem:[#allocation2] sm:$0xff]
        %v943 = vld [vmem:[#allocation2 + $0x8] sm:$0xff]
        %v944 = vpack.c.bf16 %v943, %v942
        %v945 = vld [vmem:[%s865] sm:$0xf]
        %v946 = vld [vmem:[%s865 + $0x4] sm:$0xf]
        %v947 = vld [vmem:[%s865 + $0x8] sm:$0xf]
        %v948 = vld [vmem:[%s865 + $0xc] sm:$0xf]
        %v949 = vld [vmem:[%s728] sm:$0x1]
        %v951 = vlaneseq
        %v952 = vshrl.u32 %v951, 7
        %v953 = vsub.s32 0, %v952
        %v954 = vrot.slane %v949, %v953
        %v960 = vunpack.c.l.b16 %v945
        %v961 = vunpack.c.l.b16 %v946
        %v962 = vunpack.c.l.b16 %v947
        %v963 = vunpack.c.l.b16 %v948
        %v964 = vpack.c.b16 %v961, %v960
        %v965 = vpack.c.b16 %v963, %v962
        %vm968 = vcmask 261120
        %v970 = vsel %vm968, %v944, 0
        %972 = vmatprep.subr.bf16.mxu0 0
        %973 = vmatpush1.bf16.msra.mxu0 %v964
        %974 = vmatprep.subr.bf16.mxu0 0
        %975 = vmatpush1.bf16.msra.mxu0 %v965
        %976 = vmatprep.subr.bf16.mxu0 0
        %977 = vmatpush1.bf16.msra.mxu0 0
        %978 = vmatprep.subr.bf16.mxu0 0
        %979 = vmatpush1.bf16.msra.mxu0 0
        %980 = vmatprep.subr.bf16.mxu0 0
        %981 = vmatpush1.bf16.msra.mxu0 0
        %982 = vmatprep.subr.bf16.mxu0 0
        %983 = vmatpush1.bf16.msra.mxu0 0
        %984 = vmatprep.subr.bf16.mxu0 0
        %985 = vmatpush1.bf16.msra.mxu0 0
        %986 = vmatprep.subr.bf16.mxu0 0
        %987 = vmatpush1.bf16.msra.mxu0 0
        %988 = vmatprep.subr.bf16.mxu0 0
        %989 = vmatpush1.bf16.msra.mxu0 0
        %990 = vmatprep.subr.bf16.mxu0 0
        %991 = vmatpush1.bf16.msra.mxu0 0
        %992 = vmatprep.subr.bf16.mxu0 0
        %993 = vmatpush1.bf16.msra.mxu0 0
        %994 = vmatprep.subr.bf16.mxu0 0
        %995 = vmatpush1.bf16.msra.mxu0 0
        %996 = vmatprep.subr.bf16.mxu0 0
        %997 = vmatpush1.bf16.msra.mxu0 0
        %998 = vmatprep.subr.bf16.mxu0 0
        %999 = vmatpush1.bf16.msra.mxu0 0
        %1000 = vmatprep.subr.bf16.mxu0 0
        %1001 = vmatpush1.bf16.msra.mxu0 0
        %1002 = vmatprep.subr.bf16.mxu0 0
        %1003 = vmatpush1.bf16.msra.mxu0 0
        %1004 = vmatprep.mubr.bf16.mxu0 0
        %1005 = vmatmul.mubr.bf16.gmra.mrb[0].mxu0 %v970
        %v1006 = vpop.f32.mrb[0].mxu0
        %v1007 = vadd.f32 %v954, %v1006
        %v1008 = vpop.f32.mrb[0].mxu0
        %v1009 = vpop.f32.mrb[0].mxu0
        %v1010 = vadd.f32 %v954, %v1009
        %v1011 = vpop.f32.mrb[0].mxu0
        %1012 = vdwg.mxu0
        %1015 = vrot.lane.b32.xlu0 %v1007, 120
        %v1016 = vpop.permute.xlu0 %1015
        %1017 = vrot.lane.b32.xlu0 %v1010, 120
        %v1018 = vpop.permute.xlu0 %1017
        %1021 = vrot.lane.b32.xlu0 %v1007, 112
        %v1022 = vpop.permute.xlu0 %1021
        %1023 = vrot.lane.b32.xlu0 %v1010, 112
        %v1024 = vpop.permute.xlu0 %1023
        %1027 = vrot.lane.b32.xlu0 %v1007, 104
        %v1028 = vpop.permute.xlu0 %1027
        %1029 = vrot.lane.b32.xlu0 %v1010, 104
        %v1030 = vpop.permute.xlu0 %1029
        %v1033 = vcombine.low %v1007, %v1022
        %v1034 = vcombine.high %v1007, %v1022
        %v1036 = vunpack.c.l.s4 1983009808
        %v1037 = vunpack.c.0.s8 %v1036
        %v1038 = vlaneseq
        %v1039 = vshrl.u32 %v1038, 7
        %v1040 = vsub.s32 %v1037, %v1039
        %v1041 = vrot.slane %v1033, %v1040
        %v1043 = vunpack.c.l.s4 1983009808
        %v1044 = vunpack.c.0.s8 %v1043
        %v1045 = vlaneseq
        %v1046 = vshrl.u32 %v1045, 7
        %v1047 = vsub.s32 %v1044, %v1046
        %v1048 = vrot.slane %v1034, %v1047
        %v1049 = vcombine.low %v1016, %v1028
        %v1050 = vcombine.high %v1016, %v1028
        %v1052 = vunpack.c.l.s4 1983009808
        %v1053 = vunpack.c.0.s8 %v1052
        %v1054 = vlaneseq
        %v1055 = vshrl.u32 %v1054, 7
        %v1056 = vsub.s32 %v1053, %v1055
        %v1057 = vrot.slane %v1049, %v1056
        %v1059 = vunpack.c.l.s4 1983009808
        %v1060 = vunpack.c.0.s8 %v1059
        %v1061 = vlaneseq
        %v1062 = vshrl.u32 %v1061, 7
        %v1063 = vsub.s32 %v1060, %v1062
        %v1064 = vrot.slane %v1050, %v1063
        %v1065 = vcombine.low %v1041, %v1057
        %v1066 = vcombine.high %v1041, %v1057
        %v1068 = vunpack.c.l.s4 1934713408
        %v1069 = vunpack.c.0.s8 %v1068
        %v1070 = vlaneseq
        %v1071 = vshrl.u32 %v1070, 7
        %v1072 = vsub.s32 %v1069, %v1071
        %v1073 = vrot.slane %v1065, %v1072
        %v1075 = vunpack.c.l.s4 1934713408
        %v1076 = vunpack.c.0.s8 %v1075
        %v1077 = vlaneseq
        %v1078 = vshrl.u32 %v1077, 7
        %v1079 = vsub.s32 %v1076, %v1078
        %v1080 = vrot.slane %v1066, %v1079
        %v1081 = vcombine.low %v1048, %v1064
        %v1082 = vcombine.high %v1048, %v1064
        %v1084 = vunpack.c.l.s4 1934713408
        %v1085 = vunpack.c.0.s8 %v1084
        %v1086 = vlaneseq
        %v1087 = vshrl.u32 %v1086, 7
        %v1088 = vsub.s32 %v1085, %v1087
        %v1089 = vrot.slane %v1081, %v1088
        %v1091 = vunpack.c.l.s4 1934713408
        %v1092 = vunpack.c.0.s8 %v1091
        %v1093 = vlaneseq
        %v1094 = vshrl.u32 %v1093, 7
        %v1095 = vsub.s32 %v1092, %v1094
        %v1096 = vrot.slane %v1082, %v1095
        %v1097 = vcombine.high %v1073, 0.0
        %v1098 = vcombine.high %v1080, 0.0
        %v1099 = vcombine.high %v1089, 0.0
        %v1100 = vcombine.high %v1096, 0.0
        %v1101 = vcombine.low %v1010, %v1024
        %v1102 = vcombine.high %v1010, %v1024
        %v1104 = vunpack.c.l.s4 1983009808
        %v1105 = vunpack.c.0.s8 %v1104
        %v1106 = vlaneseq
        %v1107 = vshrl.u32 %v1106, 7
        %v1108 = vsub.s32 %v1105, %v1107
        %v1109 = vrot.slane %v1101, %v1108
        %v1111 = vunpack.c.l.s4 1983009808
        %v1112 = vunpack.c.0.s8 %v1111
        %v1113 = vlaneseq
        %v1114 = vshrl.u32 %v1113, 7
        %v1115 = vsub.s32 %v1112, %v1114
        %v1116 = vrot.slane %v1102, %v1115
        %v1117 = vcombine.low %v1018, %v1030
        %v1118 = vcombine.high %v1018, %v1030
        %v1120 = vunpack.c.l.s4 1983009808
        %v1121 = vunpack.c.0.s8 %v1120
        %v1122 = vlaneseq
        %v1123 = vshrl.u32 %v1122, 7
        %v1124 = vsub.s32 %v1121, %v1123
        %v1125 = vrot.slane %v1117, %v1124
        %v1127 = vunpack.c.l.s4 1983009808
        %v1128 = vunpack.c.0.s8 %v1127
        %v1129 = vlaneseq
        %v1130 = vshrl.u32 %v1129, 7
        %v1131 = vsub.s32 %v1128, %v1130
        %v1132 = vrot.slane %v1118, %v1131
        %v1133 = vcombine.low %v1109, %v1125
        %v1134 = vcombine.high %v1109, %v1125
        %v1136 = vunpack.c.l.s4 1934713408
        %v1137 = vunpack.c.0.s8 %v1136
        %v1138 = vlaneseq
        %v1139 = vshrl.u32 %v1138, 7
        %v1140 = vsub.s32 %v1137, %v1139
        %v1141 = vrot.slane %v1133, %v1140
        %v1143 = vunpack.c.l.s4 1934713408
        %v1144 = vunpack.c.0.s8 %v1143
        %v1145 = vlaneseq
        %v1146 = vshrl.u32 %v1145, 7
        %v1147 = vsub.s32 %v1144, %v1146
        %v1148 = vrot.slane %v1134, %v1147
        %v1149 = vcombine.low %v1116, %v1132
        %v1150 = vcombine.high %v1116, %v1132
        %v1152 = vunpack.c.l.s4 1934713408
        %v1153 = vunpack.c.0.s8 %v1152
        %v1154 = vlaneseq
        %v1155 = vshrl.u32 %v1154, 7
        %v1156 = vsub.s32 %v1153, %v1155
        %v1157 = vrot.slane %v1149, %v1156
        %v1159 = vunpack.c.l.s4 1934713408
        %v1160 = vunpack.c.0.s8 %v1159
        %v1161 = vlaneseq
        %v1162 = vshrl.u32 %v1161, 7
        %v1163 = vsub.s32 %v1160, %v1162
        %v1164 = vrot.slane %v1150, %v1163
        %v1165 = vcombine.high %v1141, 0.0
        %v1166 = vcombine.high %v1148, 0.0
        %v1167 = vcombine.high %v1157, 0.0
        %v1168 = vcombine.high %v1164, 0.0
        %v1169 = vcombine.low %v1073, %v1080
        %v1171 = vunpack.c.l.s4 1983009808
        %v1172 = vunpack.c.0.s8 %v1171
        %v1173 = vlaneseq
        %v1174 = vshrl.u32 %v1173, 7
        %v1175 = vsub.s32 %v1172, %v1174
        %v1176 = vrot.slane %v1169, %v1175
        %v1177 = vcombine.low %v1097, %v1098
        %v1179 = vunpack.c.l.s4 1983009808
        %v1180 = vunpack.c.0.s8 %v1179
        %v1181 = vlaneseq
        %v1182 = vshrl.u32 %v1181, 7
        %v1183 = vsub.s32 %v1180, %v1182
        %v1184 = vrot.slane %v1177, %v1183
        %v1185 = vcombine.low %v1089, %v1096
        %v1187 = vunpack.c.l.s4 1983009808
        %v1188 = vunpack.c.0.s8 %v1187
        %v1189 = vlaneseq
        %v1190 = vshrl.u32 %v1189, 7
        %v1191 = vsub.s32 %v1188, %v1190
        %v1192 = vrot.slane %v1185, %v1191
        %v1193 = vcombine.low %v1099, %v1100
        %v1195 = vunpack.c.l.s4 1983009808
        %v1196 = vunpack.c.0.s8 %v1195
        %v1197 = vlaneseq
        %v1198 = vshrl.u32 %v1197, 7
        %v1199 = vsub.s32 %v1196, %v1198
        %v1200 = vrot.slane %v1193, %v1199
        %v1201 = vcombine.low %v1176, %v1184
        %v1202 = vcombine.high %v1176, %v1184
        %v1204 = vunpack.c.l.s4 1934713408
        %v1205 = vunpack.c.0.s8 %v1204
        %v1206 = vlaneseq
        %v1207 = vshrl.u32 %v1206, 7
        %v1208 = vsub.s32 %v1205, %v1207
        %v1209 = vrot.slane %v1201, %v1208
        %v1211 = vunpack.c.l.s4 1934713408
        %v1212 = vunpack.c.0.s8 %v1211
        %v1213 = vlaneseq
        %v1214 = vshrl.u32 %v1213, 7
        %v1215 = vsub.s32 %v1212, %v1214
        %v1216 = vrot.slane %v1202, %v1215
        %v1217 = vcombine.low %v1192, %v1200
        %v1218 = vcombine.high %v1192, %v1200
        %v1220 = vunpack.c.l.s4 1934713408
        %v1221 = vunpack.c.0.s8 %v1220
        %v1222 = vlaneseq
        %v1223 = vshrl.u32 %v1222, 7
        %v1224 = vsub.s32 %v1221, %v1223
        %v1225 = vrot.slane %v1217, %v1224
        %v1227 = vunpack.c.l.s4 1934713408
        %v1228 = vunpack.c.0.s8 %v1227
        %v1229 = vlaneseq
        %v1230 = vshrl.u32 %v1229, 7
        %v1231 = vsub.s32 %v1228, %v1230
        %v1232 = vrot.slane %v1218, %v1231
        %v1233 = vcombine.low %v1209, %v1225
        %v1234 = vcombine.high %v1209, %v1225
        %v1235 = vcombine.low %v1216, %v1232
        %v1236 = vcombine.high %v1216, %v1232
        %v1237 = vcombine.low %v1141, %v1148
        %v1239 = vunpack.c.l.s4 1983009808
        %v1240 = vunpack.c.0.s8 %v1239
        %v1241 = vlaneseq
        %v1242 = vshrl.u32 %v1241, 7
        %v1243 = vsub.s32 %v1240, %v1242
        %v1244 = vrot.slane %v1237, %v1243
        %v1245 = vcombine.low %v1165, %v1166
        %v1247 = vunpack.c.l.s4 1983009808
        %v1248 = vunpack.c.0.s8 %v1247
        %v1249 = vlaneseq
        %v1250 = vshrl.u32 %v1249, 7
        %v1251 = vsub.s32 %v1248, %v1250
        %v1252 = vrot.slane %v1245, %v1251
        %v1253 = vcombine.low %v1157, %v1164
        %v1255 = vunpack.c.l.s4 1983009808
        %v1256 = vunpack.c.0.s8 %v1255
        %v1257 = vlaneseq
        %v1258 = vshrl.u32 %v1257, 7
        %v1259 = vsub.s32 %v1256, %v1258
        %v1260 = vrot.slane %v1253, %v1259
        %v1261 = vcombine.low %v1167, %v1168
        %v1263 = vunpack.c.l.s4 1983009808
        %v1264 = vunpack.c.0.s8 %v1263
        %v1265 = vlaneseq
        %v1266 = vshrl.u32 %v1265, 7
        %v1267 = vsub.s32 %v1264, %v1266
        %v1268 = vrot.slane %v1261, %v1267
        %v1269 = vcombine.low %v1244, %v1252
        %v1270 = vcombine.high %v1244, %v1252
        %v1272 = vunpack.c.l.s4 1934713408
        %v1273 = vunpack.c.0.s8 %v1272
        %v1274 = vlaneseq
        %v1275 = vshrl.u32 %v1274, 7
        %v1276 = vsub.s32 %v1273, %v1275
        %v1277 = vrot.slane %v1269, %v1276
        %v1279 = vunpack.c.l.s4 1934713408
        %v1280 = vunpack.c.0.s8 %v1279
        %v1281 = vlaneseq
        %v1282 = vshrl.u32 %v1281, 7
        %v1283 = vsub.s32 %v1280, %v1282
        %v1284 = vrot.slane %v1270, %v1283
        %v1285 = vcombine.low %v1260, %v1268
        %v1286 = vcombine.high %v1260, %v1268
        %v1288 = vunpack.c.l.s4 1934713408
        %v1289 = vunpack.c.0.s8 %v1288
        %v1290 = vlaneseq
        %v1291 = vshrl.u32 %v1290, 7
        %v1292 = vsub.s32 %v1289, %v1291
        %v1293 = vrot.slane %v1285, %v1292
        %v1295 = vunpack.c.l.s4 1934713408
        %v1296 = vunpack.c.0.s8 %v1295
        %v1297 = vlaneseq
        %v1298 = vshrl.u32 %v1297, 7
        %v1299 = vsub.s32 %v1296, %v1298
        %v1300 = vrot.slane %v1286, %v1299
        %v1301 = vcombine.low %v1277, %v1293
        %v1302 = vcombine.high %v1277, %v1293
        %v1303 = vcombine.low %v1284, %v1300
        %v1304 = vcombine.high %v1284, %v1300
        %v1305 = vpack.c.bf16 %v1233, %v1233
        %v1306 = vpack.c.bf16 %v1234, %v1234
        %v1307 = vpack.c.bf16 %v1235, %v1235
        %v1308 = vpack.c.bf16 %v1236, %v1236
        %v1309 = vpack.c.bf16 %v1301, %v1301
        %v1310 = vpack.c.bf16 %v1302, %v1302
        %v1311 = vpack.c.bf16 %v1303, %v1303
        %v1312 = vpack.c.bf16 %v1304, %v1304
        %1313 = vrot.lane.b32.xlu0 %v1007, 96
        %v1314 = vpop.permute.xlu0 %1313
        %1315 = vrot.lane.b32.xlu0 %v1010, 96
        %v1316 = vpop.permute.xlu0 %1315
        %1317 = vrot.lane.b32.xlu0 %v1016, 96
        %v1318 = vpop.permute.xlu0 %1317
        %1319 = vrot.lane.b32.xlu0 %v1018, 96
        %v1320 = vpop.permute.xlu0 %1319
        %1321 = vrot.lane.b32.xlu0 %v1022, 96
        %v1322 = vpop.permute.xlu0 %1321
        %1323 = vrot.lane.b32.xlu0 %v1024, 96
        %v1324 = vpop.permute.xlu0 %1323
        %1325 = vrot.lane.b32.xlu0 %v1028, 96
        %v1326 = vpop.permute.xlu0 %1325
        %1327 = vrot.lane.b32.xlu0 %v1030, 96
        %v1328 = vpop.permute.xlu0 %1327
        %v1337 = vcombine.low %v1314, %v1322
        %v1338 = vcombine.high %v1314, %v1322
        %v1340 = vunpack.c.l.s4 1983009808
        %v1341 = vunpack.c.0.s8 %v1340
        %v1342 = vlaneseq
        %v1343 = vshrl.u32 %v1342, 7
        %v1344 = vsub.s32 %v1341, %v1343
        %v1345 = vrot.slane %v1337, %v1344
        %v1347 = vunpack.c.l.s4 1983009808
        %v1348 = vunpack.c.0.s8 %v1347
        %v1349 = vlaneseq
        %v1350 = vshrl.u32 %v1349, 7
        %v1351 = vsub.s32 %v1348, %v1350
        %v1352 = vrot.slane %v1338, %v1351
        %v1353 = vcombine.low %v1318, %v1326
        %v1354 = vcombine.high %v1318, %v1326
        %v1356 = vunpack.c.l.s4 1983009808
        %v1357 = vunpack.c.0.s8 %v1356
        %v1358 = vlaneseq
        %v1359 = vshrl.u32 %v1358, 7
        %v1360 = vsub.s32 %v1357, %v1359
        %v1361 = vrot.slane %v1353, %v1360
        %v1363 = vunpack.c.l.s4 1983009808
        %v1364 = vunpack.c.0.s8 %v1363
        %v1365 = vlaneseq
        %v1366 = vshrl.u32 %v1365, 7
        %v1367 = vsub.s32 %v1364, %v1366
        %v1368 = vrot.slane %v1354, %v1367
        %v1369 = vcombine.low %v1345, %v1361
        %v1370 = vcombine.high %v1345, %v1361
        %v1372 = vunpack.c.l.s4 1934713408
        %v1373 = vunpack.c.0.s8 %v1372
        %v1374 = vlaneseq
        %v1375 = vshrl.u32 %v1374, 7
        %v1376 = vsub.s32 %v1373, %v1375
        %v1377 = vrot.slane %v1369, %v1376
        %v1379 = vunpack.c.l.s4 1934713408
        %v1380 = vunpack.c.0.s8 %v1379
        %v1381 = vlaneseq
        %v1382 = vshrl.u32 %v1381, 7
        %v1383 = vsub.s32 %v1380, %v1382
        %v1384 = vrot.slane %v1370, %v1383
        %v1385 = vcombine.low %v1352, %v1368
        %v1386 = vcombine.high %v1352, %v1368
        %v1388 = vunpack.c.l.s4 1934713408
        %v1389 = vunpack.c.0.s8 %v1388
        %v1390 = vlaneseq
        %v1391 = vshrl.u32 %v1390, 7
        %v1392 = vsub.s32 %v1389, %v1391
        %v1393 = vrot.slane %v1385, %v1392
        %v1395 = vunpack.c.l.s4 1934713408
        %v1396 = vunpack.c.0.s8 %v1395
        %v1397 = vlaneseq
        %v1398 = vshrl.u32 %v1397, 7
        %v1399 = vsub.s32 %v1396, %v1398
        %v1400 = vrot.slane %v1386, %v1399
        %v1401 = vcombine.high %v1377, 0.0
        %v1402 = vcombine.high %v1384, 0.0
        %v1403 = vcombine.high %v1393, 0.0
        %v1404 = vcombine.high %v1400, 0.0
        %v1405 = vcombine.low %v1316, %v1324
        %v1406 = vcombine.high %v1316, %v1324
        %v1408 = vunpack.c.l.s4 1983009808
        %v1409 = vunpack.c.0.s8 %v1408
        %v1410 = vlaneseq
        %v1411 = vshrl.u32 %v1410, 7
        %v1412 = vsub.s32 %v1409, %v1411
        %v1413 = vrot.slane %v1405, %v1412
        %v1415 = vunpack.c.l.s4 1983009808
        %v1416 = vunpack.c.0.s8 %v1415
        %v1417 = vlaneseq
        %v1418 = vshrl.u32 %v1417, 7
        %v1419 = vsub.s32 %v1416, %v1418
        %v1420 = vrot.slane %v1406, %v1419
        %v1421 = vcombine.low %v1320, %v1328
        %v1422 = vcombine.high %v1320, %v1328
        %v1424 = vunpack.c.l.s4 1983009808
        %v1425 = vunpack.c.0.s8 %v1424
        %v1426 = vlaneseq
        %v1427 = vshrl.u32 %v1426, 7
        %v1428 = vsub.s32 %v1425, %v1427
        %v1429 = vrot.slane %v1421, %v1428
        %v1431 = vunpack.c.l.s4 1983009808
        %v1432 = vunpack.c.0.s8 %v1431
        %v1433 = vlaneseq
        %v1434 = vshrl.u32 %v1433, 7
        %v1435 = vsub.s32 %v1432, %v1434
        %v1436 = vrot.slane %v1422, %v1435
        %v1437 = vcombine.low %v1413, %v1429
        %v1438 = vcombine.high %v1413, %v1429
        %v1440 = vunpack.c.l.s4 1934713408
        %v1441 = vunpack.c.0.s8 %v1440
        %v1442 = vlaneseq
        %v1443 = vshrl.u32 %v1442, 7
        %v1444 = vsub.s32 %v1441, %v1443
        %v1445 = vrot.slane %v1437, %v1444
        %v1447 = vunpack.c.l.s4 1934713408
        %v1448 = vunpack.c.0.s8 %v1447
        %v1449 = vlaneseq
        %v1450 = vshrl.u32 %v1449, 7
        %v1451 = vsub.s32 %v1448, %v1450
        %v1452 = vrot.slane %v1438, %v1451
        %v1453 = vcombine.low %v1420, %v1436
        %v1454 = vcombine.high %v1420, %v1436
        %v1456 = vunpack.c.l.s4 1934713408
        %v1457 = vunpack.c.0.s8 %v1456
        %v1458 = vlaneseq
        %v1459 = vshrl.u32 %v1458, 7
        %v1460 = vsub.s32 %v1457, %v1459
        %v1461 = vrot.slane %v1453, %v1460
        %v1463 = vunpack.c.l.s4 1934713408
        %v1464 = vunpack.c.0.s8 %v1463
        %v1465 = vlaneseq
        %v1466 = vshrl.u32 %v1465, 7
        %v1467 = vsub.s32 %v1464, %v1466
        %v1468 = vrot.slane %v1454, %v1467
        %v1469 = vcombine.high %v1445, 0.0
        %v1470 = vcombine.high %v1452, 0.0
        %v1471 = vcombine.high %v1461, 0.0
        %v1472 = vcombine.high %v1468, 0.0
        %v1473 = vcombine.low %v1377, %v1384
        %v1475 = vunpack.c.l.s4 1983009808
        %v1476 = vunpack.c.0.s8 %v1475
        %v1477 = vlaneseq
        %v1478 = vshrl.u32 %v1477, 7
        %v1479 = vsub.s32 %v1476, %v1478
        %v1480 = vrot.slane %v1473, %v1479
        %v1481 = vcombine.low %v1401, %v1402
        %v1483 = vunpack.c.l.s4 1983009808
        %v1484 = vunpack.c.0.s8 %v1483
        %v1485 = vlaneseq
        %v1486 = vshrl.u32 %v1485, 7
        %v1487 = vsub.s32 %v1484, %v1486
        %v1488 = vrot.slane %v1481, %v1487
        %v1489 = vcombine.low %v1393, %v1400
        %v1491 = vunpack.c.l.s4 1983009808
        %v1492 = vunpack.c.0.s8 %v1491
        %v1493 = vlaneseq
        %v1494 = vshrl.u32 %v1493, 7
        %v1495 = vsub.s32 %v1492, %v1494
        %v1496 = vrot.slane %v1489, %v1495
        %v1497 = vcombine.low %v1403, %v1404
        %v1499 = vunpack.c.l.s4 1983009808
        %v1500 = vunpack.c.0.s8 %v1499
        %v1501 = vlaneseq
        %v1502 = vshrl.u32 %v1501, 7
        %v1503 = vsub.s32 %v1500, %v1502
        %v1504 = vrot.slane %v1497, %v1503
        %v1505 = vcombine.low %v1480, %v1488
        %v1506 = vcombine.high %v1480, %v1488
        %v1508 = vunpack.c.l.s4 1934713408
        %v1509 = vunpack.c.0.s8 %v1508
        %v1510 = vlaneseq
        %v1511 = vshrl.u32 %v1510, 7
        %v1512 = vsub.s32 %v1509, %v1511
        %v1513 = vrot.slane %v1505, %v1512
        %v1515 = vunpack.c.l.s4 1934713408
        %v1516 = vunpack.c.0.s8 %v1515
        %v1517 = vlaneseq
        %v1518 = vshrl.u32 %v1517, 7
        %v1519 = vsub.s32 %v1516, %v1518
        %v1520 = vrot.slane %v1506, %v1519
        %v1521 = vcombine.low %v1496, %v1504
        %v1522 = vcombine.high %v1496, %v1504
        %v1524 = vunpack.c.l.s4 1934713408
        %v1525 = vunpack.c.0.s8 %v1524
        %v1526 = vlaneseq
        %v1527 = vshrl.u32 %v1526, 7
        %v1528 = vsub.s32 %v1525, %v1527
        %v1529 = vrot.slane %v1521, %v1528
        %v1531 = vunpack.c.l.s4 1934713408
        %v1532 = vunpack.c.0.s8 %v1531
        %v1533 = vlaneseq
        %v1534 = vshrl.u32 %v1533, 7
        %v1535 = vsub.s32 %v1532, %v1534
        %v1536 = vrot.slane %v1522, %v1535
        %v1537 = vcombine.low %v1513, %v1529
        %v1538 = vcombine.high %v1513, %v1529
        %v1539 = vcombine.low %v1520, %v1536
        %v1540 = vcombine.high %v1520, %v1536
        %v1541 = vcombine.low %v1445, %v1452
        %v1543 = vunpack.c.l.s4 1983009808
        %v1544 = vunpack.c.0.s8 %v1543
        %v1545 = vlaneseq
        %v1546 = vshrl.u32 %v1545, 7
        %v1547 = vsub.s32 %v1544, %v1546
        %v1548 = vrot.slane %v1541, %v1547
        %v1549 = vcombine.low %v1469, %v1470
        %v1551 = vunpack.c.l.s4 1983009808
        %v1552 = vunpack.c.0.s8 %v1551
        %v1553 = vlaneseq
        %v1554 = vshrl.u32 %v1553, 7
        %v1555 = vsub.s32 %v1552, %v1554
        %v1556 = vrot.slane %v1549, %v1555
        %v1557 = vcombine.low %v1461, %v1468
        %v1559 = vunpack.c.l.s4 1983009808
        %v1560 = vunpack.c.0.s8 %v1559
        %v1561 = vlaneseq
        %v1562 = vshrl.u32 %v1561, 7
        %v1563 = vsub.s32 %v1560, %v1562
        %v1564 = vrot.slane %v1557, %v1563
        %v1565 = vcombine.low %v1471, %v1472
        %v1567 = vunpack.c.l.s4 1983009808
        %v1568 = vunpack.c.0.s8 %v1567
        %v1569 = vlaneseq
        %v1570 = vshrl.u32 %v1569, 7
        %v1571 = vsub.s32 %v1568, %v1570
        %v1572 = vrot.slane %v1565, %v1571
        %v1573 = vcombine.low %v1548, %v1556
        %v1574 = vcombine.high %v1548, %v1556
        %v1576 = vunpack.c.l.s4 1934713408
        %v1577 = vunpack.c.0.s8 %v1576
        %v1578 = vlaneseq
        %v1579 = vshrl.u32 %v1578, 7
        %v1580 = vsub.s32 %v1577, %v1579
        %v1581 = vrot.slane %v1573, %v1580
        %v1583 = vunpack.c.l.s4 1934713408
        %v1584 = vunpack.c.0.s8 %v1583
        %v1585 = vlaneseq
        %v1586 = vshrl.u32 %v1585, 7
        %v1587 = vsub.s32 %v1584, %v1586
        %v1588 = vrot.slane %v1574, %v1587
        %v1589 = vcombine.low %v1564, %v1572
        %v1590 = vcombine.high %v1564, %v1572
        %v1592 = vunpack.c.l.s4 1934713408
        %v1593 = vunpack.c.0.s8 %v1592
        %v1594 = vlaneseq
        %v1595 = vshrl.u32 %v1594, 7
        %v1596 = vsub.s32 %v1593, %v1595
        %v1597 = vrot.slane %v1589, %v1596
        %v1599 = vunpack.c.l.s4 1934713408
        %v1600 = vunpack.c.0.s8 %v1599
        %v1601 = vlaneseq
        %v1602 = vshrl.u32 %v1601, 7
        %v1603 = vsub.s32 %v1600, %v1602
        %v1604 = vrot.slane %v1590, %v1603
        %v1605 = vcombine.low %v1581, %v1597
        %v1606 = vcombine.high %v1581, %v1597
        %v1607 = vcombine.low %v1588, %v1604
        %v1608 = vcombine.high %v1588, %v1604
        %v1609 = vpack.c.bf16 %v1537, %v1537
        %v1610 = vpack.c.bf16 %v1538, %v1538
        %v1611 = vpack.c.bf16 %v1539, %v1539
        %v1612 = vpack.c.bf16 %v1540, %v1540
        %v1613 = vpack.c.bf16 %v1605, %v1605
        %v1614 = vpack.c.bf16 %v1606, %v1606
        %v1615 = vpack.c.bf16 %v1607, %v1607
        %v1616 = vpack.c.bf16 %v1608, %v1608
        %1617 = vrot.lane.b32.xlu0 %v1007, 64
        %v1618 = vpop.permute.xlu0 %1617
        %1619 = vrot.lane.b32.xlu0 %v1010, 64
        %v1620 = vpop.permute.xlu0 %1619
        %1621 = vrot.lane.b32.xlu0 %v1016, 64
        %v1622 = vpop.permute.xlu0 %1621
        %1623 = vrot.lane.b32.xlu0 %v1018, 64
        %v1624 = vpop.permute.xlu0 %1623
        %1625 = vrot.lane.b32.xlu0 %v1022, 64
        %v1626 = vpop.permute.xlu0 %1625
        %1627 = vrot.lane.b32.xlu0 %v1024, 64
        %v1628 = vpop.permute.xlu0 %1627
        %1629 = vrot.lane.b32.xlu0 %v1028, 64
        %v1630 = vpop.permute.xlu0 %1629
        %1631 = vrot.lane.b32.xlu0 %v1030, 64
        %v1632 = vpop.permute.xlu0 %1631
        %v1641 = vcombine.low %v1618, %v1626
        %v1642 = vcombine.high %v1618, %v1626
        %v1644 = vunpack.c.l.s4 1983009808
        %v1645 = vunpack.c.0.s8 %v1644
        %v1646 = vlaneseq
        %v1647 = vshrl.u32 %v1646, 7
        %v1648 = vsub.s32 %v1645, %v1647
        %v1649 = vrot.slane %v1641, %v1648
        %v1651 = vunpack.c.l.s4 1983009808
        %v1652 = vunpack.c.0.s8 %v1651
        %v1653 = vlaneseq
        %v1654 = vshrl.u32 %v1653, 7
        %v1655 = vsub.s32 %v1652, %v1654
        %v1656 = vrot.slane %v1642, %v1655
        %v1657 = vcombine.low %v1622, %v1630
        %v1658 = vcombine.high %v1622, %v1630
        %v1660 = vunpack.c.l.s4 1983009808
        %v1661 = vunpack.c.0.s8 %v1660
        %v1662 = vlaneseq
        %v1663 = vshrl.u32 %v1662, 7
        %v1664 = vsub.s32 %v1661, %v1663
        %v1665 = vrot.slane %v1657, %v1664
        %v1667 = vunpack.c.l.s4 1983009808
        %v1668 = vunpack.c.0.s8 %v1667
        %v1669 = vlaneseq
        %v1670 = vshrl.u32 %v1669, 7
        %v1671 = vsub.s32 %v1668, %v1670
        %v1672 = vrot.slane %v1658, %v1671
        %v1673 = vcombine.low %v1649, %v1665
        %v1674 = vcombine.high %v1649, %v1665
        %v1676 = vunpack.c.l.s4 1934713408
        %v1677 = vunpack.c.0.s8 %v1676
        %v1678 = vlaneseq
        %v1679 = vshrl.u32 %v1678, 7
        %v1680 = vsub.s32 %v1677, %v1679
        %v1681 = vrot.slane %v1673, %v1680
        %v1683 = vunpack.c.l.s4 1934713408
        %v1684 = vunpack.c.0.s8 %v1683
        %v1685 = vlaneseq
        %v1686 = vshrl.u32 %v1685, 7
        %v1687 = vsub.s32 %v1684, %v1686
        %v1688 = vrot.slane %v1674, %v1687
        %v1689 = vcombine.low %v1656, %v1672
        %v1690 = vcombine.high %v1656, %v1672
        %v1692 = vunpack.c.l.s4 1934713408
        %v1693 = vunpack.c.0.s8 %v1692
        %v1694 = vlaneseq
        %v1695 = vshrl.u32 %v1694, 7
        %v1696 = vsub.s32 %v1693, %v1695
        %v1697 = vrot.slane %v1689, %v1696
        %v1699 = vunpack.c.l.s4 1934713408
        %v1700 = vunpack.c.0.s8 %v1699
        %v1701 = vlaneseq
        %v1702 = vshrl.u32 %v1701, 7
        %v1703 = vsub.s32 %v1700, %v1702
        %v1704 = vrot.slane %v1690, %v1703
        %v1705 = vcombine.high %v1681, 0.0
        %v1706 = vcombine.high %v1688, 0.0
        %v1707 = vcombine.high %v1697, 0.0
        %v1708 = vcombine.high %v1704, 0.0
        %v1709 = vcombine.low %v1620, %v1628
        %v1710 = vcombine.high %v1620, %v1628
        %v1712 = vunpack.c.l.s4 1983009808
        %v1713 = vunpack.c.0.s8 %v1712
        %v1714 = vlaneseq
        %v1715 = vshrl.u32 %v1714, 7
        %v1716 = vsub.s32 %v1713, %v1715
        %v1717 = vrot.slane %v1709, %v1716
        %v1719 = vunpack.c.l.s4 1983009808
        %v1720 = vunpack.c.0.s8 %v1719
        %v1721 = vlaneseq
        %v1722 = vshrl.u32 %v1721, 7
        %v1723 = vsub.s32 %v1720, %v1722
        %v1724 = vrot.slane %v1710, %v1723
        %v1725 = vcombine.low %v1624, %v1632
        %v1726 = vcombine.high %v1624, %v1632
        %v1728 = vunpack.c.l.s4 1983009808
        %v1729 = vunpack.c.0.s8 %v1728
        %v1730 = vlaneseq
        %v1731 = vshrl.u32 %v1730, 7
        %v1732 = vsub.s32 %v1729, %v1731
        %v1733 = vrot.slane %v1725, %v1732
        %v1735 = vunpack.c.l.s4 1983009808
        %v1736 = vunpack.c.0.s8 %v1735
        %v1737 = vlaneseq
        %v1738 = vshrl.u32 %v1737, 7
        %v1739 = vsub.s32 %v1736, %v1738
        %v1740 = vrot.slane %v1726, %v1739
        %v1741 = vcombine.low %v1717, %v1733
        %v1742 = vcombine.high %v1717, %v1733
        %v1744 = vunpack.c.l.s4 1934713408
        %v1745 = vunpack.c.0.s8 %v1744
        %v1746 = vlaneseq
        %v1747 = vshrl.u32 %v1746, 7
        %v1748 = vsub.s32 %v1745, %v1747
        %v1749 = vrot.slane %v1741, %v1748
        %v1751 = vunpack.c.l.s4 1934713408
        %v1752 = vunpack.c.0.s8 %v1751
        %v1753 = vlaneseq
        %v1754 = vshrl.u32 %v1753, 7
        %v1755 = vsub.s32 %v1752, %v1754
        %v1756 = vrot.slane %v1742, %v1755
        %v1757 = vcombine.low %v1724, %v1740
        %v1758 = vcombine.high %v1724, %v1740
        %v1760 = vunpack.c.l.s4 1934713408
        %v1761 = vunpack.c.0.s8 %v1760
        %v1762 = vlaneseq
        %v1763 = vshrl.u32 %v1762, 7
        %v1764 = vsub.s32 %v1761, %v1763
        %v1765 = vrot.slane %v1757, %v1764
        %v1767 = vunpack.c.l.s4 1934713408
        %v1768 = vunpack.c.0.s8 %v1767
        %v1769 = vlaneseq
        %v1770 = vshrl.u32 %v1769, 7
        %v1771 = vsub.s32 %v1768, %v1770
        %v1772 = vrot.slane %v1758, %v1771
        %v1773 = vcombine.high %v1749, 0.0
        %v1774 = vcombine.high %v1756, 0.0
        %v1775 = vcombine.high %v1765, 0.0
        %v1776 = vcombine.high %v1772, 0.0
        %v1777 = vcombine.low %v1681, %v1688
        %v1779 = vunpack.c.l.s4 1983009808
        %v1780 = vunpack.c.0.s8 %v1779
        %v1781 = vlaneseq
        %v1782 = vshrl.u32 %v1781, 7
        %v1783 = vsub.s32 %v1780, %v1782
        %v1784 = vrot.slane %v1777, %v1783
        %v1785 = vcombine.low %v1705, %v1706
        %v1787 = vunpack.c.l.s4 1983009808
        %v1788 = vunpack.c.0.s8 %v1787
        %v1789 = vlaneseq
        %v1790 = vshrl.u32 %v1789, 7
        %v1791 = vsub.s32 %v1788, %v1790
        %v1792 = vrot.slane %v1785, %v1791
        %v1793 = vcombine.low %v1697, %v1704
        %v1795 = vunpack.c.l.s4 1983009808
        %v1796 = vunpack.c.0.s8 %v1795
        %v1797 = vlaneseq
        %v1798 = vshrl.u32 %v1797, 7
        %v1799 = vsub.s32 %v1796, %v1798
        %v1800 = vrot.slane %v1793, %v1799
        %v1801 = vcombine.low %v1707, %v1708
        %v1803 = vunpack.c.l.s4 1983009808
        %v1804 = vunpack.c.0.s8 %v1803
        %v1805 = vlaneseq
        %v1806 = vshrl.u32 %v1805, 7
        %v1807 = vsub.s32 %v1804, %v1806
        %v1808 = vrot.slane %v1801, %v1807
        %v1809 = vcombine.low %v1784, %v1792
        %v1810 = vcombine.high %v1784, %v1792
        %v1812 = vunpack.c.l.s4 1934713408
        %v1813 = vunpack.c.0.s8 %v1812
        %v1814 = vlaneseq
        %v1815 = vshrl.u32 %v1814, 7
        %v1816 = vsub.s32 %v1813, %v1815
        %v1817 = vrot.slane %v1809, %v1816
        %v1819 = vunpack.c.l.s4 1934713408
        %v1820 = vunpack.c.0.s8 %v1819
        %v1821 = vlaneseq
        %v1822 = vshrl.u32 %v1821, 7
        %v1823 = vsub.s32 %v1820, %v1822
        %v1824 = vrot.slane %v1810, %v1823
        %v1825 = vcombine.low %v1800, %v1808
        %v1826 = vcombine.high %v1800, %v1808
        %v1828 = vunpack.c.l.s4 1934713408
        %v1829 = vunpack.c.0.s8 %v1828
        %v1830 = vlaneseq
        %v1831 = vshrl.u32 %v1830, 7
        %v1832 = vsub.s32 %v1829, %v1831
        %v1833 = vrot.slane %v1825, %v1832
        %v1835 = vunpack.c.l.s4 1934713408
        %v1836 = vunpack.c.0.s8 %v1835
        %v1837 = vlaneseq
        %v1838 = vshrl.u32 %v1837, 7
        %v1839 = vsub.s32 %v1836, %v1838
        %v1840 = vrot.slane %v1826, %v1839
        %v1841 = vcombine.low %v1817, %v1833
        %v1842 = vcombine.high %v1817, %v1833
        %v1843 = vcombine.low %v1824, %v1840
        %v1844 = vcombine.high %v1824, %v1840
        %v1845 = vcombine.low %v1749, %v1756
        %v1847 = vunpack.c.l.s4 1983009808
        %v1848 = vunpack.c.0.s8 %v1847
        %v1849 = vlaneseq
        %v1850 = vshrl.u32 %v1849, 7
        %v1851 = vsub.s32 %v1848, %v1850
        %v1852 = vrot.slane %v1845, %v1851
        %v1853 = vcombine.low %v1773, %v1774
        %v1855 = vunpack.c.l.s4 1983009808
        %v1856 = vunpack.c.0.s8 %v1855
        %v1857 = vlaneseq
        %v1858 = vshrl.u32 %v1857, 7
        %v1859 = vsub.s32 %v1856, %v1858
        %v1860 = vrot.slane %v1853, %v1859
        %v1861 = vcombine.low %v1765, %v1772
        %v1863 = vunpack.c.l.s4 1983009808
        %v1864 = vunpack.c.0.s8 %v1863
        %v1865 = vlaneseq
        %v1866 = vshrl.u32 %v1865, 7
        %v1867 = vsub.s32 %v1864, %v1866
        %v1868 = vrot.slane %v1861, %v1867
        %v1869 = vcombine.low %v1775, %v1776
        %v1871 = vunpack.c.l.s4 1983009808
        %v1872 = vunpack.c.0.s8 %v1871
        %v1873 = vlaneseq
        %v1874 = vshrl.u32 %v1873, 7
        %v1875 = vsub.s32 %v1872, %v1874
        %v1876 = vrot.slane %v1869, %v1875
        %v1877 = vcombine.low %v1852, %v1860
        %v1878 = vcombine.high %v1852, %v1860
        %v1880 = vunpack.c.l.s4 1934713408
        %v1881 = vunpack.c.0.s8 %v1880
        %v1882 = vlaneseq
        %v1883 = vshrl.u32 %v1882, 7
        %v1884 = vsub.s32 %v1881, %v1883
        %v1885 = vrot.slane %v1877, %v1884
        %v1887 = vunpack.c.l.s4 1934713408
        %v1888 = vunpack.c.0.s8 %v1887
        %v1889 = vlaneseq
        %v1890 = vshrl.u32 %v1889, 7
        %v1891 = vsub.s32 %v1888, %v1890
        %v1892 = vrot.slane %v1878, %v1891
        %v1893 = vcombine.low %v1868, %v1876
        %v1894 = vcombine.high %v1868, %v1876
        %v1896 = vunpack.c.l.s4 1934713408
        %v1897 = vunpack.c.0.s8 %v1896
        %v1898 = vlaneseq
        %v1899 = vshrl.u32 %v1898, 7
        %v1900 = vsub.s32 %v1897, %v1899
        %v1901 = vrot.slane %v1893, %v1900
        %v1903 = vunpack.c.l.s4 1934713408
        %v1904 = vunpack.c.0.s8 %v1903
        %v1905 = vlaneseq
        %v1906 = vshrl.u32 %v1905, 7
        %v1907 = vsub.s32 %v1904, %v1906
        %v1908 = vrot.slane %v1894, %v1907
        %v1909 = vcombine.low %v1885, %v1901
        %v1910 = vcombine.high %v1885, %v1901
        %v1911 = vcombine.low %v1892, %v1908
        %v1912 = vcombine.high %v1892, %v1908
        %v1913 = vpack.c.bf16 %v1841, %v1841
        %v1914 = vpack.c.bf16 %v1842, %v1842
        %v1915 = vpack.c.bf16 %v1843, %v1843
        %v1916 = vpack.c.bf16 %v1844, %v1844
        %v1917 = vpack.c.bf16 %v1909, %v1909
        %v1918 = vpack.c.bf16 %v1910, %v1910
        %v1919 = vpack.c.bf16 %v1911, %v1911
        %v1920 = vpack.c.bf16 %v1912, %v1912
        %vm1921 = vcmask 64512
        %v1923 = vsel %vm1921, %v1305, 0
        %v1926 = vsel %vm1921, %v1609, 0
        %1928 = vmatprep.subr.bf16.mxu0 0
        %1929 = vmatpush1.bf16.xpose.msra.mxu0 %v1926
        %1930 = vmatprep.subr.bf16.mxu0 0
        %1931 = vmatpush1.bf16.xpose.msra.mxu0 0
        %1932 = vmatprep.subr.bf16.mxu0 0
        %1933 = vmatpush1.bf16.xpose.msra.mxu0 0
        %1934 = vmatprep.subr.bf16.mxu0 0
        %1935 = vmatpush1.bf16.xpose.msra.mxu0 0
        %1936 = vmatprep.subr.bf16.mxu0 0
        %1937 = vmatpush1.bf16.xpose.msra.mxu0 0
        %1938 = vmatprep.subr.bf16.mxu0 0
        %1939 = vmatpush1.bf16.xpose.msra.mxu0 0
        %1940 = vmatprep.subr.bf16.mxu0 0
        %1941 = vmatpush1.bf16.xpose.msra.mxu0 0
        %1942 = vmatprep.subr.bf16.mxu0 0
        %1943 = vmatpush1.bf16.xpose.msra.mxu0 0
        %1944 = vmatprep.subr.bf16.mxu0 0
        %1945 = vmatpush1.bf16.xpose.msra.mxu0 0
        %1946 = vmatprep.subr.bf16.mxu0 0
        %1947 = vmatpush1.bf16.xpose.msra.mxu0 0
        %1948 = vmatprep.subr.bf16.mxu0 0
        %1949 = vmatpush1.bf16.xpose.msra.mxu0 0
        %1950 = vmatprep.subr.bf16.mxu0 0
        %1951 = vmatpush1.bf16.xpose.msra.mxu0 0
        %1952 = vmatprep.subr.bf16.mxu0 0
        %1953 = vmatpush1.bf16.xpose.msra.mxu0 0
        %1954 = vmatprep.subr.bf16.mxu0 0
        %1955 = vmatpush1.bf16.xpose.msra.mxu0 0
        %1956 = vmatprep.subr.bf16.mxu0 0
        %1957 = vmatpush1.bf16.xpose.msra.mxu0 0
        %1958 = vmatprep.subr.bf16.mxu0 0
        %1959 = vmatpush1.bf16.xpose.msra.mxu0 0
        %1960 = vmatprep.mubr.bf16.mxu0 0
        %1961 = vmatmul.mubr.bf16.gmra.mrb[0].mxu0 %v1923
        %v1962 = vpop.f32.mrb[0].mxu0
        %v1963 = vadd.f32 0.0, %v1962
        %v1964 = vpop.f32.mrb[0].mxu0
        %v1965 = vpop.f32.mrb[0].mxu0
        %v1966 = vpop.f32.mrb[0].mxu0
        %1967 = vdwg.mxu0
        %v1969 = vsel %vm1921, %v1306, 0
        %v1972 = vsel %vm1921, %v1610, 0
        %1974 = vmatprep.subr.bf16.mxu0 0
        %1975 = vmatpush1.bf16.xpose.msra.mxu0 %v1972
        %1976 = vmatprep.subr.bf16.mxu0 0
        %1977 = vmatpush1.bf16.xpose.msra.mxu0 0
        %1978 = vmatprep.subr.bf16.mxu0 0
        %1979 = vmatpush1.bf16.xpose.msra.mxu0 0
        %1980 = vmatprep.subr.bf16.mxu0 0
        %1981 = vmatpush1.bf16.xpose.msra.mxu0 0
        %1982 = vmatprep.subr.bf16.mxu0 0
        %1983 = vmatpush1.bf16.xpose.msra.mxu0 0
        %1984 = vmatprep.subr.bf16.mxu0 0
        %1985 = vmatpush1.bf16.xpose.msra.mxu0 0
        %1986 = vmatprep.subr.bf16.mxu0 0
        %1987 = vmatpush1.bf16.xpose.msra.mxu0 0
        %1988 = vmatprep.subr.bf16.mxu0 0
        %1989 = vmatpush1.bf16.xpose.msra.mxu0 0
        %1990 = vmatprep.subr.bf16.mxu0 0
        %1991 = vmatpush1.bf16.xpose.msra.mxu0 0
        %1992 = vmatprep.subr.bf16.mxu0 0
        %1993 = vmatpush1.bf16.xpose.msra.mxu0 0
        %1994 = vmatprep.subr.bf16.mxu0 0
        %1995 = vmatpush1.bf16.xpose.msra.mxu0 0
        %1996 = vmatprep.subr.bf16.mxu0 0
        %1997 = vmatpush1.bf16.xpose.msra.mxu0 0
        %1998 = vmatprep.subr.bf16.mxu0 0
        %1999 = vmatpush1.bf16.xpose.msra.mxu0 0
        %2000 = vmatprep.subr.bf16.mxu0 0
        %2001 = vmatpush1.bf16.xpose.msra.mxu0 0
        %2002 = vmatprep.subr.bf16.mxu0 0
        %2003 = vmatpush1.bf16.xpose.msra.mxu0 0
        %2004 = vmatprep.subr.bf16.mxu0 0
        %2005 = vmatpush1.bf16.xpose.msra.mxu0 0
        %2006 = vmatprep.mubr.bf16.mxu0 0
        %2007 = vmatmul.mubr.bf16.gmra.mrb[0].mxu0 %v1969
        %v2008 = vpop.f32.mrb[0].mxu0
        %v2009 = vadd.f32 0.0, %v2008
        %v2010 = vpop.f32.mrb[0].mxu0
        %v2011 = vpop.f32.mrb[0].mxu0
        %v2012 = vpop.f32.mrb[0].mxu0
        %2013 = vdwg.mxu0
        %v2015 = vsel %vm1921, %v1307, 0
        %v2018 = vsel %vm1921, %v1611, 0
        %2020 = vmatprep.subr.bf16.mxu0 0
        %2021 = vmatpush1.bf16.xpose.msra.mxu0 %v2018
        %2022 = vmatprep.subr.bf16.mxu0 0
        %2023 = vmatpush1.bf16.xpose.msra.mxu0 0
        %2024 = vmatprep.subr.bf16.mxu0 0
        %2025 = vmatpush1.bf16.xpose.msra.mxu0 0
        %2026 = vmatprep.subr.bf16.mxu0 0
        %2027 = vmatpush1.bf16.xpose.msra.mxu0 0
        %2028 = vmatprep.subr.bf16.mxu0 0
        %2029 = vmatpush1.bf16.xpose.msra.mxu0 0
        %2030 = vmatprep.subr.bf16.mxu0 0
        %2031 = vmatpush1.bf16.xpose.msra.mxu0 0
        %2032 = vmatprep.subr.bf16.mxu0 0
        %2033 = vmatpush1.bf16.xpose.msra.mxu0 0
        %2034 = vmatprep.subr.bf16.mxu0 0
        %2035 = vmatpush1.bf16.xpose.msra.mxu0 0
        %2036 = vmatprep.subr.bf16.mxu0 0
        %2037 = vmatpush1.bf16.xpose.msra.mxu0 0
        %2038 = vmatprep.subr.bf16.mxu0 0
        %2039 = vmatpush1.bf16.xpose.msra.mxu0 0
        %2040 = vmatprep.subr.bf16.mxu0 0
        %2041 = vmatpush1.bf16.xpose.msra.mxu0 0
        %2042 = vmatprep.subr.bf16.mxu0 0
        %2043 = vmatpush1.bf16.xpose.msra.mxu0 0
        %2044 = vmatprep.subr.bf16.mxu0 0
        %2045 = vmatpush1.bf16.xpose.msra.mxu0 0
        %2046 = vmatprep.subr.bf16.mxu0 0
        %2047 = vmatpush1.bf16.xpose.msra.mxu0 0
        %2048 = vmatprep.subr.bf16.mxu0 0
        %2049 = vmatpush1.bf16.xpose.msra.mxu0 0
        %2050 = vmatprep.subr.bf16.mxu0 0
        %2051 = vmatpush1.bf16.xpose.msra.mxu0 0
        %2052 = vmatprep.mubr.bf16.mxu0 0
        %2053 = vmatmul.mubr.bf16.gmra.mrb[0].mxu0 %v2015
        %v2054 = vpop.f32.mrb[0].mxu0
        %v2055 = vadd.f32 0.0, %v2054
        %v2056 = vpop.f32.mrb[0].mxu0
        %v2057 = vpop.f32.mrb[0].mxu0
        %v2058 = vpop.f32.mrb[0].mxu0
        %2059 = vdwg.mxu0
        %v2061 = vsel %vm1921, %v1308, 0
        %v2064 = vsel %vm1921, %v1612, 0
        %2066 = vmatprep.subr.bf16.mxu0 0
        %2067 = vmatpush1.bf16.xpose.msra.mxu0 %v2064
        %2068 = vmatprep.subr.bf16.mxu0 0
        %2069 = vmatpush1.bf16.xpose.msra.mxu0 0
        %2070 = vmatprep.subr.bf16.mxu0 0
        %2071 = vmatpush1.bf16.xpose.msra.mxu0 0
        %2072 = vmatprep.subr.bf16.mxu0 0
        %2073 = vmatpush1.bf16.xpose.msra.mxu0 0
        %2074 = vmatprep.subr.bf16.mxu0 0
        %2075 = vmatpush1.bf16.xpose.msra.mxu0 0
        %2076 = vmatprep.subr.bf16.mxu0 0
        %2077 = vmatpush1.bf16.xpose.msra.mxu0 0
        %2078 = vmatprep.subr.bf16.mxu0 0
        %2079 = vmatpush1.bf16.xpose.msra.mxu0 0
        %2080 = vmatprep.subr.bf16.mxu0 0
        %2081 = vmatpush1.bf16.xpose.msra.mxu0 0
        %2082 = vmatprep.subr.bf16.mxu0 0
        %2083 = vmatpush1.bf16.xpose.msra.mxu0 0
        %2084 = vmatprep.subr.bf16.mxu0 0
        %2085 = vmatpush1.bf16.xpose.msra.mxu0 0
        %2086 = vmatprep.subr.bf16.mxu0 0
        %2087 = vmatpush1.bf16.xpose.msra.mxu0 0
        %2088 = vmatprep.subr.bf16.mxu0 0
        %2089 = vmatpush1.bf16.xpose.msra.mxu0 0
        %2090 = vmatprep.subr.bf16.mxu0 0
        %2091 = vmatpush1.bf16.xpose.msra.mxu0 0
        %2092 = vmatprep.subr.bf16.mxu0 0
        %2093 = vmatpush1.bf16.xpose.msra.mxu0 0
        %2094 = vmatprep.subr.bf16.mxu0 0
        %2095 = vmatpush1.bf16.xpose.msra.mxu0 0
        %2096 = vmatprep.subr.bf16.mxu0 0
        %2097 = vmatpush1.bf16.xpose.msra.mxu0 0
        %2098 = vmatprep.mubr.bf16.mxu0 0
        %2099 = vmatmul.mubr.bf16.gmra.mrb[0].mxu0 %v2061
        %v2100 = vpop.f32.mrb[0].mxu0
        %v2101 = vadd.f32 0.0, %v2100
        %v2102 = vpop.f32.mrb[0].mxu0
        %v2103 = vpop.f32.mrb[0].mxu0
        %v2104 = vpop.f32.mrb[0].mxu0
        %2105 = vdwg.mxu0
        %v2107 = vsel %vm1921, %v1309, 0
        %v2110 = vsel %vm1921, %v1613, 0
        %2112 = vmatprep.subr.bf16.mxu0 0
        %2113 = vmatpush1.bf16.xpose.msra.mxu0 %v2110
        %2114 = vmatprep.subr.bf16.mxu0 0
        %2115 = vmatpush1.bf16.xpose.msra.mxu0 0
        %2116 = vmatprep.subr.bf16.mxu0 0
        %2117 = vmatpush1.bf16.xpose.msra.mxu0 0
        %2118 = vmatprep.subr.bf16.mxu0 0
        %2119 = vmatpush1.bf16.xpose.msra.mxu0 0
        %2120 = vmatprep.subr.bf16.mxu0 0
        %2121 = vmatpush1.bf16.xpose.msra.mxu0 0
        %2122 = vmatprep.subr.bf16.mxu0 0
        %2123 = vmatpush1.bf16.xpose.msra.mxu0 0
        %2124 = vmatprep.subr.bf16.mxu0 0
        %2125 = vmatpush1.bf16.xpose.msra.mxu0 0
        %2126 = vmatprep.subr.bf16.mxu0 0
        %2127 = vmatpush1.bf16.xpose.msra.mxu0 0
        %2128 = vmatprep.subr.bf16.mxu0 0
        %2129 = vmatpush1.bf16.xpose.msra.mxu0 0
        %2130 = vmatprep.subr.bf16.mxu0 0
        %2131 = vmatpush1.bf16.xpose.msra.mxu0 0
        %2132 = vmatprep.subr.bf16.mxu0 0
        %2133 = vmatpush1.bf16.xpose.msra.mxu0 0
        %2134 = vmatprep.subr.bf16.mxu0 0
        %2135 = vmatpush1.bf16.xpose.msra.mxu0 0
        %2136 = vmatprep.subr.bf16.mxu0 0
        %2137 = vmatpush1.bf16.xpose.msra.mxu0 0
        %2138 = vmatprep.subr.bf16.mxu0 0
        %2139 = vmatpush1.bf16.xpose.msra.mxu0 0
        %2140 = vmatprep.subr.bf16.mxu0 0
        %2141 = vmatpush1.bf16.xpose.msra.mxu0 0
        %2142 = vmatprep.subr.bf16.mxu0 0
        %2143 = vmatpush1.bf16.xpose.msra.mxu0 0
        %2144 = vmatprep.mubr.bf16.mxu0 0
        %2145 = vmatmul.mubr.bf16.gmra.mrb[0].mxu0 %v2107
        %v2146 = vpop.f32.mrb[0].mxu0
        %v2147 = vadd.f32 0.0, %v2146
        %v2148 = vpop.f32.mrb[0].mxu0
        %v2149 = vpop.f32.mrb[0].mxu0
        %v2150 = vpop.f32.mrb[0].mxu0
        %2151 = vdwg.mxu0
        %v2153 = vsel %vm1921, %v1310, 0
        %v2156 = vsel %vm1921, %v1614, 0
        %2158 = vmatprep.subr.bf16.mxu0 0
        %2159 = vmatpush1.bf16.xpose.msra.mxu0 %v2156
        %2160 = vmatprep.subr.bf16.mxu0 0
        %2161 = vmatpush1.bf16.xpose.msra.mxu0 0
        %2162 = vmatprep.subr.bf16.mxu0 0
        %2163 = vmatpush1.bf16.xpose.msra.mxu0 0
        %2164 = vmatprep.subr.bf16.mxu0 0
        %2165 = vmatpush1.bf16.xpose.msra.mxu0 0
        %2166 = vmatprep.subr.bf16.mxu0 0
        %2167 = vmatpush1.bf16.xpose.msra.mxu0 0
        %2168 = vmatprep.subr.bf16.mxu0 0
        %2169 = vmatpush1.bf16.xpose.msra.mxu0 0
        %2170 = vmatprep.subr.bf16.mxu0 0
        %2171 = vmatpush1.bf16.xpose.msra.mxu0 0
        %2172 = vmatprep.subr.bf16.mxu0 0
        %2173 = vmatpush1.bf16.xpose.msra.mxu0 0
        %2174 = vmatprep.subr.bf16.mxu0 0
        %2175 = vmatpush1.bf16.xpose.msra.mxu0 0
        %2176 = vmatprep.subr.bf16.mxu0 0
        %2177 = vmatpush1.bf16.xpose.msra.mxu0 0
        %2178 = vmatprep.subr.bf16.mxu0 0
        %2179 = vmatpush1.bf16.xpose.msra.mxu0 0
        %2180 = vmatprep.subr.bf16.mxu0 0
        %2181 = vmatpush1.bf16.xpose.msra.mxu0 0
        %2182 = vmatprep.subr.bf16.mxu0 0
        %2183 = vmatpush1.bf16.xpose.msra.mxu0 0
        %2184 = vmatprep.subr.bf16.mxu0 0
        %2185 = vmatpush1.bf16.xpose.msra.mxu0 0
        %2186 = vmatprep.subr.bf16.mxu0 0
        %2187 = vmatpush1.bf16.xpose.msra.mxu0 0
        %2188 = vmatprep.subr.bf16.mxu0 0
        %2189 = vmatpush1.bf16.xpose.msra.mxu0 0
        %2190 = vmatprep.mubr.bf16.mxu0 0
        %2191 = vmatmul.mubr.bf16.gmra.mrb[0].mxu0 %v2153
        %v2192 = vpop.f32.mrb[0].mxu0
        %v2193 = vadd.f32 0.0, %v2192
        %v2194 = vpop.f32.mrb[0].mxu0
        %v2195 = vpop.f32.mrb[0].mxu0
        %v2196 = vpop.f32.mrb[0].mxu0
        %2197 = vdwg.mxu0
        %v2199 = vsel %vm1921, %v1311, 0
        %v2202 = vsel %vm1921, %v1615, 0
        %2204 = vmatprep.subr.bf16.mxu0 0
        %2205 = vmatpush1.bf16.xpose.msra.mxu0 %v2202
        %2206 = vmatprep.subr.bf16.mxu0 0
        %2207 = vmatpush1.bf16.xpose.msra.mxu0 0
        %2208 = vmatprep.subr.bf16.mxu0 0
        %2209 = vmatpush1.bf16.xpose.msra.mxu0 0
        %2210 = vmatprep.subr.bf16.mxu0 0
        %2211 = vmatpush1.bf16.xpose.msra.mxu0 0
        %2212 = vmatprep.subr.bf16.mxu0 0
        %2213 = vmatpush1.bf16.xpose.msra.mxu0 0
        %2214 = vmatprep.subr.bf16.mxu0 0
        %2215 = vmatpush1.bf16.xpose.msra.mxu0 0
        %2216 = vmatprep.subr.bf16.mxu0 0
        %2217 = vmatpush1.bf16.xpose.msra.mxu0 0
        %2218 = vmatprep.subr.bf16.mxu0 0
        %2219 = vmatpush1.bf16.xpose.msra.mxu0 0
        %2220 = vmatprep.subr.bf16.mxu0 0
        %2221 = vmatpush1.bf16.xpose.msra.mxu0 0
        %2222 = vmatprep.subr.bf16.mxu0 0
        %2223 = vmatpush1.bf16.xpose.msra.mxu0 0
        %2224 = vmatprep.subr.bf16.mxu0 0
        %2225 = vmatpush1.bf16.xpose.msra.mxu0 0
        %2226 = vmatprep.subr.bf16.mxu0 0
        %2227 = vmatpush1.bf16.xpose.msra.mxu0 0
        %2228 = vmatprep.subr.bf16.mxu0 0
        %2229 = vmatpush1.bf16.xpose.msra.mxu0 0
        %2230 = vmatprep.subr.bf16.mxu0 0
        %2231 = vmatpush1.bf16.xpose.msra.mxu0 0
        %2232 = vmatprep.subr.bf16.mxu0 0
        %2233 = vmatpush1.bf16.xpose.msra.mxu0 0
        %2234 = vmatprep.subr.bf16.mxu0 0
        %2235 = vmatpush1.bf16.xpose.msra.mxu0 0
        %2236 = vmatprep.mubr.bf16.mxu0 0
        %2237 = vmatmul.mubr.bf16.gmra.mrb[0].mxu0 %v2199
        %v2238 = vpop.f32.mrb[0].mxu0
        %v2239 = vadd.f32 0.0, %v2238
        %v2240 = vpop.f32.mrb[0].mxu0
        %v2241 = vpop.f32.mrb[0].mxu0
        %v2242 = vpop.f32.mrb[0].mxu0
        %2243 = vdwg.mxu0
        %v2245 = vsel %vm1921, %v1312, 0
        %v2248 = vsel %vm1921, %v1616, 0
        %2250 = vmatprep.subr.bf16.mxu0 0
        %2251 = vmatpush1.bf16.xpose.msra.mxu0 %v2248
        %2252 = vmatprep.subr.bf16.mxu0 0
        %2253 = vmatpush1.bf16.xpose.msra.mxu0 0
        %2254 = vmatprep.subr.bf16.mxu0 0
        %2255 = vmatpush1.bf16.xpose.msra.mxu0 0
        %2256 = vmatprep.subr.bf16.mxu0 0
        %2257 = vmatpush1.bf16.xpose.msra.mxu0 0
        %2258 = vmatprep.subr.bf16.mxu0 0
        %2259 = vmatpush1.bf16.xpose.msra.mxu0 0
        %2260 = vmatprep.subr.bf16.mxu0 0
        %2261 = vmatpush1.bf16.xpose.msra.mxu0 0
        %2262 = vmatprep.subr.bf16.mxu0 0
        %2263 = vmatpush1.bf16.xpose.msra.mxu0 0
        %2264 = vmatprep.subr.bf16.mxu0 0
        %2265 = vmatpush1.bf16.xpose.msra.mxu0 0
        %2266 = vmatprep.subr.bf16.mxu0 0
        %2267 = vmatpush1.bf16.xpose.msra.mxu0 0
        %2268 = vmatprep.subr.bf16.mxu0 0
        %2269 = vmatpush1.bf16.xpose.msra.mxu0 0
        %2270 = vmatprep.subr.bf16.mxu0 0
        %2271 = vmatpush1.bf16.xpose.msra.mxu0 0
        %2272 = vmatprep.subr.bf16.mxu0 0
        %2273 = vmatpush1.bf16.xpose.msra.mxu0 0
        %2274 = vmatprep.subr.bf16.mxu0 0
        %2275 = vmatpush1.bf16.xpose.msra.mxu0 0
        %2276 = vmatprep.subr.bf16.mxu0 0
        %2277 = vmatpush1.bf16.xpose.msra.mxu0 0
        %2278 = vmatprep.subr.bf16.mxu0 0
        %2279 = vmatpush1.bf16.xpose.msra.mxu0 0
        %2280 = vmatprep.subr.bf16.mxu0 0
        %2281 = vmatpush1.bf16.xpose.msra.mxu0 0
        %2282 = vmatprep.mubr.bf16.mxu0 0
        %2283 = vmatmul.mubr.bf16.gmra.mrb[0].mxu0 %v2245
        %v2284 = vpop.f32.mrb[0].mxu0
        %v2285 = vadd.f32 0.0, %v2284
        %v2286 = vpop.f32.mrb[0].mxu0
        %v2287 = vpop.f32.mrb[0].mxu0
        %v2288 = vpop.f32.mrb[0].mxu0
        %2289 = vdwg.mxu0
        %v2290 = vmul.f32 %v1963, 0.35355338
        %v2291 = vmul.f32 %v2009, 0.35355338
        %v2292 = vmul.f32 %v2055, 0.35355338
        %v2293 = vmul.f32 %v2101, 0.35355338
        %v2294 = vmul.f32 %v2147, 0.35355338
        %v2295 = vmul.f32 %v2193, 0.35355338
        %v2296 = vmul.f32 %v2239, 0.35355338
        %v2297 = vmul.f32 %v2285, 0.35355338
        %v2298 = vld [vmem:[#allocation6] sm:$0x1]
        %v2299 = vld [vmem:[#allocation6 + $0x1] sm:$0x1]
        %v2300 = vld [vmem:[#allocation6 + $0x2] sm:$0x1]
        %v2301 = vld [vmem:[#allocation6 + $0x3] sm:$0x1]
        %v2302 = vld [vmem:[#allocation6 + $0x4] sm:$0x1]
        %v2303 = vld [vmem:[#allocation6 + $0x5] sm:$0x1]
        %v2304 = vld [vmem:[#allocation6 + $0x6] sm:$0x1]
        %v2305 = vld [vmem:[#allocation6 + $0x7] sm:$0x1]
        %v2314 = vlaneseq
        %v2315 = vshrl.u32 %v2314, 7
        %v2316 = vsub.s32 0, %v2315
        %v2317 = vrot.slane %v2298, %v2316
        %v2318 = vlaneseq
        %v2319 = vshrl.u32 %v2318, 7
        %v2320 = vsub.s32 0, %v2319
        %v2321 = vrot.slane %v2299, %v2320
        %v2322 = vlaneseq
        %v2323 = vshrl.u32 %v2322, 7
        %v2324 = vsub.s32 0, %v2323
        %v2325 = vrot.slane %v2300, %v2324
        %v2326 = vlaneseq
        %v2327 = vshrl.u32 %v2326, 7
        %v2328 = vsub.s32 0, %v2327
        %v2329 = vrot.slane %v2301, %v2328
        %v2330 = vlaneseq
        %v2331 = vshrl.u32 %v2330, 7
        %v2332 = vsub.s32 0, %v2331
        %v2333 = vrot.slane %v2302, %v2332
        %v2334 = vlaneseq
        %v2335 = vshrl.u32 %v2334, 7
        %v2336 = vsub.s32 0, %v2335
        %v2337 = vrot.slane %v2303, %v2336
        %v2338 = vlaneseq
        %v2339 = vshrl.u32 %v2338, 7
        %v2340 = vsub.s32 0, %v2339
        %v2341 = vrot.slane %v2304, %v2340
        %v2342 = vlaneseq
        %v2343 = vshrl.u32 %v2342, 7
        %v2344 = vsub.s32 0, %v2343
        %v2345 = vrot.slane %v2305, %v2344
        %v2354 = vadd.f32 %v2290, %v2317
        %v2355 = vadd.f32 %v2291, %v2321
        %v2356 = vadd.f32 %v2292, %v2325
        %v2357 = vadd.f32 %v2293, %v2329
        %v2358 = vadd.f32 %v2294, %v2333
        %v2359 = vadd.f32 %v2295, %v2337
        %v2360 = vadd.f32 %v2296, %v2341
        %v2361 = vadd.f32 %v2297, %v2345
        %v2362 = vsel %vm1921, %v2354, -inf
        %2363 = vmax.xlane.f32.xlu0 %v2362
        %v2364 = vpop.xlane.xlu0 %2363
        %v2365 = vsel %vm1921, %v2355, -inf
        %2366 = vmax.xlane.f32.xlu0 %v2365
        %v2367 = vpop.xlane.xlu0 %2366
        %v2368 = vsel %vm1921, %v2356, -inf
        %2369 = vmax.xlane.f32.xlu0 %v2368
        %v2370 = vpop.xlane.xlu0 %2369
        %v2371 = vsel %vm1921, %v2357, -inf
        %2372 = vmax.xlane.f32.xlu0 %v2371
        %v2373 = vpop.xlane.xlu0 %2372
        %v2374 = vsel %vm1921, %v2358, -inf
        %2375 = vmax.xlane.f32.xlu0 %v2374
        %v2376 = vpop.xlane.xlu0 %2375
        %v2377 = vsel %vm1921, %v2359, -inf
        %2378 = vmax.xlane.f32.xlu0 %v2377
        %v2379 = vpop.xlane.xlu0 %2378
        %v2380 = vsel %vm1921, %v2360, -inf
        %2381 = vmax.xlane.f32.xlu0 %v2380
        %v2382 = vpop.xlane.xlu0 %2381
        %v2383 = vsel %vm1921, %v2361, -inf
        %2384 = vmax.xlane.f32.xlu0 %v2383
        %v2385 = vpop.xlane.xlu0 %2384
        %v2386 = vsub.f32 %v2354, %v2364
        %v2387 = vsub.f32 %v2355, %v2367
        %v2388 = vsub.f32 %v2356, %v2370
        %v2389 = vsub.f32 %v2357, %v2373
        %v2390 = vsub.f32 %v2358, %v2376
        %v2391 = vsub.f32 %v2359, %v2379
        %v2392 = vsub.f32 %v2360, %v2382
        %v2393 = vsub.f32 %v2361, %v2385
        %v2394 = vmul.f32 %v2386, 1.442695
        %v2395 = vpow.pop %v2394
        %v2396 = vmul.f32 %v2387, 1.442695
        %v2397 = vpow.pop %v2396
        %v2398 = vmul.f32 %v2388, 1.442695
        %v2399 = vpow.pop %v2398
        %v2400 = vmul.f32 %v2389, 1.442695
        %v2401 = vpow.pop %v2400
        %v2402 = vmul.f32 %v2390, 1.442695
        %v2403 = vpow.pop %v2402
        %v2404 = vmul.f32 %v2391, 1.442695
        %v2405 = vpow.pop %v2404
        %v2406 = vmul.f32 %v2392, 1.442695
        %v2407 = vpow.pop %v2406
        %v2408 = vmul.f32 %v2393, 1.442695
        %v2409 = vpow.pop %v2408
        %v2410 = vsel %vm1921, %v2395, 0.0
        %2411 = vadd.xlane.f32.xlu0 %v2410
        %v2412 = vpop.xlane.xlu0 %2411
        %v2413 = vsel %vm1921, %v2397, 0.0
        %2414 = vadd.xlane.f32.xlu0 %v2413
        %v2415 = vpop.xlane.xlu0 %2414
        %v2416 = vsel %vm1921, %v2399, 0.0
        %2417 = vadd.xlane.f32.xlu0 %v2416
        %v2418 = vpop.xlane.xlu0 %2417
        %v2419 = vsel %vm1921, %v2401, 0.0
        %2420 = vadd.xlane.f32.xlu0 %v2419
        %v2421 = vpop.xlane.xlu0 %2420
        %v2422 = vsel %vm1921, %v2403, 0.0
        %2423 = vadd.xlane.f32.xlu0 %v2422
        %v2424 = vpop.xlane.xlu0 %2423
        %v2425 = vsel %vm1921, %v2405, 0.0
        %2426 = vadd.xlane.f32.xlu0 %v2425
        %v2427 = vpop.xlane.xlu0 %2426
        %v2428 = vsel %vm1921, %v2407, 0.0
        %2429 = vadd.xlane.f32.xlu0 %v2428
        %v2430 = vpop.xlane.xlu0 %2429
        %v2431 = vsel %vm1921, %v2409, 0.0
        %2432 = vadd.xlane.f32.xlu0 %v2431
        %v2433 = vpop.xlane.xlu0 %2432
        %v2434 = vrcp.pop %v2412
        %v2435 = vrcp.pop %v2415
        %v2436 = vrcp.pop %v2418
        %v2437 = vrcp.pop %v2421
        %v2438 = vrcp.pop %v2424
        %v2439 = vrcp.pop %v2427
        %v2440 = vrcp.pop %v2430
        %v2441 = vrcp.pop %v2433
        %v2442 = vmul.f32 %v2395, %v2434
        %v2443 = vmul.f32 %v2397, %v2435
        %v2444 = vmul.f32 %v2399, %v2436
        %v2445 = vmul.f32 %v2401, %v2437
        %v2446 = vmul.f32 %v2403, %v2438
        %v2447 = vmul.f32 %v2405, %v2439
        %v2448 = vmul.f32 %v2407, %v2440
        %v2449 = vmul.f32 %v2409, %v2441
        %v2450 = vpack.c.bf16 %v2442, %v2442
        %v2451 = vpack.c.bf16 %v2443, %v2443
        %v2452 = vpack.c.bf16 %v2444, %v2444
        %v2453 = vpack.c.bf16 %v2445, %v2445
        %v2454 = vpack.c.bf16 %v2446, %v2446
        %v2455 = vpack.c.bf16 %v2447, %v2447
        %v2456 = vpack.c.bf16 %v2448, %v2448
        %v2457 = vpack.c.bf16 %v2449, %v2449
        %v2459 = vsel %vm1921, %v2450, 0
        %vm2461 = vcmask 1043456
        %v2463 = vsel %vm2461, %v1913, 0
        %2465 = vmatprep.subr.bf16.mxu0 0
        %2466 = vmatpush1.bf16.msra.mxu0 %v2463
        %2467 = vmatprep.subr.bf16.mxu0 0
        %2468 = vmatpush1.bf16.msra.mxu0 0
        %2469 = vmatprep.subr.bf16.mxu0 0
        %2470 = vmatpush1.bf16.msra.mxu0 0
        %2471 = vmatprep.subr.bf16.mxu0 0
        %2472 = vmatpush1.bf16.msra.mxu0 0
        %2473 = vmatprep.subr.bf16.mxu0 0
        %2474 = vmatpush1.bf16.msra.mxu0 0
        %2475 = vmatprep.subr.bf16.mxu0 0
        %2476 = vmatpush1.bf16.msra.mxu0 0
        %2477 = vmatprep.subr.bf16.mxu0 0
        %2478 = vmatpush1.bf16.msra.mxu0 0
        %2479 = vmatprep.subr.bf16.mxu0 0
        %2480 = vmatpush1.bf16.msra.mxu0 0
        %2481 = vmatprep.subr.bf16.mxu0 0
        %2482 = vmatpush1.bf16.msra.mxu0 0
        %2483 = vmatprep.subr.bf16.mxu0 0
        %2484 = vmatpush1.bf16.msra.mxu0 0
        %2485 = vmatprep.subr.bf16.mxu0 0
        %2486 = vmatpush1.bf16.msra.mxu0 0
        %2487 = vmatprep.subr.bf16.mxu0 0
        %2488 = vmatpush1.bf16.msra.mxu0 0
        %2489 = vmatprep.subr.bf16.mxu0 0
        %2490 = vmatpush1.bf16.msra.mxu0 0
        %2491 = vmatprep.subr.bf16.mxu0 0
        %2492 = vmatpush1.bf16.msra.mxu0 0
        %2493 = vmatprep.subr.bf16.mxu0 0
        %2494 = vmatpush1.bf16.msra.mxu0 0
        %2495 = vmatprep.subr.bf16.mxu0 0
        %2496 = vmatpush1.bf16.msra.mxu0 0
        %2497 = vmatprep.mubr.bf16.mxu0 0
        %2498 = vmatmul.mubr.bf16.gmra.mrb[0].mxu0 %v2459
        %v2499 = vpop.f32.mrb[0].mxu0
        %v2500 = vadd.f32 0.0, %v2499
        %v2501 = vpop.f32.mrb[0].mxu0
        %v2502 = vpop.f32.mrb[0].mxu0
        %v2503 = vpop.f32.mrb[0].mxu0
        %2504 = vdwg.mxu0
        %v2506 = vsel %vm1921, %v2451, 0
        %v2509 = vsel %vm2461, %v1914, 0
        %2511 = vmatprep.subr.bf16.mxu0 0
        %2512 = vmatpush1.bf16.msra.mxu0 %v2509
        %2513 = vmatprep.subr.bf16.mxu0 0
        %2514 = vmatpush1.bf16.msra.mxu0 0
        %2515 = vmatprep.subr.bf16.mxu0 0
        %2516 = vmatpush1.bf16.msra.mxu0 0
        %2517 = vmatprep.subr.bf16.mxu0 0
        %2518 = vmatpush1.bf16.msra.mxu0 0
        %2519 = vmatprep.subr.bf16.mxu0 0
        %2520 = vmatpush1.bf16.msra.mxu0 0
        %2521 = vmatprep.subr.bf16.mxu0 0
        %2522 = vmatpush1.bf16.msra.mxu0 0
        %2523 = vmatprep.subr.bf16.mxu0 0
        %2524 = vmatpush1.bf16.msra.mxu0 0
        %2525 = vmatprep.subr.bf16.mxu0 0
        %2526 = vmatpush1.bf16.msra.mxu0 0
        %2527 = vmatprep.subr.bf16.mxu0 0
        %2528 = vmatpush1.bf16.msra.mxu0 0
        %2529 = vmatprep.subr.bf16.mxu0 0
        %2530 = vmatpush1.bf16.msra.mxu0 0
        %2531 = vmatprep.subr.bf16.mxu0 0
        %2532 = vmatpush1.bf16.msra.mxu0 0
        %2533 = vmatprep.subr.bf16.mxu0 0
        %2534 = vmatpush1.bf16.msra.mxu0 0
        %2535 = vmatprep.subr.bf16.mxu0 0
        %2536 = vmatpush1.bf16.msra.mxu0 0
        %2537 = vmatprep.subr.bf16.mxu0 0
        %2538 = vmatpush1.bf16.msra.mxu0 0
        %2539 = vmatprep.subr.bf16.mxu0 0
        %2540 = vmatpush1.bf16.msra.mxu0 0
        %2541 = vmatprep.subr.bf16.mxu0 0
        %2542 = vmatpush1.bf16.msra.mxu0 0
        %2543 = vmatprep.mubr.bf16.mxu0 0
        %2544 = vmatmul.mubr.bf16.gmra.mrb[0].mxu0 %v2506
        %v2545 = vpop.f32.mrb[0].mxu0
        %v2546 = vadd.f32 0.0, %v2545
        %v2547 = vpop.f32.mrb[0].mxu0
        %v2548 = vpop.f32.mrb[0].mxu0
        %v2549 = vpop.f32.mrb[0].mxu0
        %2550 = vdwg.mxu0
        %v2552 = vsel %vm1921, %v2452, 0
        %v2555 = vsel %vm2461, %v1915, 0
        %2557 = vmatprep.subr.bf16.mxu0 0
        %2558 = vmatpush1.bf16.msra.mxu0 %v2555
        %2559 = vmatprep.subr.bf16.mxu0 0
        %2560 = vmatpush1.bf16.msra.mxu0 0
        %2561 = vmatprep.subr.bf16.mxu0 0
        %2562 = vmatpush1.bf16.msra.mxu0 0
        %2563 = vmatprep.subr.bf16.mxu0 0
        %2564 = vmatpush1.bf16.msra.mxu0 0
        %2565 = vmatprep.subr.bf16.mxu0 0
        %2566 = vmatpush1.bf16.msra.mxu0 0
        %2567 = vmatprep.subr.bf16.mxu0 0
        %2568 = vmatpush1.bf16.msra.mxu0 0
        %2569 = vmatprep.subr.bf16.mxu0 0
        %2570 = vmatpush1.bf16.msra.mxu0 0
        %2571 = vmatprep.subr.bf16.mxu0 0
        %2572 = vmatpush1.bf16.msra.mxu0 0
        %2573 = vmatprep.subr.bf16.mxu0 0
        %2574 = vmatpush1.bf16.msra.mxu0 0
        %2575 = vmatprep.subr.bf16.mxu0 0
        %2576 = vmatpush1.bf16.msra.mxu0 0
        %2577 = vmatprep.subr.bf16.mxu0 0
        %2578 = vmatpush1.bf16.msra.mxu0 0
        %2579 = vmatprep.subr.bf16.mxu0 0
        %2580 = vmatpush1.bf16.msra.mxu0 0
        %2581 = vmatprep.subr.bf16.mxu0 0
        %2582 = vmatpush1.bf16.msra.mxu0 0
        %2583 = vmatprep.subr.bf16.mxu0 0
        %2584 = vmatpush1.bf16.msra.mxu0 0
        %2585 = vmatprep.subr.bf16.mxu0 0
        %2586 = vmatpush1.bf16.msra.mxu0 0
        %2587 = vmatprep.subr.bf16.mxu0 0
        %2588 = vmatpush1.bf16.msra.mxu0 0
        %2589 = vmatprep.mubr.bf16.mxu0 0
        %2590 = vmatmul.mubr.bf16.gmra.mrb[0].mxu0 %v2552
        %v2591 = vpop.f32.mrb[0].mxu0
        %v2592 = vadd.f32 0.0, %v2591
        %v2593 = vpop.f32.mrb[0].mxu0
        %v2594 = vpop.f32.mrb[0].mxu0
        %v2595 = vpop.f32.mrb[0].mxu0
        %2596 = vdwg.mxu0
        %v2598 = vsel %vm1921, %v2453, 0
        %v2601 = vsel %vm2461, %v1916, 0
        %2603 = vmatprep.subr.bf16.mxu0 0
        %2604 = vmatpush1.bf16.msra.mxu0 %v2601
        %2605 = vmatprep.subr.bf16.mxu0 0
        %2606 = vmatpush1.bf16.msra.mxu0 0
        %2607 = vmatprep.subr.bf16.mxu0 0
        %2608 = vmatpush1.bf16.msra.mxu0 0
        %2609 = vmatprep.subr.bf16.mxu0 0
        %2610 = vmatpush1.bf16.msra.mxu0 0
        %2611 = vmatprep.subr.bf16.mxu0 0
        %2612 = vmatpush1.bf16.msra.mxu0 0
        %2613 = vmatprep.subr.bf16.mxu0 0
        %2614 = vmatpush1.bf16.msra.mxu0 0
        %2615 = vmatprep.subr.bf16.mxu0 0
        %2616 = vmatpush1.bf16.msra.mxu0 0
        %2617 = vmatprep.subr.bf16.mxu0 0
        %2618 = vmatpush1.bf16.msra.mxu0 0
        %2619 = vmatprep.subr.bf16.mxu0 0
        %2620 = vmatpush1.bf16.msra.mxu0 0
        %2621 = vmatprep.subr.bf16.mxu0 0
        %2622 = vmatpush1.bf16.msra.mxu0 0
        %2623 = vmatprep.subr.bf16.mxu0 0
        %2624 = vmatpush1.bf16.msra.mxu0 0
        %2625 = vmatprep.subr.bf16.mxu0 0
        %2626 = vmatpush1.bf16.msra.mxu0 0
        %2627 = vmatprep.subr.bf16.mxu0 0
        %2628 = vmatpush1.bf16.msra.mxu0 0
        %2629 = vmatprep.subr.bf16.mxu0 0
        %2630 = vmatpush1.bf16.msra.mxu0 0
        %2631 = vmatprep.subr.bf16.mxu0 0
        %2632 = vmatpush1.bf16.msra.mxu0 0
        %2633 = vmatprep.subr.bf16.mxu0 0
        %2634 = vmatpush1.bf16.msra.mxu0 0
        %2635 = vmatprep.mubr.bf16.mxu0 0
        %2636 = vmatmul.mubr.bf16.gmra.mrb[0].mxu0 %v2598
        %v2637 = vpop.f32.mrb[0].mxu0
        %v2638 = vadd.f32 0.0, %v2637
        %v2639 = vpop.f32.mrb[0].mxu0
        %v2640 = vpop.f32.mrb[0].mxu0
        %v2641 = vpop.f32.mrb[0].mxu0
        %2642 = vdwg.mxu0
        %v2644 = vsel %vm1921, %v2454, 0
        %v2647 = vsel %vm2461, %v1917, 0
        %2649 = vmatprep.subr.bf16.mxu0 0
        %2650 = vmatpush1.bf16.msra.mxu0 %v2647
        %2651 = vmatprep.subr.bf16.mxu0 0
        %2652 = vmatpush1.bf16.msra.mxu0 0
        %2653 = vmatprep.subr.bf16.mxu0 0
        %2654 = vmatpush1.bf16.msra.mxu0 0
        %2655 = vmatprep.subr.bf16.mxu0 0
        %2656 = vmatpush1.bf16.msra.mxu0 0
        %2657 = vmatprep.subr.bf16.mxu0 0
        %2658 = vmatpush1.bf16.msra.mxu0 0
        %2659 = vmatprep.subr.bf16.mxu0 0
        %2660 = vmatpush1.bf16.msra.mxu0 0
        %2661 = vmatprep.subr.bf16.mxu0 0
        %2662 = vmatpush1.bf16.msra.mxu0 0
        %2663 = vmatprep.subr.bf16.mxu0 0
        %2664 = vmatpush1.bf16.msra.mxu0 0
        %2665 = vmatprep.subr.bf16.mxu0 0
        %2666 = vmatpush1.bf16.msra.mxu0 0
        %2667 = vmatprep.subr.bf16.mxu0 0
        %2668 = vmatpush1.bf16.msra.mxu0 0
        %2669 = vmatprep.subr.bf16.mxu0 0
        %2670 = vmatpush1.bf16.msra.mxu0 0
        %2671 = vmatprep.subr.bf16.mxu0 0
        %2672 = vmatpush1.bf16.msra.mxu0 0
        %2673 = vmatprep.subr.bf16.mxu0 0
        %2674 = vmatpush1.bf16.msra.mxu0 0
        %2675 = vmatprep.subr.bf16.mxu0 0
        %2676 = vmatpush1.bf16.msra.mxu0 0
        %2677 = vmatprep.subr.bf16.mxu0 0
        %2678 = vmatpush1.bf16.msra.mxu0 0
        %2679 = vmatprep.subr.bf16.mxu0 0
        %2680 = vmatpush1.bf16.msra.mxu0 0
        %2681 = vmatprep.mubr.bf16.mxu0 0
        %2682 = vmatmul.mubr.bf16.gmra.mrb[0].mxu0 %v2644
        %v2683 = vpop.f32.mrb[0].mxu0
        %v2684 = vadd.f32 0.0, %v2683
        %v2685 = vpop.f32.mrb[0].mxu0
        %v2686 = vpop.f32.mrb[0].mxu0
        %v2687 = vpop.f32.mrb[0].mxu0
        %2688 = vdwg.mxu0
        %v2690 = vsel %vm1921, %v2455, 0
        %v2693 = vsel %vm2461, %v1918, 0
        %2695 = vmatprep.subr.bf16.mxu0 0
        %2696 = vmatpush1.bf16.msra.mxu0 %v2693
        %2697 = vmatprep.subr.bf16.mxu0 0
        %2698 = vmatpush1.bf16.msra.mxu0 0
        %2699 = vmatprep.subr.bf16.mxu0 0
        %2700 = vmatpush1.bf16.msra.mxu0 0
        %2701 = vmatprep.subr.bf16.mxu0 0
        %2702 = vmatpush1.bf16.msra.mxu0 0
        %2703 = vmatprep.subr.bf16.mxu0 0
        %2704 = vmatpush1.bf16.msra.mxu0 0
        %2705 = vmatprep.subr.bf16.mxu0 0
        %2706 = vmatpush1.bf16.msra.mxu0 0
        %2707 = vmatprep.subr.bf16.mxu0 0
        %2708 = vmatpush1.bf16.msra.mxu0 0
        %2709 = vmatprep.subr.bf16.mxu0 0
        %2710 = vmatpush1.bf16.msra.mxu0 0
        %2711 = vmatprep.subr.bf16.mxu0 0
        %2712 = vmatpush1.bf16.msra.mxu0 0
        %2713 = vmatprep.subr.bf16.mxu0 0
        %2714 = vmatpush1.bf16.msra.mxu0 0
        %2715 = vmatprep.subr.bf16.mxu0 0
        %2716 = vmatpush1.bf16.msra.mxu0 0
        %2717 = vmatprep.subr.bf16.mxu0 0
        %2718 = vmatpush1.bf16.msra.mxu0 0
        %2719 = vmatprep.subr.bf16.mxu0 0
        %2720 = vmatpush1.bf16.msra.mxu0 0
        %2721 = vmatprep.subr.bf16.mxu0 0
        %2722 = vmatpush1.bf16.msra.mxu0 0
        %2723 = vmatprep.subr.bf16.mxu0 0
        %2724 = vmatpush1.bf16.msra.mxu0 0
        %2725 = vmatprep.subr.bf16.mxu0 0
        %2726 = vmatpush1.bf16.msra.mxu0 0
        %2727 = vmatprep.mubr.bf16.mxu0 0
        %2728 = vmatmul.mubr.bf16.gmra.mrb[0].mxu0 %v2690
        %v2729 = vpop.f32.mrb[0].mxu0
        %v2730 = vadd.f32 0.0, %v2729
        %v2731 = vpop.f32.mrb[0].mxu0
        %v2732 = vpop.f32.mrb[0].mxu0
        %v2733 = vpop.f32.mrb[0].mxu0
        %2734 = vdwg.mxu0
        %v2736 = vsel %vm1921, %v2456, 0
        %v2739 = vsel %vm2461, %v1919, 0
        %2741 = vmatprep.subr.bf16.mxu0 0
        %2742 = vmatpush1.bf16.msra.mxu0 %v2739
        %2743 = vmatprep.subr.bf16.mxu0 0
        %2744 = vmatpush1.bf16.msra.mxu0 0
        %2745 = vmatprep.subr.bf16.mxu0 0
        %2746 = vmatpush1.bf16.msra.mxu0 0
        %2747 = vmatprep.subr.bf16.mxu0 0
        %2748 = vmatpush1.bf16.msra.mxu0 0
        %2749 = vmatprep.subr.bf16.mxu0 0
        %2750 = vmatpush1.bf16.msra.mxu0 0
        %2751 = vmatprep.subr.bf16.mxu0 0
        %2752 = vmatpush1.bf16.msra.mxu0 0
        %2753 = vmatprep.subr.bf16.mxu0 0
        %2754 = vmatpush1.bf16.msra.mxu0 0
        %2755 = vmatprep.subr.bf16.mxu0 0
        %2756 = vmatpush1.bf16.msra.mxu0 0
        %2757 = vmatprep.subr.bf16.mxu0 0
        %2758 = vmatpush1.bf16.msra.mxu0 0
        %2759 = vmatprep.subr.bf16.mxu0 0
        %2760 = vmatpush1.bf16.msra.mxu0 0
        %2761 = vmatprep.subr.bf16.mxu0 0
        %2762 = vmatpush1.bf16.msra.mxu0 0
        %2763 = vmatprep.subr.bf16.mxu0 0
        %2764 = vmatpush1.bf16.msra.mxu0 0
        %2765 = vmatprep.subr.bf16.mxu0 0
        %2766 = vmatpush1.bf16.msra.mxu0 0
        %2767 = vmatprep.subr.bf16.mxu0 0
        %2768 = vmatpush1.bf16.msra.mxu0 0
        %2769 = vmatprep.subr.bf16.mxu0 0
        %2770 = vmatpush1.bf16.msra.mxu0 0
        %2771 = vmatprep.subr.bf16.mxu0 0
        %2772 = vmatpush1.bf16.msra.mxu0 0
        %2773 = vmatprep.mubr.bf16.mxu0 0
        %2774 = vmatmul.mubr.bf16.gmra.mrb[0].mxu0 %v2736
        %v2775 = vpop.f32.mrb[0].mxu0
        %v2776 = vadd.f32 0.0, %v2775
        %v2777 = vpop.f32.mrb[0].mxu0
        %v2778 = vpop.f32.mrb[0].mxu0
        %v2779 = vpop.f32.mrb[0].mxu0
        %2780 = vdwg.mxu0
        %v2782 = vsel %vm1921, %v2457, 0
        %v2785 = vsel %vm2461, %v1920, 0
        %2787 = vmatprep.subr.bf16.mxu0 0
        %2788 = vmatpush1.bf16.msra.mxu0 %v2785
        %2789 = vmatprep.subr.bf16.mxu0 0
        %2790 = vmatpush1.bf16.msra.mxu0 0
        %2791 = vmatprep.subr.bf16.mxu0 0
        %2792 = vmatpush1.bf16.msra.mxu0 0
        %2793 = vmatprep.subr.bf16.mxu0 0
        %2794 = vmatpush1.bf16.msra.mxu0 0
        %2795 = vmatprep.subr.bf16.mxu0 0
        %2796 = vmatpush1.bf16.msra.mxu0 0
        %2797 = vmatprep.subr.bf16.mxu0 0
        %2798 = vmatpush1.bf16.msra.mxu0 0
        %2799 = vmatprep.subr.bf16.mxu0 0
        %2800 = vmatpush1.bf16.msra.mxu0 0
        %2801 = vmatprep.subr.bf16.mxu0 0
        %2802 = vmatpush1.bf16.msra.mxu0 0
        %2803 = vmatprep.subr.bf16.mxu0 0
        %2804 = vmatpush1.bf16.msra.mxu0 0
        %2805 = vmatprep.subr.bf16.mxu0 0
        %2806 = vmatpush1.bf16.msra.mxu0 0
        %2807 = vmatprep.subr.bf16.mxu0 0
        %2808 = vmatpush1.bf16.msra.mxu0 0
        %2809 = vmatprep.subr.bf16.mxu0 0
        %2810 = vmatpush1.bf16.msra.mxu0 0
        %2811 = vmatprep.subr.bf16.mxu0 0
        %2812 = vmatpush1.bf16.msra.mxu0 0
        %2813 = vmatprep.subr.bf16.mxu0 0
        %2814 = vmatpush1.bf16.msra.mxu0 0
        %2815 = vmatprep.subr.bf16.mxu0 0
        %2816 = vmatpush1.bf16.msra.mxu0 0
        %2817 = vmatprep.subr.bf16.mxu0 0
        %2818 = vmatpush1.bf16.msra.mxu0 0
        %2819 = vmatprep.mubr.bf16.mxu0 0
        %2820 = vmatmul.mubr.bf16.gmra.mrb[0].mxu0 %v2782
        %v2821 = vpop.f32.mrb[0].mxu0
        %v2822 = vadd.f32 0.0, %v2821
        %v2823 = vpop.f32.mrb[0].mxu0
        %v2824 = vpop.f32.mrb[0].mxu0
        %v2825 = vpop.f32.mrb[0].mxu0
        %2826 = vdwg.mxu0
        %v2827 = vcombine.low %v2500, %v2592
        %v2828 = vcombine.high %v2500, %v2592
        %v2830 = vunpack.c.l.s4 1983009808
        %v2831 = vunpack.c.0.s8 %v2830
        %v2832 = vlaneseq
        %v2833 = vshrl.u32 %v2832, 7
        %v2834 = vsub.s32 %v2831, %v2833
        %v2835 = vrot.slane %v2827, %v2834
        %v2837 = vunpack.c.l.s4 1983009808
        %v2838 = vunpack.c.0.s8 %v2837
        %v2839 = vlaneseq
        %v2840 = vshrl.u32 %v2839, 7
        %v2841 = vsub.s32 %v2838, %v2840
        %v2842 = vrot.slane %v2828, %v2841
        %v2843 = vcombine.low %v2546, %v2638
        %v2844 = vcombine.high %v2546, %v2638
        %v2846 = vunpack.c.l.s4 1983009808
        %v2847 = vunpack.c.0.s8 %v2846
        %v2848 = vlaneseq
        %v2849 = vshrl.u32 %v2848, 7
        %v2850 = vsub.s32 %v2847, %v2849
        %v2851 = vrot.slane %v2843, %v2850
        %v2853 = vunpack.c.l.s4 1983009808
        %v2854 = vunpack.c.0.s8 %v2853
        %v2855 = vlaneseq
        %v2856 = vshrl.u32 %v2855, 7
        %v2857 = vsub.s32 %v2854, %v2856
        %v2858 = vrot.slane %v2844, %v2857
        %v2859 = vcombine.low %v2835, %v2851
        %v2860 = vcombine.high %v2835, %v2851
        %v2862 = vunpack.c.l.s4 1934713408
        %v2863 = vunpack.c.0.s8 %v2862
        %v2864 = vlaneseq
        %v2865 = vshrl.u32 %v2864, 7
        %v2866 = vsub.s32 %v2863, %v2865
        %v2867 = vrot.slane %v2859, %v2866
        %v2869 = vunpack.c.l.s4 1934713408
        %v2870 = vunpack.c.0.s8 %v2869
        %v2871 = vlaneseq
        %v2872 = vshrl.u32 %v2871, 7
        %v2873 = vsub.s32 %v2870, %v2872
        %v2874 = vrot.slane %v2860, %v2873
        %v2875 = vcombine.low %v2842, %v2858
        %v2876 = vcombine.high %v2842, %v2858
        %v2878 = vunpack.c.l.s4 1934713408
        %v2879 = vunpack.c.0.s8 %v2878
        %v2880 = vlaneseq
        %v2881 = vshrl.u32 %v2880, 7
        %v2882 = vsub.s32 %v2879, %v2881
        %v2883 = vrot.slane %v2875, %v2882
        %v2885 = vunpack.c.l.s4 1934713408
        %v2886 = vunpack.c.0.s8 %v2885
        %v2887 = vlaneseq
        %v2888 = vshrl.u32 %v2887, 7
        %v2889 = vsub.s32 %v2886, %v2888
        %v2890 = vrot.slane %v2876, %v2889
        %v2891 = vcombine.high %v2867, 0.0
        %v2892 = vcombine.high %v2874, 0.0
        %v2893 = vcombine.high %v2883, 0.0
        %v2894 = vcombine.high %v2890, 0.0
        %v2895 = vcombine.low %v2684, %v2776
        %v2896 = vcombine.high %v2684, %v2776
        %v2898 = vunpack.c.l.s4 1983009808
        %v2899 = vunpack.c.0.s8 %v2898
        %v2900 = vlaneseq
        %v2901 = vshrl.u32 %v2900, 7
        %v2902 = vsub.s32 %v2899, %v2901
        %v2903 = vrot.slane %v2895, %v2902
        %v2905 = vunpack.c.l.s4 1983009808
        %v2906 = vunpack.c.0.s8 %v2905
        %v2907 = vlaneseq
        %v2908 = vshrl.u32 %v2907, 7
        %v2909 = vsub.s32 %v2906, %v2908
        %v2910 = vrot.slane %v2896, %v2909
        %v2911 = vcombine.low %v2730, %v2822
        %v2912 = vcombine.high %v2730, %v2822
        %v2914 = vunpack.c.l.s4 1983009808
        %v2915 = vunpack.c.0.s8 %v2914
        %v2916 = vlaneseq
        %v2917 = vshrl.u32 %v2916, 7
        %v2918 = vsub.s32 %v2915, %v2917
        %v2919 = vrot.slane %v2911, %v2918
        %v2921 = vunpack.c.l.s4 1983009808
        %v2922 = vunpack.c.0.s8 %v2921
        %v2923 = vlaneseq
        %v2924 = vshrl.u32 %v2923, 7
        %v2925 = vsub.s32 %v2922, %v2924
        %v2926 = vrot.slane %v2912, %v2925
        %v2927 = vcombine.low %v2903, %v2919
        %v2928 = vcombine.high %v2903, %v2919
        %v2930 = vunpack.c.l.s4 1934713408
        %v2931 = vunpack.c.0.s8 %v2930
        %v2932 = vlaneseq
        %v2933 = vshrl.u32 %v2932, 7
        %v2934 = vsub.s32 %v2931, %v2933
        %v2935 = vrot.slane %v2927, %v2934
        %v2937 = vunpack.c.l.s4 1934713408
        %v2938 = vunpack.c.0.s8 %v2937
        %v2939 = vlaneseq
        %v2940 = vshrl.u32 %v2939, 7
        %v2941 = vsub.s32 %v2938, %v2940
        %v2942 = vrot.slane %v2928, %v2941
        %v2943 = vcombine.low %v2910, %v2926
        %v2944 = vcombine.high %v2910, %v2926
        %v2946 = vunpack.c.l.s4 1934713408
        %v2947 = vunpack.c.0.s8 %v2946
        %v2948 = vlaneseq
        %v2949 = vshrl.u32 %v2948, 7
        %v2950 = vsub.s32 %v2947, %v2949
        %v2951 = vrot.slane %v2943, %v2950
        %v2953 = vunpack.c.l.s4 1934713408
        %v2954 = vunpack.c.0.s8 %v2953
        %v2955 = vlaneseq
        %v2956 = vshrl.u32 %v2955, 7
        %v2957 = vsub.s32 %v2954, %v2956
        %v2958 = vrot.slane %v2944, %v2957
        %v2959 = vcombine.high %v2935, 0.0
        %v2960 = vcombine.high %v2942, 0.0
        %v2961 = vcombine.high %v2951, 0.0
        %v2962 = vcombine.high %v2958, 0.0
        %v2963 = vcombine.low %v2867, %v2874
        %v2965 = vunpack.c.l.s4 1983009808
        %v2966 = vunpack.c.0.s8 %v2965
        %v2967 = vlaneseq
        %v2968 = vshrl.u32 %v2967, 7
        %v2969 = vsub.s32 %v2966, %v2968
        %v2970 = vrot.slane %v2963, %v2969
        %v2971 = vcombine.low %v2891, %v2892
        %v2973 = vunpack.c.l.s4 1983009808
        %v2974 = vunpack.c.0.s8 %v2973
        %v2975 = vlaneseq
        %v2976 = vshrl.u32 %v2975, 7
        %v2977 = vsub.s32 %v2974, %v2976
        %v2978 = vrot.slane %v2971, %v2977
        %v2979 = vcombine.low %v2883, %v2890
        %v2981 = vunpack.c.l.s4 1983009808
        %v2982 = vunpack.c.0.s8 %v2981
        %v2983 = vlaneseq
        %v2984 = vshrl.u32 %v2983, 7
        %v2985 = vsub.s32 %v2982, %v2984
        %v2986 = vrot.slane %v2979, %v2985
        %v2987 = vcombine.low %v2893, %v2894
        %v2989 = vunpack.c.l.s4 1983009808
        %v2990 = vunpack.c.0.s8 %v2989
        %v2991 = vlaneseq
        %v2992 = vshrl.u32 %v2991, 7
        %v2993 = vsub.s32 %v2990, %v2992
        %v2994 = vrot.slane %v2987, %v2993
        %v2995 = vcombine.low %v2970, %v2978
        %v2996 = vcombine.high %v2970, %v2978
        %v2998 = vunpack.c.l.s4 1934713408
        %v2999 = vunpack.c.0.s8 %v2998
        %v3000 = vlaneseq
        %v3001 = vshrl.u32 %v3000, 7
        %v3002 = vsub.s32 %v2999, %v3001
        %v3003 = vrot.slane %v2995, %v3002
        %v3005 = vunpack.c.l.s4 1934713408
        %v3006 = vunpack.c.0.s8 %v3005
        %v3007 = vlaneseq
        %v3008 = vshrl.u32 %v3007, 7
        %v3009 = vsub.s32 %v3006, %v3008
        %v3010 = vrot.slane %v2996, %v3009
        %v3011 = vcombine.low %v2986, %v2994
        %v3012 = vcombine.high %v2986, %v2994
        %v3014 = vunpack.c.l.s4 1934713408
        %v3015 = vunpack.c.0.s8 %v3014
        %v3016 = vlaneseq
        %v3017 = vshrl.u32 %v3016, 7
        %v3018 = vsub.s32 %v3015, %v3017
        %v3019 = vrot.slane %v3011, %v3018
        %v3021 = vunpack.c.l.s4 1934713408
        %v3022 = vunpack.c.0.s8 %v3021
        %v3023 = vlaneseq
        %v3024 = vshrl.u32 %v3023, 7
        %v3025 = vsub.s32 %v3022, %v3024
        %v3026 = vrot.slane %v3012, %v3025
        %v3027 = vcombine.low %v3003, %v3019
        %v3028 = vcombine.high %v3003, %v3019
        %v3029 = vcombine.low %v3010, %v3026
        %v3030 = vcombine.high %v3010, %v3026
        %v3031 = vcombine.low %v2935, %v2942
        %v3033 = vunpack.c.l.s4 1983009808
        %v3034 = vunpack.c.0.s8 %v3033
        %v3035 = vlaneseq
        %v3036 = vshrl.u32 %v3035, 7
        %v3037 = vsub.s32 %v3034, %v3036
        %v3038 = vrot.slane %v3031, %v3037
        %v3039 = vcombine.low %v2959, %v2960
        %v3041 = vunpack.c.l.s4 1983009808
        %v3042 = vunpack.c.0.s8 %v3041
        %v3043 = vlaneseq
        %v3044 = vshrl.u32 %v3043, 7
        %v3045 = vsub.s32 %v3042, %v3044
        %v3046 = vrot.slane %v3039, %v3045
        %v3047 = vcombine.low %v2951, %v2958
        %v3049 = vunpack.c.l.s4 1983009808
        %v3050 = vunpack.c.0.s8 %v3049
        %v3051 = vlaneseq
        %v3052 = vshrl.u32 %v3051, 7
        %v3053 = vsub.s32 %v3050, %v3052
        %v3054 = vrot.slane %v3047, %v3053
        %v3055 = vcombine.low %v2961, %v2962
        %v3057 = vunpack.c.l.s4 1983009808
        %v3058 = vunpack.c.0.s8 %v3057
        %v3059 = vlaneseq
        %v3060 = vshrl.u32 %v3059, 7
        %v3061 = vsub.s32 %v3058, %v3060
        %v3062 = vrot.slane %v3055, %v3061
        %v3063 = vcombine.low %v3038, %v3046
        %v3064 = vcombine.high %v3038, %v3046
        %v3066 = vunpack.c.l.s4 1934713408
        %v3067 = vunpack.c.0.s8 %v3066
        %v3068 = vlaneseq
        %v3069 = vshrl.u32 %v3068, 7
        %v3070 = vsub.s32 %v3067, %v3069
        %v3071 = vrot.slane %v3063, %v3070
        %v3073 = vunpack.c.l.s4 1934713408
        %v3074 = vunpack.c.0.s8 %v3073
        %v3075 = vlaneseq
        %v3076 = vshrl.u32 %v3075, 7
        %v3077 = vsub.s32 %v3074, %v3076
        %v3078 = vrot.slane %v3064, %v3077
        %v3079 = vcombine.low %v3054, %v3062
        %v3080 = vcombine.high %v3054, %v3062
        %v3082 = vunpack.c.l.s4 1934713408
        %v3083 = vunpack.c.0.s8 %v3082
        %v3084 = vlaneseq
        %v3085 = vshrl.u32 %v3084, 7
        %v3086 = vsub.s32 %v3083, %v3085
        %v3087 = vrot.slane %v3079, %v3086
        %v3089 = vunpack.c.l.s4 1934713408
        %v3090 = vunpack.c.0.s8 %v3089
        %v3091 = vlaneseq
        %v3092 = vshrl.u32 %v3091, 7
        %v3093 = vsub.s32 %v3090, %v3092
        %v3094 = vrot.slane %v3080, %v3093
        %v3095 = vcombine.low %v3071, %v3087
        %v3096 = vcombine.high %v3071, %v3087
        %v3097 = vcombine.low %v3078, %v3094
        %v3098 = vcombine.high %v3078, %v3094
        %3101 = vrot.lane.b32.xlu0 %v3028, 8
        %v3102 = vpop.permute.xlu0 %3101
        %3103 = vrot.lane.b32.xlu0 %v3096, 8
        %v3104 = vpop.permute.xlu0 %3103
        %3109 = vrot.lane.b32.xlu0 %v3029, 16
        %v3110 = vpop.permute.xlu0 %3109
        %3111 = vrot.lane.b32.xlu0 %v3097, 16
        %v3112 = vpop.permute.xlu0 %3111
        %3117 = vrot.lane.b32.xlu0 %v3030, 24
        %v3118 = vpop.permute.xlu0 %3117
        %3119 = vrot.lane.b32.xlu0 %v3098, 24
        %v3120 = vpop.permute.xlu0 %3119
        %v3123 = vsel %vm1921, %v3027, %v3102
        %v3124 = vsel %vm1921, %v3095, %v3104
        %vm3125 = vcmask 130048
        %v3126 = vsel %vm3125, %v3123, %v3110
        %v3127 = vsel %vm3125, %v3124, %v3112
        %vm3128 = vcmask 195584
        %v3129 = vsel %vm3128, %v3126, %v3118
        %v3130 = vsel %vm3128, %v3127, %v3120
        %v3131 = vpack.c.bf16 %v3130, %v3129
        %v3132 = vld [vmem:[%s870] sm:$0xf]
        %v3133 = vld [vmem:[%s870 + $0x4] sm:$0xf]
        %v3134 = vld [vmem:[%s870 + $0x8] sm:$0xf]
        %v3135 = vld [vmem:[%s870 + $0xc] sm:$0xf]
        %v3136 = vld [vmem:[%s736] sm:$0x1]
        %v3138 = vlaneseq
        %v3139 = vshrl.u32 %v3138, 7
        %v3140 = vsub.s32 0, %v3139
        %v3141 = vrot.slane %v3136, %v3140
        %v3147 = vunpack.c.l.b16 %v3132
        %v3148 = vunpack.c.l.b16 %v3133
        %v3149 = vunpack.c.l.b16 %v3134
        %v3150 = vunpack.c.l.b16 %v3135
        %v3151 = vpack.c.b16 %v3148, %v3147
        %v3152 = vpack.c.b16 %v3150, %v3149
        %v3156 = vsel %vm968, %v3131, 0
        %3158 = vmatprep.subr.bf16.mxu0 0
        %3159 = vmatpush1.bf16.msra.mxu0 %v3151
        %3160 = vmatprep.subr.bf16.mxu0 0
        %3161 = vmatpush1.bf16.msra.mxu0 %v3152
        %3162 = vmatprep.subr.bf16.mxu0 0
        %3163 = vmatpush1.bf16.msra.mxu0 0
        %3164 = vmatprep.subr.bf16.mxu0 0
        %3165 = vmatpush1.bf16.msra.mxu0 0
        %3166 = vmatprep.subr.bf16.mxu0 0
        %3167 = vmatpush1.bf16.msra.mxu0 0
        %3168 = vmatprep.subr.bf16.mxu0 0
        %3169 = vmatpush1.bf16.msra.mxu0 0
        %3170 = vmatprep.subr.bf16.mxu0 0
        %3171 = vmatpush1.bf16.msra.mxu0 0
        %3172 = vmatprep.subr.bf16.mxu0 0
        %3173 = vmatpush1.bf16.msra.mxu0 0
        %3174 = vmatprep.subr.bf16.mxu0 0
        %3175 = vmatpush1.bf16.msra.mxu0 0
        %3176 = vmatprep.subr.bf16.mxu0 0
        %3177 = vmatpush1.bf16.msra.mxu0 0
        %3178 = vmatprep.subr.bf16.mxu0 0
        %3179 = vmatpush1.bf16.msra.mxu0 0
        %3180 = vmatprep.subr.bf16.mxu0 0
        %3181 = vmatpush1.bf16.msra.mxu0 0
        %3182 = vmatprep.subr.bf16.mxu0 0
        %3183 = vmatpush1.bf16.msra.mxu0 0
        %3184 = vmatprep.subr.bf16.mxu0 0
        %3185 = vmatpush1.bf16.msra.mxu0 0
        %3186 = vmatprep.subr.bf16.mxu0 0
        %3187 = vmatpush1.bf16.msra.mxu0 0
        %3188 = vmatprep.subr.bf16.mxu0 0
        %3189 = vmatpush1.bf16.msra.mxu0 0
        %3190 = vmatprep.mubr.bf16.mxu0 0
        %3191 = vmatmul.mubr.bf16.gmra.mrb[0].mxu0 %v3156
        %v3192 = vpop.f32.mrb[0].mxu0
        %v3193 = vadd.f32 %v3141, %v3192
        %v3194 = vpop.f32.mrb[0].mxu0
        %v3195 = vpop.f32.mrb[0].mxu0
        %v3196 = vadd.f32 %v3141, %v3195
        %v3197 = vpop.f32.mrb[0].mxu0
        %3198 = vdwg.mxu0
        %v3199 = vadd.f32 %v942, %v3193
        %v3200 = vadd.f32 %v943, %v3196
        %v3201 = vld [vmem:[%s744] sm:$0x1]
        %v3202 = vld [vmem:[%s752] sm:$0x1]
        %v3203 = vsel %vm968, %v3199, 0.0
        %3204 = vadd.xlane.f32.xlu0 %v3203
        %v3205 = vpop.xlane.xlu0 %3204
        %v3206 = vsel %vm968, %v3200, 0.0
        %3207 = vadd.xlane.f32.xlu0 %v3206
        %v3208 = vpop.xlane.xlu0 %3207
        %v3209 = vrcp.pop 32.0
        %v3210 = vmul.f32 %v3205, %v3209
        %v3211 = vmul.f32 %v3208, %v3209
        %v3212 = vsub.f32 %v3199, %v3210
        %v3213 = vsub.f32 %v3200, %v3211
        %v3214 = vmul.f32 %v3212, %v3212
        %v3215 = vmul.f32 %v3213, %v3213
        %v3216 = vsel %vm968, %v3214, 0.0
        %3217 = vadd.xlane.f32.xlu0 %v3216
        %v3218 = vpop.xlane.xlu0 %3217
        %v3219 = vsel %vm968, %v3215, 0.0
        %3220 = vadd.xlane.f32.xlu0 %v3219
        %v3221 = vpop.xlane.xlu0 %3220
        %v3222 = vmul.f32 %v3218, %v3209
        %v3223 = vmul.f32 %v3221, %v3209
        %v3224 = vadd.f32 %v3222, 1e-12
        %v3225 = vadd.f32 %v3223, 1e-12
        %v3226 = vrsqrt.pop %v3224
        %v3227 = vrsqrt.pop %v3225
        %v3228 = vmul.f32 %v3212, %v3226
        %v3229 = vmul.f32 %v3213, %v3227
        %v3231 = vlaneseq
        %v3232 = vshrl.u32 %v3231, 7
        %v3233 = vsub.s32 0, %v3232
        %v3234 = vrot.slane %v3201, %v3233
        %v3236 = vmul.f32 %v3228, %v3234
        %v3237 = vmul.f32 %v3229, %v3234
        %v3239 = vlaneseq
        %v3240 = vshrl.u32 %v3239, 7
        %v3241 = vsub.s32 0, %v3240
        %v3242 = vrot.slane %v3202, %v3241
        %v3244 = vadd.f32 %v3236, %v3242
        %v3245 = vadd.f32 %v3237, %v3242
        %v3246 = vpack.c.bf16 %v3245, %v3244
        %v3247 = vld [vmem:[%s875] sm:$0xf]
        %v3248 = vld [vmem:[%s875 + $0x4] sm:$0xf]
        %v3249 = vld [vmem:[%s875 + $0x8] sm:$0xf]
        %v3250 = vld [vmem:[%s875 + $0xc] sm:$0xf]
        %v3251 = vld [vmem:[%s760] sm:$0x1]
        %v3253 = vlaneseq
        %v3254 = vshrl.u32 %v3253, 7
        %v3255 = vsub.s32 0, %v3254
        %v3256 = vrot.slane %v3251, %v3255
        %v3262 = vunpack.c.l.b16 %v3247
        %v3263 = vunpack.c.l.b16 %v3248
        %v3264 = vunpack.c.l.b16 %v3249
        %v3265 = vunpack.c.l.b16 %v3250
        %v3266 = vpack.c.b16 %v3263, %v3262
        %v3267 = vpack.c.b16 %v3265, %v3264
        %v3271 = vsel %vm968, %v3246, 0
        %3273 = vmatprep.subr.bf16.mxu0 0
        %3274 = vmatpush1.bf16.msra.mxu0 %v3266
        %3275 = vmatprep.subr.bf16.mxu0 0
        %3276 = vmatpush1.bf16.msra.mxu0 %v3267
        %3277 = vmatprep.subr.bf16.mxu0 0
        %3278 = vmatpush1.bf16.msra.mxu0 0
        %3279 = vmatprep.subr.bf16.mxu0 0
        %3280 = vmatpush1.bf16.msra.mxu0 0
        %3281 = vmatprep.subr.bf16.mxu0 0
        %3282 = vmatpush1.bf16.msra.mxu0 0
        %3283 = vmatprep.subr.bf16.mxu0 0
        %3284 = vmatpush1.bf16.msra.mxu0 0
        %3285 = vmatprep.subr.bf16.mxu0 0
        %3286 = vmatpush1.bf16.msra.mxu0 0
        %3287 = vmatprep.subr.bf16.mxu0 0
        %3288 = vmatpush1.bf16.msra.mxu0 0
        %3289 = vmatprep.subr.bf16.mxu0 0
        %3290 = vmatpush1.bf16.msra.mxu0 0
        %3291 = vmatprep.subr.bf16.mxu0 0
        %3292 = vmatpush1.bf16.msra.mxu0 0
        %3293 = vmatprep.subr.bf16.mxu0 0
        %3294 = vmatpush1.bf16.msra.mxu0 0
        %3295 = vmatprep.subr.bf16.mxu0 0
        %3296 = vmatpush1.bf16.msra.mxu0 0
        %3297 = vmatprep.subr.bf16.mxu0 0
        %3298 = vmatpush1.bf16.msra.mxu0 0
        %3299 = vmatprep.subr.bf16.mxu0 0
        %3300 = vmatpush1.bf16.msra.mxu0 0
        %3301 = vmatprep.subr.bf16.mxu0 0
        %3302 = vmatpush1.bf16.msra.mxu0 0
        %3303 = vmatprep.subr.bf16.mxu0 0
        %3304 = vmatpush1.bf16.msra.mxu0 0
        %3305 = vmatprep.mubr.bf16.mxu0 0
        %3306 = vmatmul.mubr.bf16.gmra.mrb[0].mxu0 %v3271
        %v3307 = vpop.f32.mrb[0].mxu0
        %v3308 = vadd.f32 %v3256, %v3307
        %v3309 = vpop.f32.mrb[0].mxu0
        %v3310 = vpop.f32.mrb[0].mxu0
        %v3311 = vadd.f32 %v3256, %v3310
        %v3312 = vpop.f32.mrb[0].mxu0
        %3313 = vdwg.mxu0
        %v3314 = vmul.f32 %v3308, 0.5
        %v3315 = vmul.f32 %v3311, 0.5
        %v3316 = vmul.f32 %v3308, 0.044715
        %v3317 = vmul.f32 %v3311, 0.044715
        %v3318 = vmul.f32 %v3316, %v3308
        %v3319 = vmul.f32 %v3317, %v3311
        %v3320 = vmul.f32 %v3318, %v3308
        %v3321 = vmul.f32 %v3319, %v3311
        %v3322 = vadd.f32 %v3308, %v3320
        %v3323 = vadd.f32 %v3311, %v3321
        %v3324 = vmul.f32 %v3322, 0.7978845
        %v3325 = vmul.f32 %v3323, 0.7978845
        %v3326 = vtanh.pop %v3324
        %v3327 = vtanh.pop %v3325
        %v3328 = vadd.f32 %v3326, 1.0
        %v3329 = vadd.f32 %v3327, 1.0
        %v3330 = vmul.f32 %v3314, %v3328
        %v3331 = vmul.f32 %v3315, %v3329
        %v3332 = vpack.c.bf16 %v3331, %v3330
        %v3333 = vld [vmem:[%s880] sm:$0xf]
        %v3334 = vld [vmem:[%s880 + $0x4] sm:$0xf]
        %v3335 = vld [vmem:[%s880 + $0x8] sm:$0xf]
        %v3336 = vld [vmem:[%s880 + $0xc] sm:$0xf]
        %v3337 = vld [vmem:[%s880 + $0x10] sm:$0xf]
        %v3338 = vld [vmem:[%s880 + $0x14] sm:$0xf]
        %v3339 = vld [vmem:[%s880 + $0x18] sm:$0xf]
        %v3340 = vld [vmem:[%s880 + $0x1c] sm:$0xf]
        %v3341 = vld [vmem:[%s768] sm:$0x1]
        %v3343 = vlaneseq
        %v3344 = vshrl.u32 %v3343, 7
        %v3345 = vsub.s32 0, %v3344
        %v3346 = vrot.slane %v3341, %v3345
        %v3356 = vunpack.c.l.b16 %v3333
        %v3357 = vunpack.c.l.b16 %v3334
        %v3358 = vunpack.c.l.b16 %v3335
        %v3359 = vunpack.c.l.b16 %v3336
        %v3360 = vunpack.c.l.b16 %v3337
        %v3361 = vunpack.c.l.b16 %v3338
        %v3362 = vunpack.c.l.b16 %v3339
        %v3363 = vunpack.c.l.b16 %v3340
        %v3364 = vpack.c.b16 %v3357, %v3356
        %v3365 = vpack.c.b16 %v3359, %v3358
        %v3366 = vpack.c.b16 %v3361, %v3360
        %v3367 = vpack.c.b16 %v3363, %v3362
        %vm3372 = vcmask 523264
        %v3374 = vsel %vm3372, %v3332, 0
        %3376 = vmatprep.subr.bf16.mxu0 0
        %3377 = vmatpush1.bf16.msra.mxu0 %v3364
        %3378 = vmatprep.subr.bf16.mxu0 0
        %3379 = vmatpush1.bf16.msra.mxu0 %v3365
        %3380 = vmatprep.subr.bf16.mxu0 0
        %3381 = vmatpush1.bf16.msra.mxu0 %v3366
        %3382 = vmatprep.subr.bf16.mxu0 0
        %3383 = vmatpush1.bf16.msra.mxu0 %v3367
        %3384 = vmatprep.subr.bf16.mxu0 0
        %3385 = vmatpush1.bf16.msra.mxu0 0
        %3386 = vmatprep.subr.bf16.mxu0 0
        %3387 = vmatpush1.bf16.msra.mxu0 0
        %3388 = vmatprep.subr.bf16.mxu0 0
        %3389 = vmatpush1.bf16.msra.mxu0 0
        %3390 = vmatprep.subr.bf16.mxu0 0
        %3391 = vmatpush1.bf16.msra.mxu0 0
        %3392 = vmatprep.subr.bf16.mxu0 0
        %3393 = vmatpush1.bf16.msra.mxu0 0
        %3394 = vmatprep.subr.bf16.mxu0 0
        %3395 = vmatpush1.bf16.msra.mxu0 0
        %3396 = vmatprep.subr.bf16.mxu0 0
        %3397 = vmatpush1.bf16.msra.mxu0 0
        %3398 = vmatprep.subr.bf16.mxu0 0
        %3399 = vmatpush1.bf16.msra.mxu0 0
        %3400 = vmatprep.subr.bf16.mxu0 0
        %3401 = vmatpush1.bf16.msra.mxu0 0
        %3402 = vmatprep.subr.bf16.mxu0 0
        %3403 = vmatpush1.bf16.msra.mxu0 0
        %3404 = vmatprep.subr.bf16.mxu0 0
        %3405 = vmatpush1.bf16.msra.mxu0 0
        %3406 = vmatprep.subr.bf16.mxu0 0
        %3407 = vmatpush1.bf16.msra.mxu0 0
        %3408 = vmatprep.mubr.bf16.mxu0 0
        %3409 = vmatmul.mubr.bf16.gmra.mrb[0].mxu0 %v3374
        %v3410 = vpop.f32.mrb[0].mxu0
        %v3411 = vadd.f32 %v3346, %v3410
        %v3412 = vpop.f32.mrb[0].mxu0
        %v3413 = vpop.f32.mrb[0].mxu0
        %v3414 = vadd.f32 %v3346, %v3413
        %v3415 = vpop.f32.mrb[0].mxu0
        %3416 = vdwg.mxu0
        %v3417 = vadd.f32 %v3244, %v3411
        %v3418 = vadd.f32 %v3245, %v3414
        %v3419 = vld [vmem:[%s883] sm:$0x1]
        %v3420 = vld [vmem:[%s886] sm:$0x1]
        %v3421 = vsel %vm968, %v3417, 0.0
        %3422 = vadd.xlane.f32.xlu0 %v3421
        %v3423 = vpop.xlane.xlu0 %3422
        %v3424 = vsel %vm968, %v3418, 0.0
        %3425 = vadd.xlane.f32.xlu0 %v3424
        %v3426 = vpop.xlane.xlu0 %3425
        %v3427 = vmul.f32 %v3423, %v3209
        %v3428 = vmul.f32 %v3426, %v3209
        %v3429 = vsub.f32 %v3417, %v3427
        %v3430 = vsub.f32 %v3418, %v3428
        %v3431 = vmul.f32 %v3429, %v3429
        %v3432 = vmul.f32 %v3430, %v3430
        %v3433 = vsel %vm968, %v3431, 0.0
        %3434 = vadd.xlane.f32.xlu0 %v3433
        %v3435 = vpop.xlane.xlu0 %3434
        %v3436 = vsel %vm968, %v3432, 0.0
        %3437 = vadd.xlane.f32.xlu0 %v3436
        %v3438 = vpop.xlane.xlu0 %3437
        %v3439 = vmul.f32 %v3435, %v3209
        %v3440 = vmul.f32 %v3438, %v3209
        %v3441 = vadd.f32 %v3439, 1e-12
        %v3442 = vadd.f32 %v3440, 1e-12
        %v3443 = vrsqrt.pop %v3441
        %v3444 = vrsqrt.pop %v3442
        %v3445 = vmul.f32 %v3429, %v3443
        %v3446 = vmul.f32 %v3430, %v3444
        %v3448 = vlaneseq
        %v3449 = vshrl.u32 %v3448, 7
        %v3450 = vsub.s32 0, %v3449
        %v3451 = vrot.slane %v3419, %v3450
        %v3453 = vmul.f32 %v3445, %v3451
        %v3454 = vmul.f32 %v3446, %v3451
        %v3456 = vlaneseq
        %v3457 = vshrl.u32 %v3456, 7
        %v3458 = vsub.s32 0, %v3457
        %v3459 = vrot.slane %v3420, %v3458
        %v3461 = vadd.f32 %v3453, %v3459
        %v3462 = vadd.f32 %v3454, %v3459
        %3463 = vst.msk [vmem:[#allocation2] sm:$0xff] %vm968, %v3461
        %3464 = vst.msk [vmem:[#allocation2 + $0x8] sm:$0xff] %vm968, %v3462
        %p3465 = scmp.eq.s32.totalorder %s41, 1
        // Predicated region
        $region133: #{tpu_custom_call.1} parent=91 // pred_check
          %p3466 = pneg %p3465
        $region134: #{tpu_custom_call.1} parent=91 // pred_check_branch
          %3468 = sbr.rel (%p3466) target = $region136
        $region135: #{tpu_custom_call.1} parent=91 // pred_region
          %v3469 = vpack.c.bf16 %v3462, %v3461
          %v3470 = vld [vmem:[%s16] sm:$0xf]
          %v3471 = vld [vmem:[%s16 + $0x4] sm:$0xf]
          %v3472 = vld [vmem:[%s16 + $0x8] sm:$0xf]
          %v3473 = vld [vmem:[%s16 + $0xc] sm:$0xf]
          %v3474 = vld [vmem:[%s17] sm:$0x1]
          %v3476 = vlaneseq
          %v3477 = vshrl.u32 %v3476, 7
          %v3478 = vsub.s32 0, %v3477
          %v3479 = vrot.slane %v3474, %v3478
          %v3485 = vunpack.c.l.b16 %v3470
          %v3486 = vunpack.c.l.b16 %v3471
          %v3487 = vunpack.c.l.b16 %v3472
          %v3488 = vunpack.c.l.b16 %v3473
          %v3489 = vpack.c.b16 %v3486, %v3485
          %v3490 = vpack.c.b16 %v3488, %v3487
          %v3494 = vsel %vm968, %v3469, 0
          %3496 = vmatprep.subr.bf16.mxu0 0
          %3497 = vmatpush1.bf16.msra.mxu0 %v3489
          %3498 = vmatprep.subr.bf16.mxu0 0
          %3499 = vmatpush1.bf16.msra.mxu0 %v3490
          %3500 = vmatprep.subr.bf16.mxu0 0
          %3501 = vmatpush1.bf16.msra.mxu0 0
          %3502 = vmatprep.subr.bf16.mxu0 0
          %3503 = vmatpush1.bf16.msra.mxu0 0
          %3504 = vmatprep.subr.bf16.mxu0 0
          %3505 = vmatpush1.bf16.msra.mxu0 0
          %3506 = vmatprep.subr.bf16.mxu0 0
          %3507 = vmatpush1.bf16.msra.mxu0 0
          %3508 = vmatprep.subr.bf16.mxu0 0
          %3509 = vmatpush1.bf16.msra.mxu0 0
          %3510 = vmatprep.subr.bf16.mxu0 0
          %3511 = vmatpush1.bf16.msra.mxu0 0
          %3512 = vmatprep.subr.bf16.mxu0 0
          %3513 = vmatpush1.bf16.msra.mxu0 0
          %3514 = vmatprep.subr.bf16.mxu0 0
          %3515 = vmatpush1.bf16.msra.mxu0 0
          %3516 = vmatprep.subr.bf16.mxu0 0
          %3517 = vmatpush1.bf16.msra.mxu0 0
          %3518 = vmatprep.subr.bf16.mxu0 0
          %3519 = vmatpush1.bf16.msra.mxu0 0
          %3520 = vmatprep.subr.bf16.mxu0 0
          %3521 = vmatpush1.bf16.msra.mxu0 0
          %3522 = vmatprep.subr.bf16.mxu0 0
          %3523 = vmatpush1.bf16.msra.mxu0 0
          %3524 = vmatprep.subr.bf16.mxu0 0
          %3525 = vmatpush1.bf16.msra.mxu0 0
          %3526 = vmatprep.subr.bf16.mxu0 0
          %3527 = vmatpush1.bf16.msra.mxu0 0
          %3528 = vmatprep.mubr.bf16.mxu0 0
          %3529 = vmatmul.mubr.bf16.gmra.mrb[0].mxu0 %v3494
          %v3530 = vpop.f32.mrb[0].mxu0
          %v3531 = vadd.f32 %v3479, %v3530
          %v3532 = vpop.f32.mrb[0].mxu0
          %v3533 = vpop.f32.mrb[0].mxu0
          %v3534 = vadd.f32 %v3479, %v3533
          %v3535 = vpop.f32.mrb[0].mxu0
          %3536 = vdwg.mxu0
          %3537 = vst [vmem:[#allocation18] sm:$0xff] %v3531
          %3538 = vst [vmem:[#allocation18 + $0x8] sm:$0xff] %v3534
        $region136: #{tpu_custom_call.1} parent=91 // pred_fallthru
          _
        // Predicated region
        $region137: #{tpu_custom_call.1} parent=91 // pred_check
          %p3539 = pneg %p492
        $region138: #{tpu_custom_call.1} parent=91 // pred_check_branch
          %3541 = sbr.rel (%p3539) target = $region140
        $region139: #{tpu_custom_call.1} parent=91 // pred_region
          %s3543 = ssub.s32 256, 256
          %3544 = vsyncadd [#allocation5], %s3543
          %s3545 = sshll.u32 [#allocation18], 4
          %s3546 = int_to_ptr.vmem [resolvable:$true] %s3545
          %3551 = dma.vmem_to_hbm [thread:$0]  %s3546, 256, %s18, [#allocation5], 128, 128, 8
        $region140: #{tpu_custom_call.1} parent=91 // pred_fallthru
          _
        // Predicated region
        $region141: #{tpu_custom_call.1} parent=91 // pred_check
          %p3552 = pneg %p492
        $region142: #{tpu_custom_call.1} parent=91 // pred_check_branch
          %3554 = sbr.rel (%p3552) target = $region144
        $region143: #{tpu_custom_call.1} parent=91 // pred_region
          %3555 = dma.done [#allocation5], 256
        $region144: #{tpu_custom_call.1} parent=91 // pred_fallthru
          _
      $region92: #{tpu_custom_call.1} parent=5 // pred_fallthru
        _
      %p3556 = scmp.le.s32.totalorder 2, %s36
      // Predicated region
      $region145: #{tpu_custom_call.1} parent=5 // pred_check
        %p3557 = pneg %p3556
      $region146: #{tpu_custom_call.1} parent=5 // pred_check_branch
        %3559 = sbr.rel (%p3557) target = $region148
      $region147: #{tpu_custom_call.1} parent=5 // pred_region
        %s3560 = ssub.s32 %s36, 2
      $region148: #{tpu_custom_call.1} parent=5 // pred_fallthru
        _
    $region6: #{tpu_custom_call.1} parent=1 // loop_footer
      %s40 = sadd.s32 1, %s36
    $region7: #{tpu_custom_call.1} parent=1 // loop_footer_branch
      %35 = sbr.rel target = $region3
    $region8: #{tpu_custom_call.1} parent=1 // loop_exit
      _
    %3561 = vsyncpa [#allocation4], 1
    %s3562 = scalar_lea.sflag [#allocation4], 1
    %3563 = vsyncpa %s3562, 1
    %3564 = vsyncpa [#allocation7], 1
    %3565 = vsyncpa [#allocation10], 1
    %s3566 = scalar_lea.sflag [#allocation10], 1
    %3567 = vsyncpa %s3566, 1
    %3568 = vsyncpa [#allocation13], 1
    %s3569 = scalar_lea.sflag [#allocation13], 1
    %3570 = vsyncpa %s3569, 1
    %3571 = vsyncpa [#allocation16], 1
    %s3572 = scalar_lea.sflag [#allocation16], 1
    %3573 = vsyncpa %s3572, 1
    %3574 = vsyncpa [#allocation5], 1
    %s3575 = scalar_lea.sflag [#allocation5], 1
    %3576 = vsyncpa %s3575, 1

</llo_original>
